<compile_context>
chip_gen: v6e
topology: v6e:2x2x1
jax: 0.10.0
libtpu: 0.0.40
codegen_flags: <defaults>
</compile_context>

<pallas_src>
import functools
import math

import jax
import jax.numpy as jnp
import numpy as np
from jax.experimental import pallas as pl
from jax.experimental.pallas import tpu as pltpu


def kpconv_kernel(y_ref, f_ref, cmat_ref, emat_ref, kpn2_ref, r_ref, rf_ref,
                  w3_ref, h_ref, stats_ref, *, inv_extent):
    """KPConv over one tile of TILE_N destination nodes (lane-dense 2-D only).

    y_ref     : (T, D*P)        relative positions src - dst, lane = d*P + p
    f_ref     : (T, D*Cin)      gathered src features,        lane = d*Cin + c
    cmat_ref  : (D*P, D*K)      block-diag  -2*kp[k,p]  (cross term)
    emat_ref  : (D*P, D*K)      block-diag  1           (|y|^2 term)
    kpn2_ref  : (1, D*K)        |kp_k|^2 replicated over d
    r_ref     : (D*K, K*Cin*D)  0/1 expansion  m[d,k]  -> (k,c,d)
    rf_ref    : (D*Cin, K*Cin*D)0/1 expansion  f[d,c]  -> (k,c,d)
    w3_ref    : (K*Cin*D, Cout_p) weights W[k,c,:] replicated over d (bf16)
    h_ref     : (T, Cout_p)     conv output tile (f32)
    stats_ref : (8, Cout_p)     row 0: sum(h), row 1: sum(h*h) of this tile
    """
    y = y_ref[...]                                    # (T, D*P)   f32
    f = f_ref[...]                                    # (T, D*Cin) f32

    # dist^2[t, d*K+k] = |y_td|^2 - 2 y_td . kp_k + |kp_k|^2
    dist2 = (jnp.dot(y, cmat_ref[...], preferred_element_type=jnp.float32)
             + jnp.dot(y * y, emat_ref[...], preferred_element_type=jnp.float32)
             + kpn2_ref[...])                         # (T, D*K)
    dist2 = jnp.maximum(dist2, 0.0)                   # guard f32 cancellation
    m = jnp.maximum(1.0 - jnp.sqrt(dist2) * inv_extent, 0.0)   # (T, D*K)

    # h[t,o] = sum_{k,c,d} m[t,d,k] * f[t,d,c] * W[k,c,o]
    # Expansions go through constant 0/1 matmuls (MXU slack), the multiply is
    # one dense VPU op on (T, 512), the reduce over (k,c,d) is one bf16 matmul.
    m_big = jnp.dot(m, r_ref[...], preferred_element_type=jnp.float32)
    f_big = jnp.dot(f, rf_ref[...], preferred_element_type=jnp.float32)
    prod = (m_big * f_big).astype(jnp.bfloat16)       # (T, K*Cin*D)
    h = jnp.dot(prod, w3_ref[...], preferred_element_type=jnp.float32)
    h_ref[...] = h                                    # (T, Cout_p), lane-dense

    # Per-tile BatchNorm partial sums — single full (8, Cout_p) store.
    stats_ref[...] = jnp.concatenate(
        [jnp.sum(h, axis=0, keepdims=True),
         jnp.sum(h * h, axis=0, keepdims=True),
         jnp.zeros((6, h.shape[1]), jnp.float32)], axis=0)


def bn_lrelu_kernel(h_ref, scale_ref, shift_ref, out_ref, *, neg_slope):
    """Folded BatchNorm (scale/shift precomputed) + LeakyReLU over one tile."""
    y = h_ref[...] * scale_ref[...] + shift_ref[...]
    out_ref[...] = jnp.where(y >= 0, y, neg_slope * y)


def _pick_tile_n(n):
    # Biggest tile that still leaves >= 2 grid steps (v7x megacore sharding)
    # and stays well inside v7x's 64 MiB VMEM.
    for t in (256, 128, 64, 32, 16, 8):
        if n >= 2 * t:
            return t
    return 8


def simple_block_forward(pos, feats, nbr_idx, kernel_points, weights, gamma,
                         beta, kp_extent, bn_eps=1e-5, neg_slope=0.1,
                         tile_n=None):
    n, p_dim = pos.shape
    deg = nbr_idx.shape[1]
    num_kp, cin, cout = weights.shape

    if tile_n is None:
        tile_n = _pick_tile_n(n)
    n_pad = ((n + tile_n - 1) // tile_n) * tile_n
    num_tiles = n_pad // tile_n

    lane = 128
    cout_pad = ((cout + lane - 1) // lane) * lane
    dk = deg * num_kp               # m lane width
    kcd = num_kp * cin * deg        # expanded product lane width

    # --- glue: neighbor gather + lane-dense flattening (layout plumbing) -----
    # TODO(synk): move this gather in-kernel (prefetch nbr_idx, VMEM-resident
    #             pos/feats) to avoid the D-times expanded HBM copies.
    y_flat = (pos[nbr_idx] - pos[:, None, :]).reshape(n, deg * p_dim)
    f_flat = feats[nbr_idx].reshape(n, deg * cin)
    if n_pad > n:   # zero rows -> h == 0 -> BN sums unaffected
        y_flat = jnp.pad(y_flat, ((0, n_pad - n), (0, 0)))
        f_flat = jnp.pad(f_flat, ((0, n_pad - n), (0, 0)))

    # --- constant matrices (tiny, built once) ---------------------------------
    kp_f32 = kernel_points.astype(jnp.float32)
    eye_d = jnp.eye(deg, dtype=jnp.float32)
    cmat = jnp.kron(eye_d, -2.0 * kp_f32.T)                         # (D*P, D*K)
    emat = jnp.kron(eye_d, jnp.ones((p_dim, num_kp), jnp.float32))  # (D*P, D*K)
    kpn2 = jnp.tile(jnp.sum(kp_f32 * kp_f32, axis=1), deg)[None, :]  # (1, D*K)

    r_np = np.zeros((dk, kcd), np.float32)       # m[d*K+k]   -> (k*Cin+c)*D+d
    rf_np = np.zeros((deg * cin, kcd), np.float32)  # f[d*Cin+c] -> (k*Cin+c)*D+d
    for d in range(deg):
        for k in range(num_kp):
            for c in range(cin):
                j = (k * cin + c) * deg + d
                r_np[d * num_kp + k, j] = 1.0
                rf_np[d * cin + c, j] = 1.0
    r_mat = jnp.asarray(r_np)
    rf_mat = jnp.asarray(rf_np)

    w3 = jnp.broadcast_to(weights[:, :, None, :],
                          (num_kp, cin, deg, cout)).reshape(kcd, cout)
    w3 = jnp.pad(w3, ((0, 0), (0, cout_pad - cout))).astype(jnp.bfloat16)

    cparams = pltpu.CompilerParams(dimension_semantics=("parallel",),
                                   vmem_limit_bytes=32 * 1024 * 1024)

    # --- pass A: tiled KPConv + BN partial sums -------------------------------
    h, partial_stats = pl.pallas_call(
        functools.partial(kpconv_kernel, inv_extent=1.0 / float(kp_extent)),
        grid=(num_tiles,),
        out_shape=(
            jax.ShapeDtypeStruct((n_pad, cout_pad), jnp.float32),
            jax.ShapeDtypeStruct((num_tiles * 8, cout_pad), jnp.float32),
        ),
        in_specs=[
            pl.BlockSpec((tile_n, deg * p_dim), lambda i: (i, 0)),
            pl.BlockSpec((tile_n, deg * cin), lambda i: (i, 0)),
            pl.BlockSpec((deg * p_dim, dk), lambda i: (0, 0)),
            pl.BlockSpec((deg * p_dim, dk), lambda i: (0, 0)),
            pl.BlockSpec((1, dk), lambda i: (0, 0)),
            pl.BlockSpec((dk, kcd), lambda i: (0, 0)),
            pl.BlockSpec((deg * cin, kcd), lambda i: (0, 0)),
            pl.BlockSpec((kcd, cout_pad), lambda i: (0, 0)),
        ],
        out_specs=(
            pl.BlockSpec((tile_n, cout_pad), lambda i: (i, 0)),
            pl.BlockSpec((8, cout_pad), lambda i: (i, 0)),
        ),
        compiler_params=cparams,
    )(y_flat, f_flat, cmat, emat, kpn2, r_mat, rf_mat, w3)

    # --- fold global BN batch stats into per-channel scale/shift (tiny) -------
    stats = partial_stats.reshape(num_tiles, 8, cout_pad)
    sum_h = jnp.sum(stats[:, 0, :], axis=0)
    sum_h2 = jnp.sum(stats[:, 1, :], axis=0)
    inv_n = 1.0 / float(n)
    mean = sum_h * inv_n
    var = jnp.maximum(sum_h2 * inv_n - mean * mean, 0.0)   # biased batch var
    inv_std = jax.lax.rsqrt(var + float(bn_eps))
    gamma_p = jnp.pad(gamma, (0, cout_pad - cout))          # pad channels -> 0
    beta_p = jnp.pad(beta, (0, cout_pad - cout))
    scale = (gamma_p * inv_std)[None, :]                    # (1, Cout_p)
    shift = (beta_p - mean * gamma_p * inv_std)[None, :]    # (1, Cout_p)

    # --- pass B: folded BN + LeakyReLU, writing over h in place ---------------
    out_pad = pl.pallas_call(
        functools.partial(bn_lrelu_kernel, neg_slope=float(neg_slope)),
        grid=(num_tiles,),
        out_shape=jax.ShapeDtypeStruct((n_pad, cout_pad), jnp.float32),
        in_specs=[
            pl.BlockSpec((tile_n, cout_pad), lambda i: (i, 0)),
            pl.BlockSpec((1, cout_pad), lambda i: (0, 0)),
            pl.BlockSpec((1, cout_pad), lambda i: (0, 0)),
        ],
        out_specs=pl.BlockSpec((tile_n, cout_pad), lambda i: (i, 0)),
        input_output_aliases={0: 0},
        compiler_params=cparams,
    )(h, scale, shift)

    return out_pad[:n, :cout]


def reference(pos, feats, nbr_idx, kernel_points, weights, gamma, beta,
              kp_extent, bn_eps=1e-5, neg_slope=0.1):
    """Pure-JAX reference mirroring the PyTorch forward."""
    y = pos[nbr_idx] - pos[:, None, :]                              # (N, D, P)
    diff = y[:, :, None, :] - kernel_points[None, None, :, :]       # (N, D, K, P)
    dist = jnp.sqrt(jnp.sum(diff * diff, axis=-1))                  # (N, D, K)
    m = jnp.maximum(1.0 - dist / kp_extent, 0.0)
    f = feats[nbr_idx]                                              # (N, D, Cin)
    weighted = jnp.einsum('ndk,ndc->nkc', m, f,
                          preferred_element_type=jnp.float32)       # (N, K, Cin)
    h = jnp.einsum('nkc,kco->no', weighted, weights,
                   preferred_element_type=jnp.float32)              # (N, Cout)
    mean = h.mean(axis=0)
    var = ((h - mean) ** 2).mean(axis=0)
    xhat = (h - mean) / jnp.sqrt(var + bn_eps)
    hbn = xhat * gamma + beta
    return jnp.where(hbn >= 0, hbn, neg_slope * hbn)


if __name__ == "__main__":
    # Config-like constants (SimpleBlock / KPConv init).
    N, DEG, P_DIM = 512, 8, 3
    IN_DIM, OUT_DIM = 8, 16
    NUM_KP = 8                      # config.num_kernel_points
    radius = 1.0
    conv_radius = 1.5               # config.conv_radius
    kp_extent_cfg = 1.2             # config.KP_extent
    current_extent = radius * kp_extent_cfg / conv_radius

    key = jax.random.PRNGKey(0)
    k_pos, k_feat, k_idx, k_kp, k_w = jax.random.split(key, 5)

    pos = jax.random.uniform(k_pos, (N, P_DIM), jnp.float32, -1.0, 1.0)
    feats = jax.random.normal(k_feat, (N, IN_DIM), jnp.float32)
    nbr_idx = jax.random.randint(k_idx, (N, DEG), 0, N)

    # Kernel points: fixed center at the origin, rest deterministic in a cube
    # of side 2*radius (stand-in for load_kernels(radius, k, p_dim, 'center')).
    kp_rest = jax.random.uniform(k_kp, (NUM_KP - 1, P_DIM), jnp.float32,
                                 -radius, radius)
    kernel_points = jnp.concatenate(
        [jnp.zeros((1, P_DIM), jnp.float32), kp_rest], axis=0)      # (K, P)

    # kaiming_uniform_(a=sqrt(5)) on (K, in, out): fan_in = in*out,
    # bound = sqrt(1/fan_in).
    bound = 1.0 / math.sqrt(IN_DIM * OUT_DIM)
    weights = jax.random.uniform(k_w, (NUM_KP, IN_DIM, OUT_DIM), jnp.float32,
                                 -bound, bound)

    gamma = jnp.ones((OUT_DIM,), jnp.float32)   # BatchNorm1d default init
    beta = jnp.zeros((OUT_DIM,), jnp.float32)

    fwd = jax.jit(functools.partial(simple_block_forward,
                                    kp_extent=current_extent))
    out = fwd(pos, feats, nbr_idx, kernel_points, weights, gamma, beta)
    out = jax.block_until_ready(out)

    ref = reference(pos, feats, nbr_idx, kernel_points, weights,
                    gamma, beta, current_extent)

    assert out.shape == (N, OUT_DIM)
    assert bool(jnp.all(jnp.isfinite(out)))
    assert bool(jnp.allclose(out, ref, rtol=5e-2, atol=5e-2))
    print("KERNEL_OK")
</pallas_src>

<mosaic_0001>
module attributes {stable_mosaic.version = 11 : i64} {
  func.func @kpconv_kernel(%arg0: i32, %arg1: memref<256x24xf32, #tpu.memory_space<vmem>>, %arg2: memref<256x64xf32, #tpu.memory_space<vmem>>, %arg3: memref<24x64xf32, #tpu.memory_space<vmem>>, %arg4: memref<24x64xf32, #tpu.memory_space<vmem>>, %arg5: memref<1x64xf32, #tpu.memory_space<vmem>>, %arg6: memref<64x512xf32, #tpu.memory_space<vmem>>, %arg7: memref<64x512xf32, #tpu.memory_space<vmem>>, %arg8: memref<512x128xbf16, #tpu.memory_space<vmem>>, %arg9: memref<256x128xf32, #tpu.memory_space<vmem>>, %arg10: memref<8x128xf32, #tpu.memory_space<vmem>>) attributes {dimension_semantics = [#tpu.dimension_semantics<parallel>], iteration_bounds = array<i64: 2>, scalar_prefetch = 0 : i64, scratch_operands = 0 : i64, tpu.core_type = #tpu.core_type<tc>, window_params = [{transform_indices = @transform_0, window_bounds = array<i64: 256, 24>}, {transform_indices = @transform_1, window_bounds = array<i64: 256, 64>}, {pipeline_mode = #tpu.pipeline_mode<synchronous>, transform_indices = @transform_2, window_bounds = array<i64: 24, 64>}, {pipeline_mode = #tpu.pipeline_mode<synchronous>, transform_indices = @transform_3, window_bounds = array<i64: 24, 64>}, {pipeline_mode = #tpu.pipeline_mode<synchronous>, transform_indices = @transform_4, window_bounds = array<i64: 1, 64>}, {pipeline_mode = #tpu.pipeline_mode<synchronous>, transform_indices = @transform_5, window_bounds = array<i64: 64, 512>}, {pipeline_mode = #tpu.pipeline_mode<synchronous>, transform_indices = @transform_6, window_bounds = array<i64: 64, 512>}, {pipeline_mode = #tpu.pipeline_mode<synchronous>, transform_indices = @transform_7, window_bounds = array<i64: 512, 128>}, {transform_indices = @transform_8, window_bounds = array<i64: 256, 128>}, {transform_indices = @transform_9, window_bounds = array<i64: 8, 128>}]} {
    %c0 = arith.constant 0 : index
    %c0_0 = arith.constant 0 : index
    %0 = vector.load %arg1[%c0, %c0_0] : memref<256x24xf32, #tpu.memory_space<vmem>>, vector<256x24xf32>
    %c0_1 = arith.constant 0 : index
    %c0_2 = arith.constant 0 : index
    %1 = vector.load %arg2[%c0_1, %c0_2] : memref<256x64xf32, #tpu.memory_space<vmem>>, vector<256x64xf32>
    %c0_3 = arith.constant 0 : index
    %c0_4 = arith.constant 0 : index
    %2 = vector.load %arg3[%c0_3, %c0_4] : memref<24x64xf32, #tpu.memory_space<vmem>>, vector<24x64xf32>
    %cst = arith.constant dense<0.000000e+00> : vector<256x64xf32>
    %3 = tpu.matmul %0, %2, %cst {dimension_numbers = #tpu.dot_dimension_numbers<[1], [0], [0], [1], [0, 0, 1, 1], [], []>} : vector<256x24xf32>, vector<24x64xf32>, vector<256x64xf32> -> vector<256x64xf32>
    %4 = arith.mulf %0, %0 : vector<256x24xf32>
    %c0_5 = arith.constant 0 : index
    %c0_6 = arith.constant 0 : index
    %5 = vector.load %arg4[%c0_5, %c0_6] : memref<24x64xf32, #tpu.memory_space<vmem>>, vector<24x64xf32>
    %cst_7 = arith.constant dense<0.000000e+00> : vector<256x64xf32>
    %6 = tpu.matmul %4, %5, %cst_7 {dimension_numbers = #tpu.dot_dimension_numbers<[1], [0], [0], [1], [0, 0, 1, 1], [], []>} : vector<256x24xf32>, vector<24x64xf32>, vector<256x64xf32> -> vector<256x64xf32>
    %7 = arith.addf %3, %6 : vector<256x64xf32>
    %c0_8 = arith.constant 0 : index
    %c0_9 = arith.constant 0 : index
    %8 = vector.load %arg5[%c0_8, %c0_9] : memref<1x64xf32, #tpu.memory_space<vmem>>, vector<1x64xf32>
    %9 = vector.broadcast %8 : vector<1x64xf32> to vector<256x64xf32>
    %10 = arith.addf %7, %9 : vector<256x64xf32>
    %cst_10 = arith.constant 0.000000e+00 : f32
    %11 = vector.broadcast %cst_10 : f32 to vector<256x64xf32>
    %12 = arith.maximumf %10, %11 : vector<256x64xf32>
    %13 = math.sqrt %12 : vector<256x64xf32>
    %cst_11 = arith.constant 1.250000e+00 : f32
    %14 = vector.broadcast %cst_11 : f32 to vector<256x64xf32>
    %15 = arith.mulf %13, %14 : vector<256x64xf32>
    %cst_12 = arith.constant 1.000000e+00 : f32
    %16 = vector.broadcast %cst_12 : f32 to vector<256x64xf32>
    %17 = arith.subf %16, %15 : vector<256x64xf32>
    %cst_13 = arith.constant 0.000000e+00 : f32
    %18 = vector.broadcast %cst_13 : f32 to vector<256x64xf32>
    %19 = arith.maximumf %17, %18 : vector<256x64xf32>
    %c0_14 = arith.constant 0 : index
    %c0_15 = arith.constant 0 : index
    %20 = vector.load %arg6[%c0_14, %c0_15] : memref<64x512xf32, #tpu.memory_space<vmem>>, vector<64x512xf32>
    %cst_16 = arith.constant dense<0.000000e+00> : vector<256x512xf32>
    %21 = tpu.matmul %19, %20, %cst_16 {dimension_numbers = #tpu.dot_dimension_numbers<[1], [0], [0], [1], [0, 0, 1, 1], [], []>} : vector<256x64xf32>, vector<64x512xf32>, vector<256x512xf32> -> vector<256x512xf32>
    %c0_17 = arith.constant 0 : index
    %c0_18 = arith.constant 0 : index
    %22 = vector.load %arg7[%c0_17, %c0_18] : memref<64x512xf32, #tpu.memory_space<vmem>>, vector<64x512xf32>
    %cst_19 = arith.constant dense<0.000000e+00> : vector<256x512xf32>
    %23 = tpu.matmul %1, %22, %cst_19 {dimension_numbers = #tpu.dot_dimension_numbers<[1], [0], [0], [1], [0, 0, 1, 1], [], []>} : vector<256x64xf32>, vector<64x512xf32>, vector<256x512xf32> -> vector<256x512xf32>
    %24 = arith.mulf %21, %23 : vector<256x512xf32>
    %25 = arith.truncf %24 : vector<256x512xf32> to vector<256x512xbf16>
    %c0_20 = arith.constant 0 : index
    %c0_21 = arith.constant 0 : index
    %26 = vector.load %arg8[%c0_20, %c0_21] : memref<512x128xbf16, #tpu.memory_space<vmem>>, vector<512x128xbf16>
    %cst_22 = arith.constant dense<0.000000e+00> : vector<256x128xf32>
    %27 = tpu.matmul %25, %26, %cst_22 {dimension_numbers = #tpu.dot_dimension_numbers<[1], [0], [0], [1], [0, 0, 1, 1], [], []>} : vector<256x512xbf16>, vector<512x128xbf16>, vector<256x128xf32> -> vector<256x128xf32>
    %c0_23 = arith.constant 0 : index
    %c0_24 = arith.constant 0 : index
    %28 = vector.load %arg9[%c0_23, %c0_24] : memref<256x128xf32, #tpu.memory_space<vmem>>, vector<256x128xf32>
    tpu.vector_store %arg9[%c0_23, %c0_24], %27 {strides = array<i32>} : memref<256x128xf32, #tpu.memory_space<vmem>>, vector<256x128xf32>,
    %cst_25 = arith.constant dense<0.000000e+00> : vector<128xf32>
    %29 = vector.multi_reduction <add>, %27, %cst_25 [0] : vector<256x128xf32> to vector<128xf32>
    %30 = vector.shape_cast %29 : vector<128xf32> to vector<1x128xf32>
    %31 = arith.mulf %27, %27 : vector<256x128xf32>
    %cst_26 = arith.constant dense<0.000000e+00> : vector<128xf32>
    %32 = vector.multi_reduction <add>, %31, %cst_26 [0] : vector<256x128xf32> to vector<128xf32>
    %33 = vector.shape_cast %32 : vector<128xf32> to vector<1x128xf32>
    %cst_27 = arith.constant 0.000000e+00 : f32
    %34 = vector.broadcast %cst_27 : f32 to vector<6x128xf32>
    %35 = tpu.concatenate %30, %33, %34 in 0 : vector<1x128xf32>, vector<1x128xf32>, vector<6x128xf32> -> vector<8x128xf32>
    %c0_28 = arith.constant 0 : index
    %c0_29 = arith.constant 0 : index
    %36 = vector.load %arg10[%c0_28, %c0_29] : memref<8x128xf32, #tpu.memory_space<vmem>>, vector<8x128xf32>
    tpu.vector_store %arg10[%c0_28, %c0_29], %35 {strides = array<i32>} : memref<8x128xf32, #tpu.memory_space<vmem>>, vector<8x128xf32>,
    return
  }
  func.func @transform_0(%arg0: i32) -> (i32, i32) {
    %c0_i32 = arith.constant 0 : i32
    %c0_i32_0 = arith.constant 0 : i32
    return %arg0, %c0_i32 : i32, i32
  }
  func.func @transform_1(%arg0: i32) -> (i32, i32) {
    %c0_i32 = arith.constant 0 : i32
    %c0_i32_0 = arith.constant 0 : i32
    return %arg0, %c0_i32 : i32, i32
  }
  func.func @transform_2(%arg0: i32) -> (i32, i32) {
    %c0_i32 = arith.constant 0 : i32
    %c0_i32_0 = arith.constant 0 : i32
    %c0_i32_1 = arith.constant 0 : i32
    return %c0_i32, %c0_i32_0 : i32, i32
  }
  func.func @transform_3(%arg0: i32) -> (i32, i32) {
    %c0_i32 = arith.constant 0 : i32
    %c0_i32_0 = arith.constant 0 : i32
    %c0_i32_1 = arith.constant 0 : i32
    return %c0_i32, %c0_i32_0 : i32, i32
  }
  func.func @transform_4(%arg0: i32) -> (i32, i32) {
    %c0_i32 = arith.constant 0 : i32
    %c0_i32_0 = arith.constant 0 : i32
    %c0_i32_1 = arith.constant 0 : i32
    return %c0_i32, %c0_i32_0 : i32, i32
  }
  func.func @transform_5(%arg0: i32) -> (i32, i32) {
    %c0_i32 = arith.constant 0 : i32
    %c0_i32_0 = arith.constant 0 : i32
    %c0_i32_1 = arith.constant 0 : i32
    return %c0_i32, %c0_i32_0 : i32, i32
  }
  func.func @transform_6(%arg0: i32) -> (i32, i32) {
    %c0_i32 = arith.constant 0 : i32
    %c0_i32_0 = arith.constant 0 : i32
    %c0_i32_1 = arith.constant 0 : i32
    return %c0_i32, %c0_i32_0 : i32, i32
  }
  func.func @transform_7(%arg0: i32) -> (i32, i32) {
    %c0_i32 = arith.constant 0 : i32
    %c0_i32_0 = arith.constant 0 : i32
    %c0_i32_1 = arith.constant 0 : i32
    return %c0_i32, %c0_i32_0 : i32, i32
  }
  func.func @transform_8(%arg0: i32) -> (i32, i32) {
    %c0_i32 = arith.constant 0 : i32
    %c0_i32_0 = arith.constant 0 : i32
    return %arg0, %c0_i32 : i32, i32
  }
  func.func @transform_9(%arg0: i32) -> (i32, i32) {
    %c0_i32 = arith.constant 0 : i32
    %c0_i32_0 = arith.constant 0 : i32
    return %arg0, %c0_i32 : i32, i32
  }
}

module attributes {stable_mosaic.version = 11 : i64} {
  func.func @bn_lrelu_kernel(%arg0: i32, %arg1: memref<256x128xf32, #tpu.memory_space<vmem>>, %arg2: memref<1x128xf32, #tpu.memory_space<vmem>>, %arg3: memref<1x128xf32, #tpu.memory_space<vmem>>, %arg4: memref<256x128xf32, #tpu.memory_space<vmem>>) attributes {dimension_semantics = [#tpu.dimension_semantics<parallel>], iteration_bounds = array<i64: 2>, scalar_prefetch = 0 : i64, scratch_operands = 0 : i64, tpu.core_type = #tpu.core_type<tc>, window_params = [{transform_indices = @transform_0, window_bounds = array<i64: 256, 128>}, {pipeline_mode = #tpu.pipeline_mode<synchronous>, transform_indices = @transform_1, window_bounds = array<i64: 1, 128>}, {pipeline_mode = #tpu.pipeline_mode<synchronous>, transform_indices = @transform_2, window_bounds = array<i64: 1, 128>}, {transform_indices = @transform_3, window_bounds = array<i64: 256, 128>}]} {
    %c0 = arith.constant 0 : index
    %c0_0 = arith.constant 0 : index
    %0 = vector.load %arg1[%c0, %c0_0] : memref<256x128xf32, #tpu.memory_space<vmem>>, vector<256x128xf32>
    %c0_1 = arith.constant 0 : index
    %c0_2 = arith.constant 0 : index
    %1 = vector.load %arg2[%c0_1, %c0_2] : memref<1x128xf32, #tpu.memory_space<vmem>>, vector<1x128xf32>
    %2 = vector.broadcast %1 : vector<1x128xf32> to vector<256x128xf32>
    %3 = arith.mulf %0, %2 : vector<256x128xf32>
    %c0_3 = arith.constant 0 : index
    %c0_4 = arith.constant 0 : index
    %4 = vector.load %arg3[%c0_3, %c0_4] : memref<1x128xf32, #tpu.memory_space<vmem>>, vector<1x128xf32>
    %5 = vector.broadcast %4 : vector<1x128xf32> to vector<256x128xf32>
    %6 = arith.addf %3, %5 : vector<256x128xf32>
    %cst = arith.constant 0.000000e+00 : f32
    %7 = vector.broadcast %cst : f32 to vector<256x128xf32>
    %8 = arith.cmpf oge, %6, %7 : vector<256x128xf32>
    %cst_5 = arith.constant 1.000000e-01 : f32
    %9 = vector.broadcast %cst_5 : f32 to vector<256x128xf32>
    %10 = arith.mulf %9, %6 : vector<256x128xf32>
    %11 = arith.select %8, %6, %10 : vector<256x128xi1>, vector<256x128xf32>
    %c0_6 = arith.constant 0 : index
    %c0_7 = arith.constant 0 : index
    %12 = vector.load %arg4[%c0_6, %c0_7] : memref<256x128xf32, #tpu.memory_space<vmem>>, vector<256x128xf32>
    tpu.vector_store %arg4[%c0_6, %c0_7], %11 {strides = array<i32>} : memref<256x128xf32, #tpu.memory_space<vmem>>, vector<256x128xf32>,
    return
  }
  func.func @transform_0(%arg0: i32) -> (i32, i32) {
    %c0_i32 = arith.constant 0 : i32
    %c0_i32_0 = arith.constant 0 : i32
    return %arg0, %c0_i32 : i32, i32
  }
  func.func @transform_1(%arg0: i32) -> (i32, i32) {
    %c0_i32 = arith.constant 0 : i32
    %c0_i32_0 = arith.constant 0 : i32
    %c0_i32_1 = arith.constant 0 : i32
    return %c0_i32, %c0_i32_0 : i32, i32
  }
  func.func @transform_2(%arg0: i32) -> (i32, i32) {
    %c0_i32 = arith.constant 0 : i32
    %c0_i32_0 = arith.constant 0 : i32
    %c0_i32_1 = arith.constant 0 : i32
    return %c0_i32, %c0_i32_0 : i32, i32
  }
  func.func @transform_3(%arg0: i32) -> (i32, i32) {
    %c0_i32 = arith.constant 0 : i32
    %c0_i32_0 = arith.constant 0 : i32
    return %arg0, %c0_i32 : i32, i32
  }
}

</mosaic_0001>

<llo_original>
// kernel: mul.21
$region0: #{mul.21}
  #allocation0 [shape = 's32[1]{0}', space=sflag, size = 0x4, scoped, tag = 'scoped memory for mul.21']
  %s0 = inlined_call_operand.vmem [shape: f32[24,64], index: 0, kind: input, shape index: {}]
  %s1 = inlined_call_operand.vmem [shape: f32[24,64], index: 1, kind: input, shape index: {}]
  %s2 = inlined_call_operand.vmem [shape: f32[24,64], index: 2, kind: output, shape index: {}]
  %v3 = vld [vmem:[%s0] sm:$0xff]
  %v4 = vld [vmem:[%s1] sm:$0xff]
  %5 = xla_tuple %v3, %v4
  %6 = xla_tuple %5
  %v7 = vmul.f32 %v3, %v4
  %8 = xla_tuple %v7
  %9 = vst [vmem:[%s2] sm:$0xff] %v7
  %s10 = scalar_lea.vmem %s0, 8
  %v11 = vld [vmem:[%s10] sm:$0xff]
  %s12 = scalar_lea.vmem %s1, 8
  %v13 = vld [vmem:[%s12] sm:$0xff]
  %14 = xla_tuple %v11, %v13
  %15 = xla_tuple %14
  %v16 = vmul.f32 %v11, %v13
  %17 = xla_tuple %v16
  %s18 = scalar_lea.vmem %s2, 8
  %19 = vst [vmem:[%s18] sm:$0xff] %v16
  %s20 = scalar_lea.vmem %s0, 16
  %v21 = vld [vmem:[%s20] sm:$0xff]
  %s22 = scalar_lea.vmem %s1, 16
  %v23 = vld [vmem:[%s22] sm:$0xff]
  %24 = xla_tuple %v21, %v23
  %25 = xla_tuple %24
  %v26 = vmul.f32 %v21, %v23
  %27 = xla_tuple %v26
  %s28 = scalar_lea.vmem %s2, 16
  %29 = vst [vmem:[%s28] sm:$0xff] %v26

// kernel: tile.8
$region0: #{tile.8}
  #allocation0 [shape = 's32[1]{0}', space=sflag, size = 0x4, scoped, tag = 'scoped memory for tile.8']
  %s0 = inlined_call_operand.vmem [shape: f32[8], index: 0, kind: input, shape index: {}]
  %s1 = inlined_call_operand.vmem [shape: f32[8,8], index: 1, kind: output, shape index: {}]
  // Predicated region
  $region2: #{tile.8} parent=0 // pred_check
    _
  $region3: #{tile.8} parent=0 // pred_check_branch
    %3 = sbr.rel (0) target = $region5
  $region4: #{tile.8} parent=0 // pred_region
    _
  $region5: #{tile.8} parent=0 // pred_fallthru
    _
  %v4 = vld [vmem:[%s0] ss:$0 sm:$0xff]
  %5 = vst [vmem:[%s1] sm:$0xff] %v4

// kernel: tile.9
$region0: #{tile.9}
  %s0 = inlined_call_operand.vmem [shape: f32[8,8], index: 0, kind: input, shape index: {}]
  %s1 = inlined_call_operand.vmem [shape: f32[1,64], index: 1, kind: output, shape index: {}]
  $region1: #{tile.9} parent=0
    #allocation0 [shape = 'u8[4096]{0}', space=vmem, size = 0x1000, scoped, tag = 'scoped mem for output reshape']
    %v2 = vld [vmem:[%s0] sm:$0x1]
    %vm3 = vcmask 64512
    %4 = vst.msk [vmem:[#allocation0] sm:$0x1] %vm3, %v2
    %s5 = scalar_lea.vmem %s0, 7
    %v6 = vld [vmem:[%s5] sm:$0x1]
    %7 = vrot.lane.b32.xlu0 %v6, 56
    %v8 = vpop.permute.xlu0 %7
    %vm9 = vcmask 523712
    %10 = vst.msk [vmem:[#allocation0] sm:$0x1] %vm9, %v8
    %s11 = scalar_lea.vmem %s0, 6
    %v12 = vld [vmem:[%s11] sm:$0x1]
    %13 = vrot.lane.b32.xlu0 %v12, 48
    %v14 = vpop.permute.xlu0 %13
    %vm15 = vcmask 458112
    %16 = vst.msk [vmem:[#allocation0] sm:$0x1] %vm15, %v14
    %s17 = scalar_lea.vmem %s0, 5
    %v18 = vld [vmem:[%s17] sm:$0x1]
    %19 = vrot.lane.b32.xlu0 %v18, 40
    %v20 = vpop.permute.xlu0 %19
    %vm21 = vcmask 392512
    %22 = vst.msk [vmem:[#allocation0] sm:$0x1] %vm21, %v20
    %s23 = scalar_lea.vmem %s0, 4
    %v24 = vld [vmem:[%s23] sm:$0x1]
    %25 = vrot.lane.b32.xlu0 %v24, 32
    %v26 = vpop.permute.xlu0 %25
    %vm27 = vcmask 326912
    %28 = vst.msk [vmem:[#allocation0] sm:$0x1] %vm27, %v26
    %s29 = scalar_lea.vmem %s0, 3
    %v30 = vld [vmem:[%s29] sm:$0x1]
    %31 = vrot.lane.b32.xlu0 %v30, 24
    %v32 = vpop.permute.xlu0 %31
    %vm33 = vcmask 261312
    %34 = vst.msk [vmem:[#allocation0] sm:$0x1] %vm33, %v32
    %s35 = scalar_lea.vmem %s0, 2
    %v36 = vld [vmem:[%s35] sm:$0x1]
    %37 = vrot.lane.b32.xlu0 %v36, 16
    %v38 = vpop.permute.xlu0 %37
    %vm39 = vcmask 195712
    %40 = vst.msk [vmem:[#allocation0] sm:$0x1] %vm39, %v38
    %s41 = scalar_lea.vmem %s0, 1
    %v42 = vld [vmem:[%s41] sm:$0x1]
    %43 = vrot.lane.b32.xlu0 %v42, 8
    %v44 = vpop.permute.xlu0 %43
    %vm45 = vcmask 130112
    %46 = vst.msk [vmem:[#allocation0] sm:$0x1] %vm45, %v44
    %s48 = sshll.u32 1, 1
    %s49 = ssub.s32 %s48, 1
    %v51 = vld [vmem:[#allocation0] sm:%s49]
    %s52 = sshll.u32 1, 1
    %s53 = ssub.s32 %s52, 1
    %54 = vst [vmem:[%s1] sm:%s53] %v51

// kernel: simple_block_forward.3
$region0: #{simple_block_forward.3}
  #allocation0 [shape = 'u32[]', space=smem, size = 0x4, offset = 0x4, fixed_abs, tag = 'smem constant byte address 0x4 - core index']
  #allocation1 [shape = 'u32[144,128]{1,0:T(1,128)}', space=vmem, size = 0x12000, scoped, tag = 'internal scratch']
  %s0 = inlined_call_operand.vmem [shape: f32[512,128], index: 0, kind: input, shape index: {}, may-alias: {0,3}]
  %s1 = inlined_call_operand.vmem [shape: f32[1,128], index: 1, kind: input, shape index: {}]
  %s2 = inlined_call_operand.vmem [shape: f32[1,128], index: 2, kind: input, shape index: {}]
  %s3 = inlined_call_operand.vmem [shape: f32[512,128], index: 3, kind: output, shape index: {}, may-alias: {0,3}]
  %s4 = sld [smem:[#allocation0]]
  $region45: #{simple_block_forward.3} parent=0
    _
  %s6 = ssub.s32 1, %s4
  %s7 = scalar_select 0, %s6, %s4
  loop: start=0, step=1, limit=4
  $region2: #{simple_block_forward.3} parent=0 // loop_pre_header
    _
  $region3: #{simple_block_forward.3} parent=0 // loop_header
    %s9 = sphi 0, %s13
    %p10 = scmp.ge.s32.totalorder %s9, 4
    %s19 = sphi 0, %s21
    %s22 = sphi 0, %s19
    %s23 = sphi 0, %s22
    %s39 = sphi 0, %s23
    %s43 = sphi 0, %s43
    %s45 = sphi 0, %s43
    %s46 = sphi 0, %s45
    %s60 = sphi 0, %s46
    %s64 = sphi 0, %s64
    %s66 = sphi 0, %s64
    %s67 = sphi 0, %s66
    %s81 = sphi 0, %s67
    %s87 = sphi 0, %s89
    %s90 = sphi 0, %s87
    %s91 = sphi 0, %s90
    %s107 = sphi 0, %s91
  $region4: #{simple_block_forward.3} parent=0 // loop_header_branch
    %12 = sbr.rel (%p10) target = $region8
  $region5: #{simple_block_forward.3} parent=0 // loop_body
    %s14 = ssub.s32 %s9, 1
    %s15 = ssub.s32 %s9, 2
    %s16 = sadd.s32 %s9, 1
    %s17 = ssub.s32 %s9, %s16
    %p18 = scmp.eq.s32.totalorder %s17, 0
    %s20 = sadd.s32 %s19, 1
    %s21 = scalar_select %p18, %s19, %s20
    %p24 = pneg %p18
    %p25 = scmp.eq.s32.totalorder %s9, 1
    %p26 = por %p24, %p25
    %p27 = scmp.ne.s32.totalorder %s19, %s22
    %p28 = scmp.eq.s32.totalorder %s9, 0
    %p29 = por %p27, %p28
    %p30 = scmp.ne.s32.totalorder %s19, %s22
    %p31 = scmp.eq.s32.totalorder %s14, 1
    %p32 = por %p30, %p31
    %p33 = scmp.ne.s32.totalorder %s22, %s23
    %p34 = scmp.eq.s32.totalorder %s14, 0
    %p35 = por %p33, %p34
    %p36 = scmp.ne.s32.totalorder %s22, %s23
    %p37 = scmp.eq.s32.totalorder %s15, 1
    %p38 = por %p36, %p37
    %p40 = scmp.ne.s32.totalorder %s23, %s39
    %p41 = scmp.eq.s32.totalorder %s15, 0
    %p42 = por %p40, %p41
    %s44 = sadd.s32 %s43, 1
    %p47 = scmp.eq.s32.totalorder %s9, 1
    %p48 = scmp.ne.s32.totalorder %s43, %s45
    %p49 = scmp.eq.s32.totalorder %s9, 0
    %p50 = por %p48, %p49
    %p51 = scmp.ne.s32.totalorder %s43, %s45
    %p52 = scmp.eq.s32.totalorder %s14, 1
    %p53 = por %p51, %p52
    %p54 = scmp.ne.s32.totalorder %s45, %s46
    %p55 = scmp.eq.s32.totalorder %s14, 0
    %p56 = por %p54, %p55
    %p57 = scmp.ne.s32.totalorder %s45, %s46
    %p58 = scmp.eq.s32.totalorder %s15, 1
    %p59 = por %p57, %p58
    %p61 = scmp.ne.s32.totalorder %s46, %s60
    %p62 = scmp.eq.s32.totalorder %s15, 0
    %p63 = por %p61, %p62
    %s65 = sadd.s32 %s64, 1
    %p68 = scmp.eq.s32.totalorder %s9, 1
    %p69 = scmp.ne.s32.totalorder %s64, %s66
    %p70 = scmp.eq.s32.totalorder %s9, 0
    %p71 = por %p69, %p70
    %p72 = scmp.ne.s32.totalorder %s64, %s66
    %p73 = scmp.eq.s32.totalorder %s14, 1
    %p74 = por %p72, %p73
    %p75 = scmp.ne.s32.totalorder %s66, %s67
    %p76 = scmp.eq.s32.totalorder %s14, 0
    %p77 = por %p75, %p76
    %p78 = scmp.ne.s32.totalorder %s66, %s67
    %p79 = scmp.eq.s32.totalorder %s15, 1
    %p80 = por %p78, %p79
    %p82 = scmp.ne.s32.totalorder %s67, %s81
    %p83 = scmp.eq.s32.totalorder %s15, 0
    %p84 = por %p82, %p83
    %s85 = ssub.s32 %s9, %s16
    %p86 = scmp.eq.s32.totalorder %s85, 0
    %s88 = sadd.s32 %s87, 1
    %s89 = scalar_select %p86, %s87, %s88
    %p92 = pneg %p86
    %p93 = scmp.eq.s32.totalorder %s9, 1
    %p94 = por %p92, %p93
    %p95 = scmp.ne.s32.totalorder %s87, %s90
    %p96 = scmp.eq.s32.totalorder %s9, 0
    %p97 = por %p95, %p96
    %p98 = scmp.ne.s32.totalorder %s87, %s90
    %p99 = scmp.eq.s32.totalorder %s14, 1
    %p100 = por %p98, %p99
    %p101 = scmp.ne.s32.totalorder %s90, %s91
    %p102 = scmp.eq.s32.totalorder %s14, 0
    %p103 = por %p101, %p102
    %p104 = scmp.ne.s32.totalorder %s90, %s91
    %p105 = scmp.eq.s32.totalorder %s15, 1
    %p106 = por %p104, %p105
    %p108 = scmp.ne.s32.totalorder %s91, %s107
    %p109 = scmp.eq.s32.totalorder %s15, 0
    %p110 = por %p108, %p109
    %p111 = scmp.le.s32.totalorder 1, %s9
    %p112 = scmp.lt.s32.totalorder %s9, 3
    %p113 = pnand %p111, %p112
    %p114 = pneg %p113
    // Predicated region
    $region9: #{simple_block_forward.3} parent=5 // pred_check
      _
    $region10: #{simple_block_forward.3} parent=5 // pred_check_branch
      %116 = sbr.rel (%p113) target = $region12
    $region11: #{simple_block_forward.3} parent=5 // pred_region
      %s117 = ssub.s32 %s9, 1
      // Predicated region
      $region13: #{simple_block_forward.3} parent=11 // pred_check
        %p118 = pneg %p56
      $region14: #{simple_block_forward.3} parent=11 // pred_check_branch
        %120 = sbr.rel (%p118) target = $region16
      $region15: #{simple_block_forward.3} parent=11 // pred_region
        _
      $region16: #{simple_block_forward.3} parent=11 // pred_fallthru
        _
      // Predicated region
      $region17: #{simple_block_forward.3} parent=11 // pred_check
        %p121 = pneg %p77
      $region18: #{simple_block_forward.3} parent=11 // pred_check_branch
        %123 = sbr.rel (%p121) target = $region20
      $region19: #{simple_block_forward.3} parent=11 // pred_region
        _
      $region20: #{simple_block_forward.3} parent=11 // pred_fallthru
        _
    $region12: #{simple_block_forward.3} parent=5 // pred_fallthru
      _
    %p124 = scmp.lt.s32.totalorder %s9, 2
    // Predicated region
    $region21: #{simple_block_forward.3} parent=5 // pred_check
      %p125 = pneg %p124
    $region22: #{simple_block_forward.3} parent=5 // pred_check_branch
      %127 = sbr.rel (%p125) target = $region24
    $region23: #{simple_block_forward.3} parent=5 // pred_region
      // Predicated region
      $region25: #{simple_block_forward.3} parent=23 // pred_check
        %p128 = pneg %p29
      $region26: #{simple_block_forward.3} parent=23 // pred_check_branch
        %130 = sbr.rel (%p128) target = $region28
      $region27: #{simple_block_forward.3} parent=23 // pred_region
        %s131 = smul.u32 32, %s9
        %p132 = scmp.lt.s32.totalorder %s131, 63
        %s133 = scalar_select %p132, %s131, 63
        %s134 = smul.addr %s133, 8
        %s135 = scalar_lea.vmem %s0, %s134
        %s136 = smul.u32 32, %s9
      $region28: #{simple_block_forward.3} parent=23 // pred_fallthru
        _
    $region24: #{simple_block_forward.3} parent=5 // pred_fallthru
      _
    %p137 = scmp.le.s32.totalorder 1, %s9
    %p138 = scmp.lt.s32.totalorder %s9, 3
    %p139 = pnand %p137, %p138
    %p140 = pneg %p139
    // Predicated region
    $region29: #{simple_block_forward.3} parent=5 // pred_check
      _
    $region30: #{simple_block_forward.3} parent=5 // pred_check_branch
      %142 = sbr.rel (%p139) target = $region32
    $region31: #{simple_block_forward.3} parent=5 // pred_region
      %s143 = ssub.s32 %s9, 1
      %s144 = smul.u32 32, %s14
      %p145 = scmp.lt.s32.totalorder %s144, 63
      %s146 = scalar_select %p145, %s144, 63
      %s147 = smul.addr %s146, 8
      %s148 = scalar_lea.vmem %s0, %s147
      %p149 = pneg %p35
      %p150 = pneg %p32
      %p151 = pneg %p56
      %p152 = pneg %p53
      %p153 = pneg %p77
      %p154 = pneg %p74
      %p155 = pneg %p103
      %p156 = pneg %p100
      %s157 = smul.u32 32, %s14
      %p158 = scmp.lt.s32.totalorder %s157, 63
      %s159 = scalar_select %p158, %s157, 63
      %s160 = smul.addr %s159, 8
      %s161 = scalar_lea.vmem %s3, %s160
      %s162 = smul.u32 32, %s14
      %p163 = scmp.lt.s32.totalorder %s162, 63
      %s164 = scalar_select %p163, %s162, 63
      %s165 = smul.addr %s164, 8
      %s166 = scalar_lea.vmem %s0, %s165
      %s167 = smul.u32 32, %s14
      %s168 = smul.u32 32, %s14
      %p169 = scmp.lt.s32.totalorder %s168, 63
      %s170 = scalar_select %p169, %s168, 63
      %s171 = smul.addr %s170, 8
      %s172 = scalar_lea.vmem %s3, %s171
      %s173 = smul.u32 32, %s14
      %v174 = vld [vmem:[%s166] sm:$0xff]
      %v175 = vld [vmem:[%s166 + $0x8] sm:$0xff]
      %v176 = vld [vmem:[%s166 + $0x10] sm:$0xff]
      %v177 = vld [vmem:[%s166 + $0x18] sm:$0xff]
      %v178 = vld [vmem:[%s166 + $0x20] sm:$0xff]
      %v179 = vld [vmem:[%s166 + $0x28] sm:$0xff]
      %v180 = vld [vmem:[%s166 + $0x30] sm:$0xff]
      %v181 = vld [vmem:[%s166 + $0x38] sm:$0xff]
      %v182 = vld [vmem:[%s166 + $0x40] sm:$0xff]
      %v183 = vld [vmem:[%s166 + $0x48] sm:$0xff]
      %v184 = vld [vmem:[%s166 + $0x50] sm:$0xff]
      %v185 = vld [vmem:[%s166 + $0x58] sm:$0xff]
      %v186 = vld [vmem:[%s166 + $0x60] sm:$0xff]
      %v187 = vld [vmem:[%s166 + $0x68] sm:$0xff]
      %v188 = vld [vmem:[%s166 + $0x70] sm:$0xff]
      %v189 = vld [vmem:[%s166 + $0x78] sm:$0xff]
      %v190 = vld [vmem:[%s166 + $0x80] sm:$0xff]
      %v191 = vld [vmem:[%s166 + $0x88] sm:$0xff]
      %v192 = vld [vmem:[%s166 + $0x90] sm:$0xff]
      %v193 = vld [vmem:[%s166 + $0x98] sm:$0xff]
      %v194 = vld [vmem:[%s166 + $0xa0] sm:$0xff]
      %v195 = vld [vmem:[%s166 + $0xa8] sm:$0xff]
      %v196 = vld [vmem:[%s166 + $0xb0] sm:$0xff]
      %v197 = vld [vmem:[%s166 + $0xb8] sm:$0xff]
      %v198 = vld [vmem:[%s166 + $0xc0] sm:$0xff]
      %v199 = vld [vmem:[%s166 + $0xc8] sm:$0xff]
      %v200 = vld [vmem:[%s166 + $0xd0] sm:$0xff]
      %v201 = vld [vmem:[%s166 + $0xd8] sm:$0xff]
      %v202 = vld [vmem:[%s166 + $0xe0] sm:$0xff]
      %v203 = vld [vmem:[%s166 + $0xe8] sm:$0xff]
      %v204 = vld [vmem:[%s166 + $0xf0] sm:$0xff]
      %v205 = vld [vmem:[%s166 + $0xf8] sm:$0xff]
      %v206 = vld [vmem:[%s1] sm:$0x1]
      %v208 = vlaneseq
      %v209 = vshrl.u32 %v208, 7
      %v210 = vsub.s32 0, %v209
      %v211 = vrot.slane %v206, %v210
      %v213 = vmul.f32 %v174, %v211
      %v214 = vmul.f32 %v175, %v211
      %v215 = vmul.f32 %v176, %v211
      %v216 = vmul.f32 %v177, %v211
      %v217 = vmul.f32 %v178, %v211
      %v218 = vmul.f32 %v179, %v211
      %v219 = vmul.f32 %v180, %v211
      %v220 = vmul.f32 %v181, %v211
      %v221 = vmul.f32 %v182, %v211
      %v222 = vmul.f32 %v183, %v211
      %v223 = vmul.f32 %v184, %v211
      %v224 = vmul.f32 %v185, %v211
      %v225 = vmul.f32 %v186, %v211
      %v226 = vmul.f32 %v187, %v211
      %v227 = vmul.f32 %v188, %v211
      %v228 = vmul.f32 %v189, %v211
      %v229 = vmul.f32 %v190, %v211
      %v230 = vmul.f32 %v191, %v211
      %v231 = vmul.f32 %v192, %v211
      %v232 = vmul.f32 %v193, %v211
      %v233 = vmul.f32 %v194, %v211
      %v234 = vmul.f32 %v195, %v211
      %v235 = vmul.f32 %v196, %v211
      %v236 = vmul.f32 %v197, %v211
      %v237 = vmul.f32 %v198, %v211
      %v238 = vmul.f32 %v199, %v211
      %v239 = vmul.f32 %v200, %v211
      %v240 = vmul.f32 %v201, %v211
      %v241 = vmul.f32 %v202, %v211
      %v242 = vmul.f32 %v203, %v211
      %v243 = vmul.f32 %v204, %v211
      %v244 = vmul.f32 %v205, %v211
      %v245 = vld [vmem:[%s2] sm:$0x1]
      %v247 = vlaneseq
      %v248 = vshrl.u32 %v247, 7
      %v249 = vsub.s32 0, %v248
      %v250 = vrot.slane %v245, %v249
      %v252 = vadd.f32 %v213, %v250
      %v253 = vadd.f32 %v214, %v250
      %v254 = vadd.f32 %v215, %v250
      %v255 = vadd.f32 %v216, %v250
      %v256 = vadd.f32 %v217, %v250
      %v257 = vadd.f32 %v218, %v250
      %v258 = vadd.f32 %v219, %v250
      %v259 = vadd.f32 %v220, %v250
      %v260 = vadd.f32 %v221, %v250
      %v261 = vadd.f32 %v222, %v250
      %v262 = vadd.f32 %v223, %v250
      %v263 = vadd.f32 %v224, %v250
      %v264 = vadd.f32 %v225, %v250
      %v265 = vadd.f32 %v226, %v250
      %v266 = vadd.f32 %v227, %v250
      %v267 = vadd.f32 %v228, %v250
      %v268 = vadd.f32 %v229, %v250
      %v269 = vadd.f32 %v230, %v250
      %v270 = vadd.f32 %v231, %v250
      %v271 = vadd.f32 %v232, %v250
      %v272 = vadd.f32 %v233, %v250
      %v273 = vadd.f32 %v234, %v250
      %v274 = vadd.f32 %v235, %v250
      %v275 = vadd.f32 %v236, %v250
      %v276 = vadd.f32 %v237, %v250
      %v277 = vadd.f32 %v238, %v250
      %v278 = vadd.f32 %v239, %v250
      %v279 = vadd.f32 %v240, %v250
      %v280 = vadd.f32 %v241, %v250
      %v281 = vadd.f32 %v242, %v250
      %v282 = vadd.f32 %v243, %v250
      %v283 = vadd.f32 %v244, %v250
      %vm284 = vcmp.ge.f32.partialorder %v252, 0.0
      %vm285 = vcmp.ge.f32.partialorder %v253, 0.0
      %vm286 = vcmp.ge.f32.partialorder %v254, 0.0
      %vm287 = vcmp.ge.f32.partialorder %v255, 0.0
      %vm288 = vcmp.ge.f32.partialorder %v256, 0.0
      %vm289 = vcmp.ge.f32.partialorder %v257, 0.0
      %vm290 = vcmp.ge.f32.partialorder %v258, 0.0
      %vm291 = vcmp.ge.f32.partialorder %v259, 0.0
      %vm292 = vcmp.ge.f32.partialorder %v260, 0.0
      %vm293 = vcmp.ge.f32.partialorder %v261, 0.0
      %vm294 = vcmp.ge.f32.partialorder %v262, 0.0
      %vm295 = vcmp.ge.f32.partialorder %v263, 0.0
      %vm296 = vcmp.ge.f32.partialorder %v264, 0.0
      %vm297 = vcmp.ge.f32.partialorder %v265, 0.0
      %vm298 = vcmp.ge.f32.partialorder %v266, 0.0
      %vm299 = vcmp.ge.f32.partialorder %v267, 0.0
      %vm300 = vcmp.ge.f32.partialorder %v268, 0.0
      %vm301 = vcmp.ge.f32.partialorder %v269, 0.0
      %vm302 = vcmp.ge.f32.partialorder %v270, 0.0
      %vm303 = vcmp.ge.f32.partialorder %v271, 0.0
      %vm304 = vcmp.ge.f32.partialorder %v272, 0.0
      %vm305 = vcmp.ge.f32.partialorder %v273, 0.0
      %vm306 = vcmp.ge.f32.partialorder %v274, 0.0
      %vm307 = vcmp.ge.f32.partialorder %v275, 0.0
      %vm308 = vcmp.ge.f32.partialorder %v276, 0.0
      %vm309 = vcmp.ge.f32.partialorder %v277, 0.0
      %vm310 = vcmp.ge.f32.partialorder %v278, 0.0
      %vm311 = vcmp.ge.f32.partialorder %v279, 0.0
      %vm312 = vcmp.ge.f32.partialorder %v280, 0.0
      %vm313 = vcmp.ge.f32.partialorder %v281, 0.0
      %vm314 = vcmp.ge.f32.partialorder %v282, 0.0
      %vm315 = vcmp.ge.f32.partialorder %v283, 0.0
      %v316 = vmul.f32 %v252, 0.1
      %v317 = vmul.f32 %v253, 0.1
      %v318 = vmul.f32 %v254, 0.1
      %v319 = vmul.f32 %v255, 0.1
      %v320 = vmul.f32 %v256, 0.1
      %v321 = vmul.f32 %v257, 0.1
      %v322 = vmul.f32 %v258, 0.1
      %v323 = vmul.f32 %v259, 0.1
      %v324 = vmul.f32 %v260, 0.1
      %v325 = vmul.f32 %v261, 0.1
      %v326 = vmul.f32 %v262, 0.1
      %v327 = vmul.f32 %v263, 0.1
      %v328 = vmul.f32 %v264, 0.1
      %v329 = vmul.f32 %v265, 0.1
      %v330 = vmul.f32 %v266, 0.1
      %v331 = vmul.f32 %v267, 0.1
      %v332 = vmul.f32 %v268, 0.1
      %v333 = vmul.f32 %v269, 0.1
      %v334 = vmul.f32 %v270, 0.1
      %v335 = vmul.f32 %v271, 0.1
      %v336 = vmul.f32 %v272, 0.1
      %v337 = vmul.f32 %v273, 0.1
      %v338 = vmul.f32 %v274, 0.1
      %v339 = vmul.f32 %v275, 0.1
      %v340 = vmul.f32 %v276, 0.1
      %v341 = vmul.f32 %v277, 0.1
      %v342 = vmul.f32 %v278, 0.1
      %v343 = vmul.f32 %v279, 0.1
      %v344 = vmul.f32 %v280, 0.1
      %v345 = vmul.f32 %v281, 0.1
      %v346 = vmul.f32 %v282, 0.1
      %v347 = vmul.f32 %v283, 0.1
      %v348 = vsel %vm284, %v252, %v316
      %v349 = vsel %vm285, %v253, %v317
      %v350 = vsel %vm286, %v254, %v318
      %v351 = vsel %vm287, %v255, %v319
      %v352 = vsel %vm288, %v256, %v320
      %v353 = vsel %vm289, %v257, %v321
      %v354 = vsel %vm290, %v258, %v322
      %v355 = vsel %vm291, %v259, %v323
      %v356 = vsel %vm292, %v260, %v324
      %v357 = vsel %vm293, %v261, %v325
      %v358 = vsel %vm294, %v262, %v326
      %v359 = vsel %vm295, %v263, %v327
      %v360 = vsel %vm296, %v264, %v328
      %v361 = vsel %vm297, %v265, %v329
      %v362 = vsel %vm298, %v266, %v330
      %v363 = vsel %vm299, %v267, %v331
      %v364 = vsel %vm300, %v268, %v332
      %v365 = vsel %vm301, %v269, %v333
      %v366 = vsel %vm302, %v270, %v334
      %v367 = vsel %vm303, %v271, %v335
      %v368 = vsel %vm304, %v272, %v336
      %v369 = vsel %vm305, %v273, %v337
      %v370 = vsel %vm306, %v274, %v338
      %v371 = vsel %vm307, %v275, %v339
      %v372 = vsel %vm308, %v276, %v340
      %v373 = vsel %vm309, %v277, %v341
      %v374 = vsel %vm310, %v278, %v342
      %v375 = vsel %vm311, %v279, %v343
      %v376 = vsel %vm312, %v280, %v344
      %v377 = vsel %vm313, %v281, %v345
      %v378 = vsel %vm314, %v282, %v346
      %v379 = vsel %vm315, %v283, %v347
      %380 = vst [vmem:[%s172] sm:$0xff] %v348
      %381 = vst [vmem:[%s172 + $0x8] sm:$0xff] %v349
      %382 = vst [vmem:[%s172 + $0x10] sm:$0xff] %v350
      %383 = vst [vmem:[%s172 + $0x18] sm:$0xff] %v351
      %384 = vst [vmem:[%s172 + $0x20] sm:$0xff] %v352
      %385 = vst [vmem:[%s172 + $0x28] sm:$0xff] %v353
      %386 = vst [vmem:[%s172 + $0x30] sm:$0xff] %v354
      %387 = vst [vmem:[%s172 + $0x38] sm:$0xff] %v355
      %388 = vst [vmem:[%s172 + $0x40] sm:$0xff] %v356
      %389 = vst [vmem:[%s172 + $0x48] sm:$0xff] %v357
      %390 = vst [vmem:[%s172 + $0x50] sm:$0xff] %v358
      %391 = vst [vmem:[%s172 + $0x58] sm:$0xff] %v359
      %392 = vst [vmem:[%s172 + $0x60] sm:$0xff] %v360
      %393 = vst [vmem:[%s172 + $0x68] sm:$0xff] %v361
      %394 = vst [vmem:[%s172 + $0x70] sm:$0xff] %v362
      %395 = vst [vmem:[%s172 + $0x78] sm:$0xff] %v363
      %396 = vst [vmem:[%s172 + $0x80] sm:$0xff] %v364
      %397 = vst [vmem:[%s172 + $0x88] sm:$0xff] %v365
      %398 = vst [vmem:[%s172 + $0x90] sm:$0xff] %v366
      %399 = vst [vmem:[%s172 + $0x98] sm:$0xff] %v367
      %400 = vst [vmem:[%s172 + $0xa0] sm:$0xff] %v368
      %401 = vst [vmem:[%s172 + $0xa8] sm:$0xff] %v369
      %402 = vst [vmem:[%s172 + $0xb0] sm:$0xff] %v370
      %403 = vst [vmem:[%s172 + $0xb8] sm:$0xff] %v371
      %404 = vst [vmem:[%s172 + $0xc0] sm:$0xff] %v372
      %405 = vst [vmem:[%s172 + $0xc8] sm:$0xff] %v373
      %406 = vst [vmem:[%s172 + $0xd0] sm:$0xff] %v374
      %407 = vst [vmem:[%s172 + $0xd8] sm:$0xff] %v375
      %408 = vst [vmem:[%s172 + $0xe0] sm:$0xff] %v376
      %409 = vst [vmem:[%s172 + $0xe8] sm:$0xff] %v377
      %410 = vst [vmem:[%s172 + $0xf0] sm:$0xff] %v378
      %411 = vst [vmem:[%s172 + $0xf8] sm:$0xff] %v379
      %s412 = smul.u32 32, %s14
      %p413 = scmp.lt.s32.totalorder %s412, 63
      %s414 = scalar_select %p413, %s412, 63
      %s415 = smul.addr %s414, 8
      %s416 = scalar_lea.vmem %s3, %s415
      // Predicated region
      $region33: #{simple_block_forward.3} parent=31 // pred_check
        %p417 = pneg %p100
      $region34: #{simple_block_forward.3} parent=31 // pred_check_branch
        %419 = sbr.rel (%p417) target = $region36
      $region35: #{simple_block_forward.3} parent=31 // pred_region
        %s420 = smul.u32 32, %s14
      $region36: #{simple_block_forward.3} parent=31 // pred_fallthru
        _
    $region32: #{simple_block_forward.3} parent=5 // pred_fallthru
      _
    %p421 = scmp.le.s32.totalorder 2, %s9
    // Predicated region
    $region37: #{simple_block_forward.3} parent=5 // pred_check
      %p422 = pneg %p421
    $region38: #{simple_block_forward.3} parent=5 // pred_check_branch
      %424 = sbr.rel (%p422) target = $region40
    $region39: #{simple_block_forward.3} parent=5 // pred_region
      %s425 = ssub.s32 %s9, 2
      // Predicated region
      $region41: #{simple_block_forward.3} parent=39 // pred_check
        %p426 = pneg %p106
      $region42: #{simple_block_forward.3} parent=39 // pred_check_branch
        %428 = sbr.rel (%p426) target = $region44
      $region43: #{simple_block_forward.3} parent=39 // pred_region
        %s429 = smul.u32 32, %s15
        %p430 = scmp.lt.s32.totalorder %s429, 63
        %s431 = scalar_select %p430, %s429, 63
        %s432 = smul.addr %s431, 8
        %s433 = scalar_lea.vmem %s3, %s432
      $region44: #{simple_block_forward.3} parent=39 // pred_fallthru
        _
    $region40: #{simple_block_forward.3} parent=5 // pred_fallthru
      _
  $region6: #{simple_block_forward.3} parent=0 // loop_footer
    %s13 = sadd.s32 1, %s9
  $region7: #{simple_block_forward.3} parent=0 // loop_footer_branch
    %8 = sbr.rel target = $region3
  $region8: #{simple_block_forward.3} parent=0 // loop_exit
    _

// kernel: simple_block_forward.2
$region0: #{simple_block_forward.2}
  #allocation0 [shape = 'u32[]', space=smem, size = 0x4, offset = 0x4, fixed_abs, tag = 'smem constant byte address 0x4 - core index']
  #allocation1 [shape = 'u32[144,128]{1,0:T(1,128)}', space=vmem, size = 0x12000, scoped, tag = 'internal scratch']
  %s0 = inlined_call_operand.vmem [shape: f32[512,24], index: 0, kind: input, shape index: {}]
  %s1 = inlined_call_operand.vmem [shape: f32[512,64], index: 1, kind: input, shape index: {}]
  %s2 = inlined_call_operand.vmem [shape: f32[24,64], index: 2, kind: input, shape index: {}]
  %s3 = inlined_call_operand.vmem [shape: f32[24,64], index: 3, kind: input, shape index: {}]
  %s4 = inlined_call_operand.vmem [shape: f32[1,64], index: 4, kind: input, shape index: {}]
  %s5 = inlined_call_operand.vmem [shape: f32[64,512], index: 5, kind: input, shape index: {}]
  %s6 = inlined_call_operand.vmem [shape: f32[64,512], index: 6, kind: input, shape index: {}]
  %s7 = inlined_call_operand.vmem [shape: bf16[512,128], index: 7, kind: input, shape index: {}]
  %s8 = inlined_call_operand.vmem [shape: f32[512,128], index: 8, kind: output, shape index: {0}]
  %s9 = inlined_call_operand.vmem [shape: f32[16,128], index: 9, kind: output, shape index: {1}]
  %10 = xla_tuple %s8, %s9
  %s11 = sld [smem:[#allocation0]]
  $region73: #{simple_block_forward.2} parent=0
    _
  %s13 = ssub.s32 1, %s11
  %s14 = scalar_select 0, %s13, %s11
  loop: start=0, step=1, limit=4
  $region2: #{simple_block_forward.2} parent=0 // loop_pre_header
    _
  $region3: #{simple_block_forward.2} parent=0 // loop_header
    %s16 = sphi 0, %s20
    %p17 = scmp.ge.s32.totalorder %s16, 4
    %s26 = sphi 0, %s28
    %s29 = sphi 0, %s26
    %s30 = sphi 0, %s29
    %s46 = sphi 0, %s30
    %s52 = sphi 0, %s54
    %s55 = sphi 0, %s52
    %s56 = sphi 0, %s55
    %s72 = sphi 0, %s56
    %s76 = sphi 0, %s76
    %s78 = sphi 0, %s76
    %s79 = sphi 0, %s78
    %s93 = sphi 0, %s79
    %s97 = sphi 0, %s97
    %s99 = sphi 0, %s97
    %s100 = sphi 0, %s99
    %s114 = sphi 0, %s100
    %s118 = sphi 0, %s118
    %s120 = sphi 0, %s118
    %s121 = sphi 0, %s120
    %s135 = sphi 0, %s121
    %s139 = sphi 0, %s139
    %s141 = sphi 0, %s139
    %s142 = sphi 0, %s141
    %s156 = sphi 0, %s142
    %s160 = sphi 0, %s160
    %s162 = sphi 0, %s160
    %s163 = sphi 0, %s162
    %s177 = sphi 0, %s163
    %s181 = sphi 0, %s181
    %s183 = sphi 0, %s181
    %s184 = sphi 0, %s183
    %s198 = sphi 0, %s184
    %s204 = sphi 0, %s206
    %s207 = sphi 0, %s204
    %s208 = sphi 0, %s207
    %s224 = sphi 0, %s208
    %s230 = sphi 0, %s232
    %s233 = sphi 0, %s230
    %s234 = sphi 0, %s233
    %s250 = sphi 0, %s234
  $region4: #{simple_block_forward.2} parent=0 // loop_header_branch
    %19 = sbr.rel (%p17) target = $region8
  $region5: #{simple_block_forward.2} parent=0 // loop_body
    %s21 = ssub.s32 %s16, 1
    %s22 = ssub.s32 %s16, 2
    %s23 = sadd.s32 %s16, 1
    %s24 = ssub.s32 %s16, %s23
    %p25 = scmp.eq.s32.totalorder %s24, 0
    %s27 = sadd.s32 %s26, 1
    %s28 = scalar_select %p25, %s26, %s27
    %p31 = pneg %p25
    %p32 = scmp.eq.s32.totalorder %s16, 1
    %p33 = por %p31, %p32
    %p34 = scmp.ne.s32.totalorder %s26, %s29
    %p35 = scmp.eq.s32.totalorder %s16, 0
    %p36 = por %p34, %p35
    %p37 = scmp.ne.s32.totalorder %s26, %s29
    %p38 = scmp.eq.s32.totalorder %s21, 1
    %p39 = por %p37, %p38
    %p40 = scmp.ne.s32.totalorder %s29, %s30
    %p41 = scmp.eq.s32.totalorder %s21, 0
    %p42 = por %p40, %p41
    %p43 = scmp.ne.s32.totalorder %s29, %s30
    %p44 = scmp.eq.s32.totalorder %s22, 1
    %p45 = por %p43, %p44
    %p47 = scmp.ne.s32.totalorder %s30, %s46
    %p48 = scmp.eq.s32.totalorder %s22, 0
    %p49 = por %p47, %p48
    %s50 = ssub.s32 %s16, %s23
    %p51 = scmp.eq.s32.totalorder %s50, 0
    %s53 = sadd.s32 %s52, 1
    %s54 = scalar_select %p51, %s52, %s53
    %p57 = pneg %p51
    %p58 = scmp.eq.s32.totalorder %s16, 1
    %p59 = por %p57, %p58
    %p60 = scmp.ne.s32.totalorder %s52, %s55
    %p61 = scmp.eq.s32.totalorder %s16, 0
    %p62 = por %p60, %p61
    %p63 = scmp.ne.s32.totalorder %s52, %s55
    %p64 = scmp.eq.s32.totalorder %s21, 1
    %p65 = por %p63, %p64
    %p66 = scmp.ne.s32.totalorder %s55, %s56
    %p67 = scmp.eq.s32.totalorder %s21, 0
    %p68 = por %p66, %p67
    %p69 = scmp.ne.s32.totalorder %s55, %s56
    %p70 = scmp.eq.s32.totalorder %s22, 1
    %p71 = por %p69, %p70
    %p73 = scmp.ne.s32.totalorder %s56, %s72
    %p74 = scmp.eq.s32.totalorder %s22, 0
    %p75 = por %p73, %p74
    %s77 = sadd.s32 %s76, 1
    %p80 = scmp.eq.s32.totalorder %s16, 1
    %p81 = scmp.ne.s32.totalorder %s76, %s78
    %p82 = scmp.eq.s32.totalorder %s16, 0
    %p83 = por %p81, %p82
    %p84 = scmp.ne.s32.totalorder %s76, %s78
    %p85 = scmp.eq.s32.totalorder %s21, 1
    %p86 = por %p84, %p85
    %p87 = scmp.ne.s32.totalorder %s78, %s79
    %p88 = scmp.eq.s32.totalorder %s21, 0
    %p89 = por %p87, %p88
    %p90 = scmp.ne.s32.totalorder %s78, %s79
    %p91 = scmp.eq.s32.totalorder %s22, 1
    %p92 = por %p90, %p91
    %p94 = scmp.ne.s32.totalorder %s79, %s93
    %p95 = scmp.eq.s32.totalorder %s22, 0
    %p96 = por %p94, %p95
    %s98 = sadd.s32 %s97, 1
    %p101 = scmp.eq.s32.totalorder %s16, 1
    %p102 = scmp.ne.s32.totalorder %s97, %s99
    %p103 = scmp.eq.s32.totalorder %s16, 0
    %p104 = por %p102, %p103
    %p105 = scmp.ne.s32.totalorder %s97, %s99
    %p106 = scmp.eq.s32.totalorder %s21, 1
    %p107 = por %p105, %p106
    %p108 = scmp.ne.s32.totalorder %s99, %s100
    %p109 = scmp.eq.s32.totalorder %s21, 0
    %p110 = por %p108, %p109
    %p111 = scmp.ne.s32.totalorder %s99, %s100
    %p112 = scmp.eq.s32.totalorder %s22, 1
    %p113 = por %p111, %p112
    %p115 = scmp.ne.s32.totalorder %s100, %s114
    %p116 = scmp.eq.s32.totalorder %s22, 0
    %p117 = por %p115, %p116
    %s119 = sadd.s32 %s118, 1
    %p122 = scmp.eq.s32.totalorder %s16, 1
    %p123 = scmp.ne.s32.totalorder %s118, %s120
    %p124 = scmp.eq.s32.totalorder %s16, 0
    %p125 = por %p123, %p124
    %p126 = scmp.ne.s32.totalorder %s118, %s120
    %p127 = scmp.eq.s32.totalorder %s21, 1
    %p128 = por %p126, %p127
    %p129 = scmp.ne.s32.totalorder %s120, %s121
    %p130 = scmp.eq.s32.totalorder %s21, 0
    %p131 = por %p129, %p130
    %p132 = scmp.ne.s32.totalorder %s120, %s121
    %p133 = scmp.eq.s32.totalorder %s22, 1
    %p134 = por %p132, %p133
    %p136 = scmp.ne.s32.totalorder %s121, %s135
    %p137 = scmp.eq.s32.totalorder %s22, 0
    %p138 = por %p136, %p137
    %s140 = sadd.s32 %s139, 1
    %p143 = scmp.eq.s32.totalorder %s16, 1
    %p144 = scmp.ne.s32.totalorder %s139, %s141
    %p145 = scmp.eq.s32.totalorder %s16, 0
    %p146 = por %p144, %p145
    %p147 = scmp.ne.s32.totalorder %s139, %s141
    %p148 = scmp.eq.s32.totalorder %s21, 1
    %p149 = por %p147, %p148
    %p150 = scmp.ne.s32.totalorder %s141, %s142
    %p151 = scmp.eq.s32.totalorder %s21, 0
    %p152 = por %p150, %p151
    %p153 = scmp.ne.s32.totalorder %s141, %s142
    %p154 = scmp.eq.s32.totalorder %s22, 1
    %p155 = por %p153, %p154
    %p157 = scmp.ne.s32.totalorder %s142, %s156
    %p158 = scmp.eq.s32.totalorder %s22, 0
    %p159 = por %p157, %p158
    %s161 = sadd.s32 %s160, 1
    %p164 = scmp.eq.s32.totalorder %s16, 1
    %p165 = scmp.ne.s32.totalorder %s160, %s162
    %p166 = scmp.eq.s32.totalorder %s16, 0
    %p167 = por %p165, %p166
    %p168 = scmp.ne.s32.totalorder %s160, %s162
    %p169 = scmp.eq.s32.totalorder %s21, 1
    %p170 = por %p168, %p169
    %p171 = scmp.ne.s32.totalorder %s162, %s163
    %p172 = scmp.eq.s32.totalorder %s21, 0
    %p173 = por %p171, %p172
    %p174 = scmp.ne.s32.totalorder %s162, %s163
    %p175 = scmp.eq.s32.totalorder %s22, 1
    %p176 = por %p174, %p175
    %p178 = scmp.ne.s32.totalorder %s163, %s177
    %p179 = scmp.eq.s32.totalorder %s22, 0
    %p180 = por %p178, %p179
    %s182 = sadd.s32 %s181, 1
    %p185 = scmp.eq.s32.totalorder %s16, 1
    %p186 = scmp.ne.s32.totalorder %s181, %s183
    %p187 = scmp.eq.s32.totalorder %s16, 0
    %p188 = por %p186, %p187
    %p189 = scmp.ne.s32.totalorder %s181, %s183
    %p190 = scmp.eq.s32.totalorder %s21, 1
    %p191 = por %p189, %p190
    %p192 = scmp.ne.s32.totalorder %s183, %s184
    %p193 = scmp.eq.s32.totalorder %s21, 0
    %p194 = por %p192, %p193
    %p195 = scmp.ne.s32.totalorder %s183, %s184
    %p196 = scmp.eq.s32.totalorder %s22, 1
    %p197 = por %p195, %p196
    %p199 = scmp.ne.s32.totalorder %s184, %s198
    %p200 = scmp.eq.s32.totalorder %s22, 0
    %p201 = por %p199, %p200
    %s202 = ssub.s32 %s16, %s23
    %p203 = scmp.eq.s32.totalorder %s202, 0
    %s205 = sadd.s32 %s204, 1
    %s206 = scalar_select %p203, %s204, %s205
    %p209 = pneg %p203
    %p210 = scmp.eq.s32.totalorder %s16, 1
    %p211 = por %p209, %p210
    %p212 = scmp.ne.s32.totalorder %s204, %s207
    %p213 = scmp.eq.s32.totalorder %s16, 0
    %p214 = por %p212, %p213
    %p215 = scmp.ne.s32.totalorder %s204, %s207
    %p216 = scmp.eq.s32.totalorder %s21, 1
    %p217 = por %p215, %p216
    %p218 = scmp.ne.s32.totalorder %s207, %s208
    %p219 = scmp.eq.s32.totalorder %s21, 0
    %p220 = por %p218, %p219
    %p221 = scmp.ne.s32.totalorder %s207, %s208
    %p222 = scmp.eq.s32.totalorder %s22, 1
    %p223 = por %p221, %p222
    %p225 = scmp.ne.s32.totalorder %s208, %s224
    %p226 = scmp.eq.s32.totalorder %s22, 0
    %p227 = por %p225, %p226
    %s228 = ssub.s32 %s16, %s23
    %p229 = scmp.eq.s32.totalorder %s228, 0
    %s231 = sadd.s32 %s230, 1
    %s232 = scalar_select %p229, %s230, %s231
    %p235 = pneg %p229
    %p236 = scmp.eq.s32.totalorder %s16, 1
    %p237 = por %p235, %p236
    %p238 = scmp.ne.s32.totalorder %s230, %s233
    %p239 = scmp.eq.s32.totalorder %s16, 0
    %p240 = por %p238, %p239
    %p241 = scmp.ne.s32.totalorder %s230, %s233
    %p242 = scmp.eq.s32.totalorder %s21, 1
    %p243 = por %p241, %p242
    %p244 = scmp.ne.s32.totalorder %s233, %s234
    %p245 = scmp.eq.s32.totalorder %s21, 0
    %p246 = por %p244, %p245
    %p247 = scmp.ne.s32.totalorder %s233, %s234
    %p248 = scmp.eq.s32.totalorder %s22, 1
    %p249 = por %p247, %p248
    %p251 = scmp.ne.s32.totalorder %s234, %s250
    %p252 = scmp.eq.s32.totalorder %s22, 0
    %p253 = por %p251, %p252
    %p254 = scmp.le.s32.totalorder 1, %s16
    %p255 = scmp.lt.s32.totalorder %s16, 3
    %p256 = pnand %p254, %p255
    %p257 = pneg %p256
    // Predicated region
    $region9: #{simple_block_forward.2} parent=5 // pred_check
      _
    $region10: #{simple_block_forward.2} parent=5 // pred_check_branch
      %259 = sbr.rel (%p256) target = $region12
    $region11: #{simple_block_forward.2} parent=5 // pred_region
      %s260 = ssub.s32 %s16, 1
      // Predicated region
      $region13: #{simple_block_forward.2} parent=11 // pred_check
        %p261 = pneg %p89
      $region14: #{simple_block_forward.2} parent=11 // pred_check_branch
        %263 = sbr.rel (%p261) target = $region16
      $region15: #{simple_block_forward.2} parent=11 // pred_region
        _
      $region16: #{simple_block_forward.2} parent=11 // pred_fallthru
        _
      // Predicated region
      $region17: #{simple_block_forward.2} parent=11 // pred_check
        %p264 = pneg %p110
      $region18: #{simple_block_forward.2} parent=11 // pred_check_branch
        %266 = sbr.rel (%p264) target = $region20
      $region19: #{simple_block_forward.2} parent=11 // pred_region
        _
      $region20: #{simple_block_forward.2} parent=11 // pred_fallthru
        _
      // Predicated region
      $region21: #{simple_block_forward.2} parent=11 // pred_check
        %p267 = pneg %p131
      $region22: #{simple_block_forward.2} parent=11 // pred_check_branch
        %269 = sbr.rel (%p267) target = $region24
      $region23: #{simple_block_forward.2} parent=11 // pred_region
        _
      $region24: #{simple_block_forward.2} parent=11 // pred_fallthru
        _
      // Predicated region
      $region25: #{simple_block_forward.2} parent=11 // pred_check
        %p270 = pneg %p152
      $region26: #{simple_block_forward.2} parent=11 // pred_check_branch
        %272 = sbr.rel (%p270) target = $region28
      $region27: #{simple_block_forward.2} parent=11 // pred_region
        _
      $region28: #{simple_block_forward.2} parent=11 // pred_fallthru
        _
      // Predicated region
      $region29: #{simple_block_forward.2} parent=11 // pred_check
        %p273 = pneg %p173
      $region30: #{simple_block_forward.2} parent=11 // pred_check_branch
        %275 = sbr.rel (%p273) target = $region32
      $region31: #{simple_block_forward.2} parent=11 // pred_region
        _
      $region32: #{simple_block_forward.2} parent=11 // pred_fallthru
        _
      // Predicated region
      $region33: #{simple_block_forward.2} parent=11 // pred_check
        %p276 = pneg %p194
      $region34: #{simple_block_forward.2} parent=11 // pred_check_branch
        %278 = sbr.rel (%p276) target = $region36
      $region35: #{simple_block_forward.2} parent=11 // pred_region
        _
      $region36: #{simple_block_forward.2} parent=11 // pred_fallthru
        _
    $region12: #{simple_block_forward.2} parent=5 // pred_fallthru
      _
    %p279 = scmp.lt.s32.totalorder %s16, 2
    // Predicated region
    $region37: #{simple_block_forward.2} parent=5 // pred_check
      %p280 = pneg %p279
    $region38: #{simple_block_forward.2} parent=5 // pred_check_branch
      %282 = sbr.rel (%p280) target = $region40
    $region39: #{simple_block_forward.2} parent=5 // pred_region
      // Predicated region
      $region41: #{simple_block_forward.2} parent=39 // pred_check
        %p283 = pneg %p36
      $region42: #{simple_block_forward.2} parent=39 // pred_check_branch
        %285 = sbr.rel (%p283) target = $region44
      $region43: #{simple_block_forward.2} parent=39 // pred_region
        %s286 = smul.u32 32, %s16
        %p287 = scmp.lt.s32.totalorder %s286, 63
        %s288 = scalar_select %p287, %s286, 63
        %s289 = smul.addr %s288, 8
        %s290 = scalar_lea.vmem %s0, %s289
        %s291 = smul.u32 32, %s16
      $region44: #{simple_block_forward.2} parent=39 // pred_fallthru
        _
      // Predicated region
      $region45: #{simple_block_forward.2} parent=39 // pred_check
        %p292 = pneg %p62
      $region46: #{simple_block_forward.2} parent=39 // pred_check_branch
        %294 = sbr.rel (%p292) target = $region48
      $region47: #{simple_block_forward.2} parent=39 // pred_region
        %s295 = smul.u32 32, %s16
        %p296 = scmp.lt.s32.totalorder %s295, 63
        %s297 = scalar_select %p296, %s295, 63
        %s298 = smul.addr %s297, 8
        %s299 = scalar_lea.vmem %s1, %s298
        %s300 = smul.u32 32, %s16
      $region48: #{simple_block_forward.2} parent=39 // pred_fallthru
        _
    $region40: #{simple_block_forward.2} parent=5 // pred_fallthru
      _
    %p301 = scmp.le.s32.totalorder 1, %s16
    %p302 = scmp.lt.s32.totalorder %s16, 3
    %p303 = pnand %p301, %p302
    %p304 = pneg %p303
    // Predicated region
    $region49: #{simple_block_forward.2} parent=5 // pred_check
      _
    $region50: #{simple_block_forward.2} parent=5 // pred_check_branch
      %306 = sbr.rel (%p303) target = $region52
    $region51: #{simple_block_forward.2} parent=5 // pred_region
      %s307 = ssub.s32 %s16, 1
      %s308 = smul.u32 32, %s21
      %p309 = scmp.lt.s32.totalorder %s308, 63
      %s310 = scalar_select %p309, %s308, 63
      %s311 = smul.addr %s310, 8
      %s312 = scalar_lea.vmem %s0, %s311
      %p313 = pneg %p42
      %p314 = pneg %p39
      %s315 = smul.u32 32, %s21
      %p316 = scmp.lt.s32.totalorder %s315, 63
      %s317 = scalar_select %p316, %s315, 63
      %s318 = smul.addr %s317, 8
      %s319 = scalar_lea.vmem %s1, %s318
      %p320 = pneg %p68
      %p321 = pneg %p65
      %p322 = pneg %p89
      %p323 = pneg %p86
      %p324 = pneg %p110
      %p325 = pneg %p107
      %p326 = pneg %p131
      %p327 = pneg %p128
      %p328 = pneg %p152
      %p329 = pneg %p149
      %p330 = pneg %p173
      %p331 = pneg %p170
      %p332 = pneg %p194
      %p333 = pneg %p191
      %p334 = pneg %p220
      %p335 = pneg %p217
      %s336 = smul.u32 32, %s21
      %p337 = scmp.lt.s32.totalorder %s336, 63
      %s338 = scalar_select %p337, %s336, 63
      %s339 = smul.addr %s338, 8
      %s340 = scalar_lea.vmem %s8, %s339
      %p341 = pneg %p246
      %p342 = pneg %p243
      %p343 = scmp.lt.s32.totalorder %s21, 1
      %s344 = scalar_select %p343, %s21, 1
      %s345 = smul.addr %s344, 8
      %s346 = scalar_lea.vmem %s9, %s345
      %s347 = smul.u32 32, %s21
      %p348 = scmp.lt.s32.totalorder %s347, 63
      %s349 = scalar_select %p348, %s347, 63
      %s350 = smul.addr %s349, 8
      %s351 = scalar_lea.vmem %s0, %s350
      %s352 = smul.u32 32, %s21
      %s353 = smul.u32 32, %s21
      %p354 = scmp.lt.s32.totalorder %s353, 63
      %s355 = scalar_select %p354, %s353, 63
      %s356 = smul.addr %s355, 8
      %s357 = scalar_lea.vmem %s1, %s356
      %s358 = smul.u32 32, %s21
      %s359 = smul.u32 32, %s21
      %p360 = scmp.lt.s32.totalorder %s359, 63
      %s361 = scalar_select %p360, %s359, 63
      %s362 = smul.addr %s361, 8
      %s363 = scalar_lea.vmem %s8, %s362
      %s364 = smul.u32 32, %s21
      %p365 = scmp.lt.s32.totalorder %s21, 1
      %s366 = scalar_select %p365, %s21, 1
      %s367 = smul.addr %s366, 8
      %s368 = scalar_lea.vmem %s9, %s367
      %v370 = vld [vmem:[%s351] sm:$0xff]
      %v371 = vld [vmem:[%s351 + $0x8] sm:$0xff]
      %v372 = vld [vmem:[%s351 + $0x10] sm:$0xff]
      %v373 = vld [vmem:[%s351 + $0x18] sm:$0xff]
      %v374 = vld [vmem:[%s351 + $0x20] sm:$0xff]
      %v375 = vld [vmem:[%s351 + $0x28] sm:$0xff]
      %v376 = vld [vmem:[%s351 + $0x30] sm:$0xff]
      %v377 = vld [vmem:[%s351 + $0x38] sm:$0xff]
      %v378 = vld [vmem:[%s351 + $0x40] sm:$0xff]
      %v379 = vld [vmem:[%s351 + $0x48] sm:$0xff]
      %v380 = vld [vmem:[%s351 + $0x50] sm:$0xff]
      %v381 = vld [vmem:[%s351 + $0x58] sm:$0xff]
      %v382 = vld [vmem:[%s351 + $0x60] sm:$0xff]
      %v383 = vld [vmem:[%s351 + $0x68] sm:$0xff]
      %v384 = vld [vmem:[%s351 + $0x70] sm:$0xff]
      %v385 = vld [vmem:[%s351 + $0x78] sm:$0xff]
      %v386 = vld [vmem:[%s351 + $0x80] sm:$0xff]
      %v387 = vld [vmem:[%s351 + $0x88] sm:$0xff]
      %v388 = vld [vmem:[%s351 + $0x90] sm:$0xff]
      %v389 = vld [vmem:[%s351 + $0x98] sm:$0xff]
      %v390 = vld [vmem:[%s351 + $0xa0] sm:$0xff]
      %v391 = vld [vmem:[%s351 + $0xa8] sm:$0xff]
      %v392 = vld [vmem:[%s351 + $0xb0] sm:$0xff]
      %v393 = vld [vmem:[%s351 + $0xb8] sm:$0xff]
      %v394 = vld [vmem:[%s351 + $0xc0] sm:$0xff]
      %v395 = vld [vmem:[%s351 + $0xc8] sm:$0xff]
      %v396 = vld [vmem:[%s351 + $0xd0] sm:$0xff]
      %v397 = vld [vmem:[%s351 + $0xd8] sm:$0xff]
      %v398 = vld [vmem:[%s351 + $0xe0] sm:$0xff]
      %v399 = vld [vmem:[%s351 + $0xe8] sm:$0xff]
      %v400 = vld [vmem:[%s351 + $0xf0] sm:$0xff]
      %v401 = vld [vmem:[%s351 + $0xf8] sm:$0xff]
      %v402 = vld [vmem:[%s357] sm:$0xff]
      %v403 = vld [vmem:[%s357 + $0x8] sm:$0xff]
      %v404 = vld [vmem:[%s357 + $0x10] sm:$0xff]
      %v405 = vld [vmem:[%s357 + $0x18] sm:$0xff]
      %v406 = vld [vmem:[%s357 + $0x20] sm:$0xff]
      %v407 = vld [vmem:[%s357 + $0x28] sm:$0xff]
      %v408 = vld [vmem:[%s357 + $0x30] sm:$0xff]
      %v409 = vld [vmem:[%s357 + $0x38] sm:$0xff]
      %v410 = vld [vmem:[%s357 + $0x40] sm:$0xff]
      %v411 = vld [vmem:[%s357 + $0x48] sm:$0xff]
      %v412 = vld [vmem:[%s357 + $0x50] sm:$0xff]
      %v413 = vld [vmem:[%s357 + $0x58] sm:$0xff]
      %v414 = vld [vmem:[%s357 + $0x60] sm:$0xff]
      %v415 = vld [vmem:[%s357 + $0x68] sm:$0xff]
      %v416 = vld [vmem:[%s357 + $0x70] sm:$0xff]
      %v417 = vld [vmem:[%s357 + $0x78] sm:$0xff]
      %v418 = vld [vmem:[%s357 + $0x80] sm:$0xff]
      %v419 = vld [vmem:[%s357 + $0x88] sm:$0xff]
      %v420 = vld [vmem:[%s357 + $0x90] sm:$0xff]
      %v421 = vld [vmem:[%s357 + $0x98] sm:$0xff]
      %v422 = vld [vmem:[%s357 + $0xa0] sm:$0xff]
      %v423 = vld [vmem:[%s357 + $0xa8] sm:$0xff]
      %v424 = vld [vmem:[%s357 + $0xb0] sm:$0xff]
      %v425 = vld [vmem:[%s357 + $0xb8] sm:$0xff]
      %v426 = vld [vmem:[%s357 + $0xc0] sm:$0xff]
      %v427 = vld [vmem:[%s357 + $0xc8] sm:$0xff]
      %v428 = vld [vmem:[%s357 + $0xd0] sm:$0xff]
      %v429 = vld [vmem:[%s357 + $0xd8] sm:$0xff]
      %v430 = vld [vmem:[%s357 + $0xe0] sm:$0xff]
      %v431 = vld [vmem:[%s357 + $0xe8] sm:$0xff]
      %v432 = vld [vmem:[%s357 + $0xf0] sm:$0xff]
      %v433 = vld [vmem:[%s357 + $0xf8] sm:$0xff]
      %v434 = vld [vmem:[%s2] sm:$0xff]
      %v435 = vld [vmem:[%s2 + $0x8] sm:$0xff]
      %v436 = vld [vmem:[%s2 + $0x10] sm:$0xff]
      %v437 = vmul.f32 %v370, %v370
      %v438 = vmul.f32 %v371, %v371
      %v439 = vmul.f32 %v372, %v372
      %v440 = vmul.f32 %v373, %v373
      %v441 = vmul.f32 %v374, %v374
      %v442 = vmul.f32 %v375, %v375
      %v443 = vmul.f32 %v376, %v376
      %v444 = vmul.f32 %v377, %v377
      %v445 = vmul.f32 %v378, %v378
      %v446 = vmul.f32 %v379, %v379
      %v447 = vmul.f32 %v380, %v380
      %v448 = vmul.f32 %v381, %v381
      %v449 = vmul.f32 %v382, %v382
      %v450 = vmul.f32 %v383, %v383
      %v451 = vmul.f32 %v384, %v384
      %v452 = vmul.f32 %v385, %v385
      %v453 = vmul.f32 %v386, %v386
      %v454 = vmul.f32 %v387, %v387
      %v455 = vmul.f32 %v388, %v388
      %v456 = vmul.f32 %v389, %v389
      %v457 = vmul.f32 %v390, %v390
      %v458 = vmul.f32 %v391, %v391
      %v459 = vmul.f32 %v392, %v392
      %v460 = vmul.f32 %v393, %v393
      %v461 = vmul.f32 %v394, %v394
      %v462 = vmul.f32 %v395, %v395
      %v463 = vmul.f32 %v396, %v396
      %v464 = vmul.f32 %v397, %v397
      %v465 = vmul.f32 %v398, %v398
      %v466 = vmul.f32 %v399, %v399
      %v467 = vmul.f32 %v400, %v400
      %v468 = vmul.f32 %v401, %v401
      %v469 = vld [vmem:[%s3] sm:$0xff]
      %v470 = vld [vmem:[%s3 + $0x8] sm:$0xff]
      %v471 = vld [vmem:[%s3 + $0x10] sm:$0xff]
      %vm472 = vcmask 195584
      %v474 = vsel %vm472, %v437, 0
      %v477 = vsel %vm472, %v438, 0
      %v480 = vsel %vm472, %v439, 0
      %v483 = vsel %vm472, %v440, 0
      %v486 = vsel %vm472, %v441, 0
      %v489 = vsel %vm472, %v442, 0
      %v492 = vsel %vm472, %v443, 0
      %v495 = vsel %vm472, %v444, 0
      %v498 = vsel %vm472, %v445, 0
      %v501 = vsel %vm472, %v446, 0
      %v504 = vsel %vm472, %v447, 0
      %v507 = vsel %vm472, %v448, 0
      %v510 = vsel %vm472, %v449, 0
      %v513 = vsel %vm472, %v450, 0
      %v516 = vsel %vm472, %v451, 0
      %v519 = vsel %vm472, %v452, 0
      %v522 = vsel %vm472, %v453, 0
      %v525 = vsel %vm472, %v454, 0
      %v528 = vsel %vm472, %v455, 0
      %v531 = vsel %vm472, %v456, 0
      %v534 = vsel %vm472, %v457, 0
      %v537 = vsel %vm472, %v458, 0
      %v540 = vsel %vm472, %v459, 0
      %v543 = vsel %vm472, %v460, 0
      %v546 = vsel %vm472, %v461, 0
      %v549 = vsel %vm472, %v462, 0
      %v552 = vsel %vm472, %v463, 0
      %v555 = vsel %vm472, %v464, 0
      %v558 = vsel %vm472, %v465, 0
      %v561 = vsel %vm472, %v466, 0
      %v564 = vsel %vm472, %v467, 0
      %v567 = vsel %vm472, %v468, 0
      %569 = vmatprep.subr.mxu0 0.0
      %570 = vmatpush1.msra.mxu0 0.0
      %571 = vmatprep.subr.mxu0 0.0
      %572 = vmatpush1.msra.mxu0 0.0
      %573 = vmatprep.subr.mxu0 0.0
      %574 = vmatpush1.msra.mxu0 0.0
      %575 = vmatprep.subr.mxu0 0.0
      %576 = vmatpush1.msra.mxu0 0.0
      %577 = vmatprep.subr.mxu0 0.0
      %578 = vmatpush1.msra.mxu0 0.0
      %579 = vmatprep.subr.mxu0 0.0
      %580 = vmatpush1.msra.mxu0 0.0
      %581 = vmatprep.subr.mxu0 0.0
      %582 = vmatpush1.msra.mxu0 0.0
      %583 = vmatprep.subr.mxu0 0.0
      %584 = vmatpush1.msra.mxu0 0.0
      %585 = vmatprep.subr.mxu0 0.0
      %586 = vmatpush1.msra.mxu0 0.0
      %587 = vmatprep.subr.mxu0 0.0
      %588 = vmatpush1.msra.mxu0 0.0
      %589 = vmatprep.subr.mxu0 0.0
      %590 = vmatpush1.msra.mxu0 0.0
      %591 = vmatprep.subr.mxu0 0.0
      %592 = vmatpush1.msra.mxu0 0.0
      %593 = vmatprep.subr.mxu0 0.0
      %594 = vmatpush1.msra.mxu0 0.0
      %595 = vmatprep.subr.mxu0 0.0
      %596 = vmatpush1.msra.mxu0 %v471
      %597 = vmatprep.subr.mxu0 0.0
      %598 = vmatpush1.msra.mxu0 %v470
      %599 = vmatprep.subr.mxu0 0.0
      %600 = vmatpush1.msra.mxu0 %v469
      %601 = vmatprep.subr.mxu0 0.0
      %602 = vmatpush2.msra.mxu0 0.0
      %603 = vmatprep.subr.mxu0 0.0
      %604 = vmatpush2.msra.mxu0 0.0
      %605 = vmatprep.subr.mxu0 0.0
      %606 = vmatpush2.msra.mxu0 0.0
      %607 = vmatprep.subr.mxu0 0.0
      %608 = vmatpush2.msra.mxu0 0.0
      %609 = vmatprep.subr.mxu0 0.0
      %610 = vmatpush2.msra.mxu0 0.0
      %611 = vmatprep.subr.mxu0 0.0
      %612 = vmatpush2.msra.mxu0 0.0
      %613 = vmatprep.subr.mxu0 0.0
      %614 = vmatpush2.msra.mxu0 0.0
      %615 = vmatprep.subr.mxu0 0.0
      %616 = vmatpush2.msra.mxu0 0.0
      %617 = vmatprep.subr.mxu0 0.0
      %618 = vmatpush2.msra.mxu0 0.0
      %619 = vmatprep.subr.mxu0 0.0
      %620 = vmatpush2.msra.mxu0 0.0
      %621 = vmatprep.subr.mxu0 0.0
      %622 = vmatpush2.msra.mxu0 0.0
      %623 = vmatprep.subr.mxu0 0.0
      %624 = vmatpush2.msra.mxu0 0.0
      %625 = vmatprep.subr.mxu0 0.0
      %626 = vmatpush2.msra.mxu0 0.0
      %627 = vmatprep.subr.mxu0 0.0
      %628 = vmatpush2.msra.mxu0 0.0
      %629 = vmatprep.subr.mxu0 0.0
      %630 = vmatpush2.msra.mxu0 0.0
      %631 = vmatprep.subr.mxu0 0.0
      %632 = vmatpush2.msra.mxu0 0.0
      %633 = vmatprep.mubr.f32.mxu0 0.0
      %634 = vmatmul.mubr.f32.gmra.mxu0 %v474
      %v635 = vpop.f32.mrf.mxu0
      %v636 = vadd.f32 0.0, %v635
      %v637 = vpop.f32.mrf.mxu0
      %638 = vmatprep.mubr.f32.mxu0 0.0
      %639 = vmatmul.mubr.f32.gmra.mxu0 %v477
      %v640 = vpop.f32.mrf.mxu0
      %v641 = vadd.f32 0.0, %v640
      %v642 = vpop.f32.mrf.mxu0
      %643 = vmatprep.mubr.f32.mxu0 0.0
      %644 = vmatmul.mubr.f32.gmra.mxu0 %v480
      %v645 = vpop.f32.mrf.mxu0
      %v646 = vadd.f32 0.0, %v645
      %v647 = vpop.f32.mrf.mxu0
      %648 = vmatprep.mubr.f32.mxu0 0.0
      %649 = vmatmul.mubr.f32.gmra.mxu0 %v483
      %v650 = vpop.f32.mrf.mxu0
      %v651 = vadd.f32 0.0, %v650
      %v652 = vpop.f32.mrf.mxu0
      %653 = vmatprep.mubr.f32.mxu0 0.0
      %654 = vmatmul.mubr.f32.gmra.mxu0 %v486
      %v655 = vpop.f32.mrf.mxu0
      %v656 = vadd.f32 0.0, %v655
      %v657 = vpop.f32.mrf.mxu0
      %658 = vmatprep.mubr.f32.mxu0 0.0
      %659 = vmatmul.mubr.f32.gmra.mxu0 %v489
      %v660 = vpop.f32.mrf.mxu0
      %v661 = vadd.f32 0.0, %v660
      %v662 = vpop.f32.mrf.mxu0
      %663 = vmatprep.mubr.f32.mxu0 0.0
      %664 = vmatmul.mubr.f32.gmra.mxu0 %v492
      %v665 = vpop.f32.mrf.mxu0
      %v666 = vadd.f32 0.0, %v665
      %v667 = vpop.f32.mrf.mxu0
      %668 = vmatprep.mubr.f32.mxu0 0.0
      %669 = vmatmul.mubr.f32.gmra.mxu0 %v495
      %v670 = vpop.f32.mrf.mxu0
      %v671 = vadd.f32 0.0, %v670
      %v672 = vpop.f32.mrf.mxu0
      %673 = vmatprep.mubr.f32.mxu0 0.0
      %674 = vmatmul.mubr.f32.gmra.mxu0 %v498
      %v675 = vpop.f32.mrf.mxu0
      %v676 = vadd.f32 0.0, %v675
      %v677 = vpop.f32.mrf.mxu0
      %678 = vmatprep.mubr.f32.mxu0 0.0
      %679 = vmatmul.mubr.f32.gmra.mxu0 %v501
      %v680 = vpop.f32.mrf.mxu0
      %v681 = vadd.f32 0.0, %v680
      %v682 = vpop.f32.mrf.mxu0
      %683 = vmatprep.mubr.f32.mxu0 0.0
      %684 = vmatmul.mubr.f32.gmra.mxu0 %v504
      %v685 = vpop.f32.mrf.mxu0
      %v686 = vadd.f32 0.0, %v685
      %v687 = vpop.f32.mrf.mxu0
      %688 = vmatprep.mubr.f32.mxu0 0.0
      %689 = vmatmul.mubr.f32.gmra.mxu0 %v507
      %v690 = vpop.f32.mrf.mxu0
      %v691 = vadd.f32 0.0, %v690
      %v692 = vpop.f32.mrf.mxu0
      %693 = vmatprep.mubr.f32.mxu0 0.0
      %694 = vmatmul.mubr.f32.gmra.mxu0 %v510
      %v695 = vpop.f32.mrf.mxu0
      %v696 = vadd.f32 0.0, %v695
      %v697 = vpop.f32.mrf.mxu0
      %698 = vmatprep.mubr.f32.mxu0 0.0
      %699 = vmatmul.mubr.f32.gmra.mxu0 %v513
      %v700 = vpop.f32.mrf.mxu0
      %v701 = vadd.f32 0.0, %v700
      %v702 = vpop.f32.mrf.mxu0
      %703 = vmatprep.mubr.f32.mxu0 0.0
      %704 = vmatmul.mubr.f32.gmra.mxu0 %v516
      %v705 = vpop.f32.mrf.mxu0
      %v706 = vadd.f32 0.0, %v705
      %v707 = vpop.f32.mrf.mxu0
      %708 = vmatprep.mubr.f32.mxu0 0.0
      %709 = vmatmul.mubr.f32.gmra.mxu0 %v519
      %v710 = vpop.f32.mrf.mxu0
      %v711 = vadd.f32 0.0, %v710
      %v712 = vpop.f32.mrf.mxu0
      %713 = vmatprep.mubr.f32.mxu0 0.0
      %714 = vmatmul.mubr.f32.gmra.mxu0 %v522
      %v715 = vpop.f32.mrf.mxu0
      %v716 = vadd.f32 0.0, %v715
      %v717 = vpop.f32.mrf.mxu0
      %718 = vmatprep.mubr.f32.mxu0 0.0
      %719 = vmatmul.mubr.f32.gmra.mxu0 %v525
      %v720 = vpop.f32.mrf.mxu0
      %v721 = vadd.f32 0.0, %v720
      %v722 = vpop.f32.mrf.mxu0
      %723 = vmatprep.mubr.f32.mxu0 0.0
      %724 = vmatmul.mubr.f32.gmra.mxu0 %v528
      %v725 = vpop.f32.mrf.mxu0
      %v726 = vadd.f32 0.0, %v725
      %v727 = vpop.f32.mrf.mxu0
      %728 = vmatprep.mubr.f32.mxu0 0.0
      %729 = vmatmul.mubr.f32.gmra.mxu0 %v531
      %v730 = vpop.f32.mrf.mxu0
      %v731 = vadd.f32 0.0, %v730
      %v732 = vpop.f32.mrf.mxu0
      %733 = vmatprep.mubr.f32.mxu0 0.0
      %734 = vmatmul.mubr.f32.gmra.mxu0 %v534
      %v735 = vpop.f32.mrf.mxu0
      %v736 = vadd.f32 0.0, %v735
      %v737 = vpop.f32.mrf.mxu0
      %738 = vmatprep.mubr.f32.mxu0 0.0
      %739 = vmatmul.mubr.f32.gmra.mxu0 %v537
      %v740 = vpop.f32.mrf.mxu0
      %v741 = vadd.f32 0.0, %v740
      %v742 = vpop.f32.mrf.mxu0
      %743 = vmatprep.mubr.f32.mxu0 0.0
      %744 = vmatmul.mubr.f32.gmra.mxu0 %v540
      %v745 = vpop.f32.mrf.mxu0
      %v746 = vadd.f32 0.0, %v745
      %v747 = vpop.f32.mrf.mxu0
      %748 = vmatprep.mubr.f32.mxu0 0.0
      %749 = vmatmul.mubr.f32.gmra.mxu0 %v543
      %v750 = vpop.f32.mrf.mxu0
      %v751 = vadd.f32 0.0, %v750
      %v752 = vpop.f32.mrf.mxu0
      %753 = vmatprep.mubr.f32.mxu0 0.0
      %754 = vmatmul.mubr.f32.gmra.mxu0 %v546
      %v755 = vpop.f32.mrf.mxu0
      %v756 = vadd.f32 0.0, %v755
      %v757 = vpop.f32.mrf.mxu0
      %758 = vmatprep.mubr.f32.mxu0 0.0
      %759 = vmatmul.mubr.f32.gmra.mxu0 %v549
      %v760 = vpop.f32.mrf.mxu0
      %v761 = vadd.f32 0.0, %v760
      %v762 = vpop.f32.mrf.mxu0
      %763 = vmatprep.mubr.f32.mxu0 0.0
      %764 = vmatmul.mubr.f32.gmra.mxu0 %v552
      %v765 = vpop.f32.mrf.mxu0
      %v766 = vadd.f32 0.0, %v765
      %v767 = vpop.f32.mrf.mxu0
      %768 = vmatprep.mubr.f32.mxu0 0.0
      %769 = vmatmul.mubr.f32.gmra.mxu0 %v555
      %v770 = vpop.f32.mrf.mxu0
      %v771 = vadd.f32 0.0, %v770
      %v772 = vpop.f32.mrf.mxu0
      %773 = vmatprep.mubr.f32.mxu0 0.0
      %774 = vmatmul.mubr.f32.gmra.mxu0 %v558
      %v775 = vpop.f32.mrf.mxu0
      %v776 = vadd.f32 0.0, %v775
      %v777 = vpop.f32.mrf.mxu0
      %778 = vmatprep.mubr.f32.mxu0 0.0
      %779 = vmatmul.mubr.f32.gmra.mxu0 %v561
      %v780 = vpop.f32.mrf.mxu0
      %v781 = vadd.f32 0.0, %v780
      %v782 = vpop.f32.mrf.mxu0
      %783 = vmatprep.mubr.f32.mxu0 0.0
      %784 = vmatmul.mubr.f32.gmra.mxu0 %v564
      %v785 = vpop.f32.mrf.mxu0
      %v786 = vadd.f32 0.0, %v785
      %v787 = vpop.f32.mrf.mxu0
      %788 = vmatprep.mubr.f32.mxu0 0.0
      %789 = vmatmul.mubr.f32.gmra.mxu0 %v567
      %v790 = vpop.f32.mrf.mxu0
      %v791 = vadd.f32 0.0, %v790
      %v792 = vpop.f32.mrf.mxu0
      %793 = vdwg.mxu0
      %v795 = vsel %vm472, %v370, 0
      %v798 = vsel %vm472, %v371, 0
      %v801 = vsel %vm472, %v372, 0
      %v804 = vsel %vm472, %v373, 0
      %v807 = vsel %vm472, %v374, 0
      %v810 = vsel %vm472, %v375, 0
      %v813 = vsel %vm472, %v376, 0
      %v816 = vsel %vm472, %v377, 0
      %v819 = vsel %vm472, %v378, 0
      %v822 = vsel %vm472, %v379, 0
      %v825 = vsel %vm472, %v380, 0
      %v828 = vsel %vm472, %v381, 0
      %v831 = vsel %vm472, %v382, 0
      %v834 = vsel %vm472, %v383, 0
      %v837 = vsel %vm472, %v384, 0
      %v840 = vsel %vm472, %v385, 0
      %v843 = vsel %vm472, %v386, 0
      %v846 = vsel %vm472, %v387, 0
      %v849 = vsel %vm472, %v388, 0
      %v852 = vsel %vm472, %v389, 0
      %v855 = vsel %vm472, %v390, 0
      %v858 = vsel %vm472, %v391, 0
      %v861 = vsel %vm472, %v392, 0
      %v864 = vsel %vm472, %v393, 0
      %v867 = vsel %vm472, %v394, 0
      %v870 = vsel %vm472, %v395, 0
      %v873 = vsel %vm472, %v396, 0
      %v876 = vsel %vm472, %v397, 0
      %v879 = vsel %vm472, %v398, 0
      %v882 = vsel %vm472, %v399, 0
      %v885 = vsel %vm472, %v400, 0
      %v888 = vsel %vm472, %v401, 0
      %890 = vmatprep.subr.mxu0 0.0
      %891 = vmatpush1.msra.mxu0 0.0
      %892 = vmatprep.subr.mxu0 0.0
      %893 = vmatpush1.msra.mxu0 0.0
      %894 = vmatprep.subr.mxu0 0.0
      %895 = vmatpush1.msra.mxu0 0.0
      %896 = vmatprep.subr.mxu0 0.0
      %897 = vmatpush1.msra.mxu0 0.0
      %898 = vmatprep.subr.mxu0 0.0
      %899 = vmatpush1.msra.mxu0 0.0
      %900 = vmatprep.subr.mxu0 0.0
      %901 = vmatpush1.msra.mxu0 0.0
      %902 = vmatprep.subr.mxu0 0.0
      %903 = vmatpush1.msra.mxu0 0.0
      %904 = vmatprep.subr.mxu0 0.0
      %905 = vmatpush1.msra.mxu0 0.0
      %906 = vmatprep.subr.mxu0 0.0
      %907 = vmatpush1.msra.mxu0 0.0
      %908 = vmatprep.subr.mxu0 0.0
      %909 = vmatpush1.msra.mxu0 0.0
      %910 = vmatprep.subr.mxu0 0.0
      %911 = vmatpush1.msra.mxu0 0.0
      %912 = vmatprep.subr.mxu0 0.0
      %913 = vmatpush1.msra.mxu0 0.0
      %914 = vmatprep.subr.mxu0 0.0
      %915 = vmatpush1.msra.mxu0 0.0
      %916 = vmatprep.subr.mxu0 0.0
      %917 = vmatpush1.msra.mxu0 %v436
      %918 = vmatprep.subr.mxu0 0.0
      %919 = vmatpush1.msra.mxu0 %v435
      %920 = vmatprep.subr.mxu0 0.0
      %921 = vmatpush1.msra.mxu0 %v434
      %922 = vmatprep.subr.mxu0 0.0
      %923 = vmatpush2.msra.mxu0 0.0
      %924 = vmatprep.subr.mxu0 0.0
      %925 = vmatpush2.msra.mxu0 0.0
      %926 = vmatprep.subr.mxu0 0.0
      %927 = vmatpush2.msra.mxu0 0.0
      %928 = vmatprep.subr.mxu0 0.0
      %929 = vmatpush2.msra.mxu0 0.0
      %930 = vmatprep.subr.mxu0 0.0
      %931 = vmatpush2.msra.mxu0 0.0
      %932 = vmatprep.subr.mxu0 0.0
      %933 = vmatpush2.msra.mxu0 0.0
      %934 = vmatprep.subr.mxu0 0.0
      %935 = vmatpush2.msra.mxu0 0.0
      %936 = vmatprep.subr.mxu0 0.0
      %937 = vmatpush2.msra.mxu0 0.0
      %938 = vmatprep.subr.mxu0 0.0
      %939 = vmatpush2.msra.mxu0 0.0
      %940 = vmatprep.subr.mxu0 0.0
      %941 = vmatpush2.msra.mxu0 0.0
      %942 = vmatprep.subr.mxu0 0.0
      %943 = vmatpush2.msra.mxu0 0.0
      %944 = vmatprep.subr.mxu0 0.0
      %945 = vmatpush2.msra.mxu0 0.0
      %946 = vmatprep.subr.mxu0 0.0
      %947 = vmatpush2.msra.mxu0 0.0
      %948 = vmatprep.subr.mxu0 0.0
      %949 = vmatpush2.msra.mxu0 0.0
      %950 = vmatprep.subr.mxu0 0.0
      %951 = vmatpush2.msra.mxu0 0.0
      %952 = vmatprep.subr.mxu0 0.0
      %953 = vmatpush2.msra.mxu0 0.0
      %954 = vmatprep.mubr.f32.mxu0 0.0
      %955 = vmatmul.mubr.f32.gmra.mxu0 %v795
      %v956 = vpop.f32.mrf.mxu0
      %v957 = vadd.f32 %v636, %v956
      %v958 = vpop.f32.mrf.mxu0
      %959 = vmatprep.mubr.f32.mxu0 0.0
      %960 = vmatmul.mubr.f32.gmra.mxu0 %v798
      %v961 = vpop.f32.mrf.mxu0
      %v962 = vadd.f32 %v641, %v961
      %v963 = vpop.f32.mrf.mxu0
      %964 = vmatprep.mubr.f32.mxu0 0.0
      %965 = vmatmul.mubr.f32.gmra.mxu0 %v801
      %v966 = vpop.f32.mrf.mxu0
      %v967 = vadd.f32 %v646, %v966
      %v968 = vpop.f32.mrf.mxu0
      %969 = vmatprep.mubr.f32.mxu0 0.0
      %970 = vmatmul.mubr.f32.gmra.mxu0 %v804
      %v971 = vpop.f32.mrf.mxu0
      %v972 = vadd.f32 %v651, %v971
      %v973 = vpop.f32.mrf.mxu0
      %974 = vmatprep.mubr.f32.mxu0 0.0
      %975 = vmatmul.mubr.f32.gmra.mxu0 %v807
      %v976 = vpop.f32.mrf.mxu0
      %v977 = vadd.f32 %v656, %v976
      %v978 = vpop.f32.mrf.mxu0
      %979 = vmatprep.mubr.f32.mxu0 0.0
      %980 = vmatmul.mubr.f32.gmra.mxu0 %v810
      %v981 = vpop.f32.mrf.mxu0
      %v982 = vadd.f32 %v661, %v981
      %v983 = vpop.f32.mrf.mxu0
      %984 = vmatprep.mubr.f32.mxu0 0.0
      %985 = vmatmul.mubr.f32.gmra.mxu0 %v813
      %v986 = vpop.f32.mrf.mxu0
      %v987 = vadd.f32 %v666, %v986
      %v988 = vpop.f32.mrf.mxu0
      %989 = vmatprep.mubr.f32.mxu0 0.0
      %990 = vmatmul.mubr.f32.gmra.mxu0 %v816
      %v991 = vpop.f32.mrf.mxu0
      %v992 = vadd.f32 %v671, %v991
      %v993 = vpop.f32.mrf.mxu0
      %994 = vmatprep.mubr.f32.mxu0 0.0
      %995 = vmatmul.mubr.f32.gmra.mxu0 %v819
      %v996 = vpop.f32.mrf.mxu0
      %v997 = vadd.f32 %v676, %v996
      %v998 = vpop.f32.mrf.mxu0
      %999 = vmatprep.mubr.f32.mxu0 0.0
      %1000 = vmatmul.mubr.f32.gmra.mxu0 %v822
      %v1001 = vpop.f32.mrf.mxu0
      %v1002 = vadd.f32 %v681, %v1001
      %v1003 = vpop.f32.mrf.mxu0
      %1004 = vmatprep.mubr.f32.mxu0 0.0
      %1005 = vmatmul.mubr.f32.gmra.mxu0 %v825
      %v1006 = vpop.f32.mrf.mxu0
      %v1007 = vadd.f32 %v686, %v1006
      %v1008 = vpop.f32.mrf.mxu0
      %1009 = vmatprep.mubr.f32.mxu0 0.0
      %1010 = vmatmul.mubr.f32.gmra.mxu0 %v828
      %v1011 = vpop.f32.mrf.mxu0
      %v1012 = vadd.f32 %v691, %v1011
      %v1013 = vpop.f32.mrf.mxu0
      %1014 = vmatprep.mubr.f32.mxu0 0.0
      %1015 = vmatmul.mubr.f32.gmra.mxu0 %v831
      %v1016 = vpop.f32.mrf.mxu0
      %v1017 = vadd.f32 %v696, %v1016
      %v1018 = vpop.f32.mrf.mxu0
      %1019 = vmatprep.mubr.f32.mxu0 0.0
      %1020 = vmatmul.mubr.f32.gmra.mxu0 %v834
      %v1021 = vpop.f32.mrf.mxu0
      %v1022 = vadd.f32 %v701, %v1021
      %v1023 = vpop.f32.mrf.mxu0
      %1024 = vmatprep.mubr.f32.mxu0 0.0
      %1025 = vmatmul.mubr.f32.gmra.mxu0 %v837
      %v1026 = vpop.f32.mrf.mxu0
      %v1027 = vadd.f32 %v706, %v1026
      %v1028 = vpop.f32.mrf.mxu0
      %1029 = vmatprep.mubr.f32.mxu0 0.0
      %1030 = vmatmul.mubr.f32.gmra.mxu0 %v840
      %v1031 = vpop.f32.mrf.mxu0
      %v1032 = vadd.f32 %v711, %v1031
      %v1033 = vpop.f32.mrf.mxu0
      %1034 = vmatprep.mubr.f32.mxu0 0.0
      %1035 = vmatmul.mubr.f32.gmra.mxu0 %v843
      %v1036 = vpop.f32.mrf.mxu0
      %v1037 = vadd.f32 %v716, %v1036
      %v1038 = vpop.f32.mrf.mxu0
      %1039 = vmatprep.mubr.f32.mxu0 0.0
      %1040 = vmatmul.mubr.f32.gmra.mxu0 %v846
      %v1041 = vpop.f32.mrf.mxu0
      %v1042 = vadd.f32 %v721, %v1041
      %v1043 = vpop.f32.mrf.mxu0
      %1044 = vmatprep.mubr.f32.mxu0 0.0
      %1045 = vmatmul.mubr.f32.gmra.mxu0 %v849
      %v1046 = vpop.f32.mrf.mxu0
      %v1047 = vadd.f32 %v726, %v1046
      %v1048 = vpop.f32.mrf.mxu0
      %1049 = vmatprep.mubr.f32.mxu0 0.0
      %1050 = vmatmul.mubr.f32.gmra.mxu0 %v852
      %v1051 = vpop.f32.mrf.mxu0
      %v1052 = vadd.f32 %v731, %v1051
      %v1053 = vpop.f32.mrf.mxu0
      %1054 = vmatprep.mubr.f32.mxu0 0.0
      %1055 = vmatmul.mubr.f32.gmra.mxu0 %v855
      %v1056 = vpop.f32.mrf.mxu0
      %v1057 = vadd.f32 %v736, %v1056
      %v1058 = vpop.f32.mrf.mxu0
      %1059 = vmatprep.mubr.f32.mxu0 0.0
      %1060 = vmatmul.mubr.f32.gmra.mxu0 %v858
      %v1061 = vpop.f32.mrf.mxu0
      %v1062 = vadd.f32 %v741, %v1061
      %v1063 = vpop.f32.mrf.mxu0
      %1064 = vmatprep.mubr.f32.mxu0 0.0
      %1065 = vmatmul.mubr.f32.gmra.mxu0 %v861
      %v1066 = vpop.f32.mrf.mxu0
      %v1067 = vadd.f32 %v746, %v1066
      %v1068 = vpop.f32.mrf.mxu0
      %1069 = vmatprep.mubr.f32.mxu0 0.0
      %1070 = vmatmul.mubr.f32.gmra.mxu0 %v864
      %v1071 = vpop.f32.mrf.mxu0
      %v1072 = vadd.f32 %v751, %v1071
      %v1073 = vpop.f32.mrf.mxu0
      %1074 = vmatprep.mubr.f32.mxu0 0.0
      %1075 = vmatmul.mubr.f32.gmra.mxu0 %v867
      %v1076 = vpop.f32.mrf.mxu0
      %v1077 = vadd.f32 %v756, %v1076
      %v1078 = vpop.f32.mrf.mxu0
      %1079 = vmatprep.mubr.f32.mxu0 0.0
      %1080 = vmatmul.mubr.f32.gmra.mxu0 %v870
      %v1081 = vpop.f32.mrf.mxu0
      %v1082 = vadd.f32 %v761, %v1081
      %v1083 = vpop.f32.mrf.mxu0
      %1084 = vmatprep.mubr.f32.mxu0 0.0
      %1085 = vmatmul.mubr.f32.gmra.mxu0 %v873
      %v1086 = vpop.f32.mrf.mxu0
      %v1087 = vadd.f32 %v766, %v1086
      %v1088 = vpop.f32.mrf.mxu0
      %1089 = vmatprep.mubr.f32.mxu0 0.0
      %1090 = vmatmul.mubr.f32.gmra.mxu0 %v876
      %v1091 = vpop.f32.mrf.mxu0
      %v1092 = vadd.f32 %v771, %v1091
      %v1093 = vpop.f32.mrf.mxu0
      %1094 = vmatprep.mubr.f32.mxu0 0.0
      %1095 = vmatmul.mubr.f32.gmra.mxu0 %v879
      %v1096 = vpop.f32.mrf.mxu0
      %v1097 = vadd.f32 %v776, %v1096
      %v1098 = vpop.f32.mrf.mxu0
      %1099 = vmatprep.mubr.f32.mxu0 0.0
      %1100 = vmatmul.mubr.f32.gmra.mxu0 %v882
      %v1101 = vpop.f32.mrf.mxu0
      %v1102 = vadd.f32 %v781, %v1101
      %v1103 = vpop.f32.mrf.mxu0
      %1104 = vmatprep.mubr.f32.mxu0 0.0
      %1105 = vmatmul.mubr.f32.gmra.mxu0 %v885
      %v1106 = vpop.f32.mrf.mxu0
      %v1107 = vadd.f32 %v786, %v1106
      %v1108 = vpop.f32.mrf.mxu0
      %1109 = vmatprep.mubr.f32.mxu0 0.0
      %1110 = vmatmul.mubr.f32.gmra.mxu0 %v888
      %v1111 = vpop.f32.mrf.mxu0
      %v1112 = vadd.f32 %v791, %v1111
      %v1113 = vpop.f32.mrf.mxu0
      %1114 = vdwg.mxu0
      %v1115 = vld [vmem:[%s4] sm:$0x1]
      %v1117 = vlaneseq
      %v1118 = vshrl.u32 %v1117, 7
      %v1119 = vsub.s32 0, %v1118
      %v1120 = vrot.slane %v1115, %v1119
      %v1122 = vadd.f32 %v957, %v1120
      %v1123 = vadd.f32 %v962, %v1120
      %v1124 = vadd.f32 %v967, %v1120
      %v1125 = vadd.f32 %v972, %v1120
      %v1126 = vadd.f32 %v977, %v1120
      %v1127 = vadd.f32 %v982, %v1120
      %v1128 = vadd.f32 %v987, %v1120
      %v1129 = vadd.f32 %v992, %v1120
      %v1130 = vadd.f32 %v997, %v1120
      %v1131 = vadd.f32 %v1002, %v1120
      %v1132 = vadd.f32 %v1007, %v1120
      %v1133 = vadd.f32 %v1012, %v1120
      %v1134 = vadd.f32 %v1017, %v1120
      %v1135 = vadd.f32 %v1022, %v1120
      %v1136 = vadd.f32 %v1027, %v1120
      %v1137 = vadd.f32 %v1032, %v1120
      %v1138 = vadd.f32 %v1037, %v1120
      %v1139 = vadd.f32 %v1042, %v1120
      %v1140 = vadd.f32 %v1047, %v1120
      %v1141 = vadd.f32 %v1052, %v1120
      %v1142 = vadd.f32 %v1057, %v1120
      %v1143 = vadd.f32 %v1062, %v1120
      %v1144 = vadd.f32 %v1067, %v1120
      %v1145 = vadd.f32 %v1072, %v1120
      %v1146 = vadd.f32 %v1077, %v1120
      %v1147 = vadd.f32 %v1082, %v1120
      %v1148 = vadd.f32 %v1087, %v1120
      %v1149 = vadd.f32 %v1092, %v1120
      %v1150 = vadd.f32 %v1097, %v1120
      %v1151 = vadd.f32 %v1102, %v1120
      %v1152 = vadd.f32 %v1107, %v1120
      %v1153 = vadd.f32 %v1112, %v1120
      %v1154 = vmax.f32 %v1122, 0.0
      %v1155 = vmax.f32 %v1123, 0.0
      %v1156 = vmax.f32 %v1124, 0.0
      %v1157 = vmax.f32 %v1125, 0.0
      %v1158 = vmax.f32 %v1126, 0.0
      %v1159 = vmax.f32 %v1127, 0.0
      %v1160 = vmax.f32 %v1128, 0.0
      %v1161 = vmax.f32 %v1129, 0.0
      %v1162 = vmax.f32 %v1130, 0.0
      %v1163 = vmax.f32 %v1131, 0.0
      %v1164 = vmax.f32 %v1132, 0.0
      %v1165 = vmax.f32 %v1133, 0.0
      %v1166 = vmax.f32 %v1134, 0.0
      %v1167 = vmax.f32 %v1135, 0.0
      %v1168 = vmax.f32 %v1136, 0.0
      %v1169 = vmax.f32 %v1137, 0.0
      %v1170 = vmax.f32 %v1138, 0.0
      %v1171 = vmax.f32 %v1139, 0.0
      %v1172 = vmax.f32 %v1140, 0.0
      %v1173 = vmax.f32 %v1141, 0.0
      %v1174 = vmax.f32 %v1142, 0.0
      %v1175 = vmax.f32 %v1143, 0.0
      %v1176 = vmax.f32 %v1144, 0.0
      %v1177 = vmax.f32 %v1145, 0.0
      %v1178 = vmax.f32 %v1146, 0.0
      %v1179 = vmax.f32 %v1147, 0.0
      %v1180 = vmax.f32 %v1148, 0.0
      %v1181 = vmax.f32 %v1149, 0.0
      %v1182 = vmax.f32 %v1150, 0.0
      %v1183 = vmax.f32 %v1151, 0.0
      %v1184 = vmax.f32 %v1152, 0.0
      %v1185 = vmax.f32 %v1153, 0.0
      %v1186 = vrsqrt.pop %v1154
      %v1187 = vmul.f32 %v1154, %v1186
      %vm1188 = vcmp.eq.f32.partialorder %v1154, inf
      %v1189 = vsel %vm1188, %v1154, %v1187
      %vm1190 = vcmp.eq.f32.partialorder %v1154, 0.0
      %v1191 = vand.u32 %v1154, 2147483648
      %v1192 = vsel %vm1190, %v1191, %v1189
      %v1193 = vrsqrt.pop %v1155
      %v1194 = vmul.f32 %v1155, %v1193
      %vm1195 = vcmp.eq.f32.partialorder %v1155, inf
      %v1196 = vsel %vm1195, %v1155, %v1194
      %vm1197 = vcmp.eq.f32.partialorder %v1155, 0.0
      %v1198 = vand.u32 %v1155, 2147483648
      %v1199 = vsel %vm1197, %v1198, %v1196
      %v1200 = vrsqrt.pop %v1156
      %v1201 = vmul.f32 %v1156, %v1200
      %vm1202 = vcmp.eq.f32.partialorder %v1156, inf
      %v1203 = vsel %vm1202, %v1156, %v1201
      %vm1204 = vcmp.eq.f32.partialorder %v1156, 0.0
      %v1205 = vand.u32 %v1156, 2147483648
      %v1206 = vsel %vm1204, %v1205, %v1203
      %v1207 = vrsqrt.pop %v1157
      %v1208 = vmul.f32 %v1157, %v1207
      %vm1209 = vcmp.eq.f32.partialorder %v1157, inf
      %v1210 = vsel %vm1209, %v1157, %v1208
      %vm1211 = vcmp.eq.f32.partialorder %v1157, 0.0
      %v1212 = vand.u32 %v1157, 2147483648
      %v1213 = vsel %vm1211, %v1212, %v1210
      %v1214 = vrsqrt.pop %v1158
      %v1215 = vmul.f32 %v1158, %v1214
      %vm1216 = vcmp.eq.f32.partialorder %v1158, inf
      %v1217 = vsel %vm1216, %v1158, %v1215
      %vm1218 = vcmp.eq.f32.partialorder %v1158, 0.0
      %v1219 = vand.u32 %v1158, 2147483648
      %v1220 = vsel %vm1218, %v1219, %v1217
      %v1221 = vrsqrt.pop %v1159
      %v1222 = vmul.f32 %v1159, %v1221
      %vm1223 = vcmp.eq.f32.partialorder %v1159, inf
      %v1224 = vsel %vm1223, %v1159, %v1222
      %vm1225 = vcmp.eq.f32.partialorder %v1159, 0.0
      %v1226 = vand.u32 %v1159, 2147483648
      %v1227 = vsel %vm1225, %v1226, %v1224
      %v1228 = vrsqrt.pop %v1160
      %v1229 = vmul.f32 %v1160, %v1228
      %vm1230 = vcmp.eq.f32.partialorder %v1160, inf
      %v1231 = vsel %vm1230, %v1160, %v1229
      %vm1232 = vcmp.eq.f32.partialorder %v1160, 0.0
      %v1233 = vand.u32 %v1160, 2147483648
      %v1234 = vsel %vm1232, %v1233, %v1231
      %v1235 = vrsqrt.pop %v1161
      %v1236 = vmul.f32 %v1161, %v1235
      %vm1237 = vcmp.eq.f32.partialorder %v1161, inf
      %v1238 = vsel %vm1237, %v1161, %v1236
      %vm1239 = vcmp.eq.f32.partialorder %v1161, 0.0
      %v1240 = vand.u32 %v1161, 2147483648
      %v1241 = vsel %vm1239, %v1240, %v1238
      %v1242 = vrsqrt.pop %v1162
      %v1243 = vmul.f32 %v1162, %v1242
      %vm1244 = vcmp.eq.f32.partialorder %v1162, inf
      %v1245 = vsel %vm1244, %v1162, %v1243
      %vm1246 = vcmp.eq.f32.partialorder %v1162, 0.0
      %v1247 = vand.u32 %v1162, 2147483648
      %v1248 = vsel %vm1246, %v1247, %v1245
      %v1249 = vrsqrt.pop %v1163
      %v1250 = vmul.f32 %v1163, %v1249
      %vm1251 = vcmp.eq.f32.partialorder %v1163, inf
      %v1252 = vsel %vm1251, %v1163, %v1250
      %vm1253 = vcmp.eq.f32.partialorder %v1163, 0.0
      %v1254 = vand.u32 %v1163, 2147483648
      %v1255 = vsel %vm1253, %v1254, %v1252
      %v1256 = vrsqrt.pop %v1164
      %v1257 = vmul.f32 %v1164, %v1256
      %vm1258 = vcmp.eq.f32.partialorder %v1164, inf
      %v1259 = vsel %vm1258, %v1164, %v1257
      %vm1260 = vcmp.eq.f32.partialorder %v1164, 0.0
      %v1261 = vand.u32 %v1164, 2147483648
      %v1262 = vsel %vm1260, %v1261, %v1259
      %v1263 = vrsqrt.pop %v1165
      %v1264 = vmul.f32 %v1165, %v1263
      %vm1265 = vcmp.eq.f32.partialorder %v1165, inf
      %v1266 = vsel %vm1265, %v1165, %v1264
      %vm1267 = vcmp.eq.f32.partialorder %v1165, 0.0
      %v1268 = vand.u32 %v1165, 2147483648
      %v1269 = vsel %vm1267, %v1268, %v1266
      %v1270 = vrsqrt.pop %v1166
      %v1271 = vmul.f32 %v1166, %v1270
      %vm1272 = vcmp.eq.f32.partialorder %v1166, inf
      %v1273 = vsel %vm1272, %v1166, %v1271
      %vm1274 = vcmp.eq.f32.partialorder %v1166, 0.0
      %v1275 = vand.u32 %v1166, 2147483648
      %v1276 = vsel %vm1274, %v1275, %v1273
      %v1277 = vrsqrt.pop %v1167
      %v1278 = vmul.f32 %v1167, %v1277
      %vm1279 = vcmp.eq.f32.partialorder %v1167, inf
      %v1280 = vsel %vm1279, %v1167, %v1278
      %vm1281 = vcmp.eq.f32.partialorder %v1167, 0.0
      %v1282 = vand.u32 %v1167, 2147483648
      %v1283 = vsel %vm1281, %v1282, %v1280
      %v1284 = vrsqrt.pop %v1168
      %v1285 = vmul.f32 %v1168, %v1284
      %vm1286 = vcmp.eq.f32.partialorder %v1168, inf
      %v1287 = vsel %vm1286, %v1168, %v1285
      %vm1288 = vcmp.eq.f32.partialorder %v1168, 0.0
      %v1289 = vand.u32 %v1168, 2147483648
      %v1290 = vsel %vm1288, %v1289, %v1287
      %v1291 = vrsqrt.pop %v1169
      %v1292 = vmul.f32 %v1169, %v1291
      %vm1293 = vcmp.eq.f32.partialorder %v1169, inf
      %v1294 = vsel %vm1293, %v1169, %v1292
      %vm1295 = vcmp.eq.f32.partialorder %v1169, 0.0
      %v1296 = vand.u32 %v1169, 2147483648
      %v1297 = vsel %vm1295, %v1296, %v1294
      %v1298 = vrsqrt.pop %v1170
      %v1299 = vmul.f32 %v1170, %v1298
      %vm1300 = vcmp.eq.f32.partialorder %v1170, inf
      %v1301 = vsel %vm1300, %v1170, %v1299
      %vm1302 = vcmp.eq.f32.partialorder %v1170, 0.0
      %v1303 = vand.u32 %v1170, 2147483648
      %v1304 = vsel %vm1302, %v1303, %v1301
      %v1305 = vrsqrt.pop %v1171
      %v1306 = vmul.f32 %v1171, %v1305
      %vm1307 = vcmp.eq.f32.partialorder %v1171, inf
      %v1308 = vsel %vm1307, %v1171, %v1306
      %vm1309 = vcmp.eq.f32.partialorder %v1171, 0.0
      %v1310 = vand.u32 %v1171, 2147483648
      %v1311 = vsel %vm1309, %v1310, %v1308
      %v1312 = vrsqrt.pop %v1172
      %v1313 = vmul.f32 %v1172, %v1312
      %vm1314 = vcmp.eq.f32.partialorder %v1172, inf
      %v1315 = vsel %vm1314, %v1172, %v1313
      %vm1316 = vcmp.eq.f32.partialorder %v1172, 0.0
      %v1317 = vand.u32 %v1172, 2147483648
      %v1318 = vsel %vm1316, %v1317, %v1315
      %v1319 = vrsqrt.pop %v1173
      %v1320 = vmul.f32 %v1173, %v1319
      %vm1321 = vcmp.eq.f32.partialorder %v1173, inf
      %v1322 = vsel %vm1321, %v1173, %v1320
      %vm1323 = vcmp.eq.f32.partialorder %v1173, 0.0
      %v1324 = vand.u32 %v1173, 2147483648
      %v1325 = vsel %vm1323, %v1324, %v1322
      %v1326 = vrsqrt.pop %v1174
      %v1327 = vmul.f32 %v1174, %v1326
      %vm1328 = vcmp.eq.f32.partialorder %v1174, inf
      %v1329 = vsel %vm1328, %v1174, %v1327
      %vm1330 = vcmp.eq.f32.partialorder %v1174, 0.0
      %v1331 = vand.u32 %v1174, 2147483648
      %v1332 = vsel %vm1330, %v1331, %v1329
      %v1333 = vrsqrt.pop %v1175
      %v1334 = vmul.f32 %v1175, %v1333
      %vm1335 = vcmp.eq.f32.partialorder %v1175, inf
      %v1336 = vsel %vm1335, %v1175, %v1334
      %vm1337 = vcmp.eq.f32.partialorder %v1175, 0.0
      %v1338 = vand.u32 %v1175, 2147483648
      %v1339 = vsel %vm1337, %v1338, %v1336
      %v1340 = vrsqrt.pop %v1176
      %v1341 = vmul.f32 %v1176, %v1340
      %vm1342 = vcmp.eq.f32.partialorder %v1176, inf
      %v1343 = vsel %vm1342, %v1176, %v1341
      %vm1344 = vcmp.eq.f32.partialorder %v1176, 0.0
      %v1345 = vand.u32 %v1176, 2147483648
      %v1346 = vsel %vm1344, %v1345, %v1343
      %v1347 = vrsqrt.pop %v1177
      %v1348 = vmul.f32 %v1177, %v1347
      %vm1349 = vcmp.eq.f32.partialorder %v1177, inf
      %v1350 = vsel %vm1349, %v1177, %v1348
      %vm1351 = vcmp.eq.f32.partialorder %v1177, 0.0
      %v1352 = vand.u32 %v1177, 2147483648
      %v1353 = vsel %vm1351, %v1352, %v1350
      %v1354 = vrsqrt.pop %v1178
      %v1355 = vmul.f32 %v1178, %v1354
      %vm1356 = vcmp.eq.f32.partialorder %v1178, inf
      %v1357 = vsel %vm1356, %v1178, %v1355
      %vm1358 = vcmp.eq.f32.partialorder %v1178, 0.0
      %v1359 = vand.u32 %v1178, 2147483648
      %v1360 = vsel %vm1358, %v1359, %v1357
      %v1361 = vrsqrt.pop %v1179
      %v1362 = vmul.f32 %v1179, %v1361
      %vm1363 = vcmp.eq.f32.partialorder %v1179, inf
      %v1364 = vsel %vm1363, %v1179, %v1362
      %vm1365 = vcmp.eq.f32.partialorder %v1179, 0.0
      %v1366 = vand.u32 %v1179, 2147483648
      %v1367 = vsel %vm1365, %v1366, %v1364
      %v1368 = vrsqrt.pop %v1180
      %v1369 = vmul.f32 %v1180, %v1368
      %vm1370 = vcmp.eq.f32.partialorder %v1180, inf
      %v1371 = vsel %vm1370, %v1180, %v1369
      %vm1372 = vcmp.eq.f32.partialorder %v1180, 0.0
      %v1373 = vand.u32 %v1180, 2147483648
      %v1374 = vsel %vm1372, %v1373, %v1371
      %v1375 = vrsqrt.pop %v1181
      %v1376 = vmul.f32 %v1181, %v1375
      %vm1377 = vcmp.eq.f32.partialorder %v1181, inf
      %v1378 = vsel %vm1377, %v1181, %v1376
      %vm1379 = vcmp.eq.f32.partialorder %v1181, 0.0
      %v1380 = vand.u32 %v1181, 2147483648
      %v1381 = vsel %vm1379, %v1380, %v1378
      %v1382 = vrsqrt.pop %v1182
      %v1383 = vmul.f32 %v1182, %v1382
      %vm1384 = vcmp.eq.f32.partialorder %v1182, inf
      %v1385 = vsel %vm1384, %v1182, %v1383
      %vm1386 = vcmp.eq.f32.partialorder %v1182, 0.0
      %v1387 = vand.u32 %v1182, 2147483648
      %v1388 = vsel %vm1386, %v1387, %v1385
      %v1389 = vrsqrt.pop %v1183
      %v1390 = vmul.f32 %v1183, %v1389
      %vm1391 = vcmp.eq.f32.partialorder %v1183, inf
      %v1392 = vsel %vm1391, %v1183, %v1390
      %vm1393 = vcmp.eq.f32.partialorder %v1183, 0.0
      %v1394 = vand.u32 %v1183, 2147483648
      %v1395 = vsel %vm1393, %v1394, %v1392
      %v1396 = vrsqrt.pop %v1184
      %v1397 = vmul.f32 %v1184, %v1396
      %vm1398 = vcmp.eq.f32.partialorder %v1184, inf
      %v1399 = vsel %vm1398, %v1184, %v1397
      %vm1400 = vcmp.eq.f32.partialorder %v1184, 0.0
      %v1401 = vand.u32 %v1184, 2147483648
      %v1402 = vsel %vm1400, %v1401, %v1399
      %v1403 = vrsqrt.pop %v1185
      %v1404 = vmul.f32 %v1185, %v1403
      %vm1405 = vcmp.eq.f32.partialorder %v1185, inf
      %v1406 = vsel %vm1405, %v1185, %v1404
      %vm1407 = vcmp.eq.f32.partialorder %v1185, 0.0
      %v1408 = vand.u32 %v1185, 2147483648
      %v1409 = vsel %vm1407, %v1408, %v1406
      %v1410 = vmul.f32 %v1192, 1.25
      %v1411 = vmul.f32 %v1199, 1.25
      %v1412 = vmul.f32 %v1206, 1.25
      %v1413 = vmul.f32 %v1213, 1.25
      %v1414 = vmul.f32 %v1220, 1.25
      %v1415 = vmul.f32 %v1227, 1.25
      %v1416 = vmul.f32 %v1234, 1.25
      %v1417 = vmul.f32 %v1241, 1.25
      %v1418 = vmul.f32 %v1248, 1.25
      %v1419 = vmul.f32 %v1255, 1.25
      %v1420 = vmul.f32 %v1262, 1.25
      %v1421 = vmul.f32 %v1269, 1.25
      %v1422 = vmul.f32 %v1276, 1.25
      %v1423 = vmul.f32 %v1283, 1.25
      %v1424 = vmul.f32 %v1290, 1.25
      %v1425 = vmul.f32 %v1297, 1.25
      %v1426 = vmul.f32 %v1304, 1.25
      %v1427 = vmul.f32 %v1311, 1.25
      %v1428 = vmul.f32 %v1318, 1.25
      %v1429 = vmul.f32 %v1325, 1.25
      %v1430 = vmul.f32 %v1332, 1.25
      %v1431 = vmul.f32 %v1339, 1.25
      %v1432 = vmul.f32 %v1346, 1.25
      %v1433 = vmul.f32 %v1353, 1.25
      %v1434 = vmul.f32 %v1360, 1.25
      %v1435 = vmul.f32 %v1367, 1.25
      %v1436 = vmul.f32 %v1374, 1.25
      %v1437 = vmul.f32 %v1381, 1.25
      %v1438 = vmul.f32 %v1388, 1.25
      %v1439 = vmul.f32 %v1395, 1.25
      %v1440 = vmul.f32 %v1402, 1.25
      %v1441 = vmul.f32 %v1409, 1.25
      %v1442 = vsub.f32 1.0, %v1410
      %v1443 = vsub.f32 1.0, %v1411
      %v1444 = vsub.f32 1.0, %v1412
      %v1445 = vsub.f32 1.0, %v1413
      %v1446 = vsub.f32 1.0, %v1414
      %v1447 = vsub.f32 1.0, %v1415
      %v1448 = vsub.f32 1.0, %v1416
      %v1449 = vsub.f32 1.0, %v1417
      %v1450 = vsub.f32 1.0, %v1418
      %v1451 = vsub.f32 1.0, %v1419
      %v1452 = vsub.f32 1.0, %v1420
      %v1453 = vsub.f32 1.0, %v1421
      %v1454 = vsub.f32 1.0, %v1422
      %v1455 = vsub.f32 1.0, %v1423
      %v1456 = vsub.f32 1.0, %v1424
      %v1457 = vsub.f32 1.0, %v1425
      %v1458 = vsub.f32 1.0, %v1426
      %v1459 = vsub.f32 1.0, %v1427
      %v1460 = vsub.f32 1.0, %v1428
      %v1461 = vsub.f32 1.0, %v1429
      %v1462 = vsub.f32 1.0, %v1430
      %v1463 = vsub.f32 1.0, %v1431
      %v1464 = vsub.f32 1.0, %v1432
      %v1465 = vsub.f32 1.0, %v1433
      %v1466 = vsub.f32 1.0, %v1434
      %v1467 = vsub.f32 1.0, %v1435
      %v1468 = vsub.f32 1.0, %v1436
      %v1469 = vsub.f32 1.0, %v1437
      %v1470 = vsub.f32 1.0, %v1438
      %v1471 = vsub.f32 1.0, %v1439
      %v1472 = vsub.f32 1.0, %v1440
      %v1473 = vsub.f32 1.0, %v1441
      %v1474 = vmax.f32 %v1442, 0.0
      %v1475 = vmax.f32 %v1443, 0.0
      %v1476 = vmax.f32 %v1444, 0.0
      %v1477 = vmax.f32 %v1445, 0.0
      %v1478 = vmax.f32 %v1446, 0.0
      %v1479 = vmax.f32 %v1447, 0.0
      %v1480 = vmax.f32 %v1448, 0.0
      %v1481 = vmax.f32 %v1449, 0.0
      %v1482 = vmax.f32 %v1450, 0.0
      %v1483 = vmax.f32 %v1451, 0.0
      %v1484 = vmax.f32 %v1452, 0.0
      %v1485 = vmax.f32 %v1453, 0.0
      %v1486 = vmax.f32 %v1454, 0.0
      %v1487 = vmax.f32 %v1455, 0.0
      %v1488 = vmax.f32 %v1456, 0.0
      %v1489 = vmax.f32 %v1457, 0.0
      %v1490 = vmax.f32 %v1458, 0.0
      %v1491 = vmax.f32 %v1459, 0.0
      %v1492 = vmax.f32 %v1460, 0.0
      %v1493 = vmax.f32 %v1461, 0.0
      %v1494 = vmax.f32 %v1462, 0.0
      %v1495 = vmax.f32 %v1463, 0.0
      %v1496 = vmax.f32 %v1464, 0.0
      %v1497 = vmax.f32 %v1465, 0.0
      %v1498 = vmax.f32 %v1466, 0.0
      %v1499 = vmax.f32 %v1467, 0.0
      %v1500 = vmax.f32 %v1468, 0.0
      %v1501 = vmax.f32 %v1469, 0.0
      %v1502 = vmax.f32 %v1470, 0.0
      %v1503 = vmax.f32 %v1471, 0.0
      %v1504 = vmax.f32 %v1472, 0.0
      %v1505 = vmax.f32 %v1473, 0.0
      %v1506 = vld [vmem:[%s5] sm:$0xff]
      %v1507 = vld [vmem:[%s5 + $0x8] sm:$0xff]
      %v1508 = vld [vmem:[%s5 + $0x10] sm:$0xff]
      %v1509 = vld [vmem:[%s5 + $0x18] sm:$0xff]
      %v1510 = vld [vmem:[%s5 + $0x20] sm:$0xff]
      %v1511 = vld [vmem:[%s5 + $0x28] sm:$0xff]
      %v1512 = vld [vmem:[%s5 + $0x30] sm:$0xff]
      %v1513 = vld [vmem:[%s5 + $0x38] sm:$0xff]
      %v1514 = vld [vmem:[%s5 + $0x40] sm:$0xff]
      %v1515 = vld [vmem:[%s5 + $0x48] sm:$0xff]
      %v1516 = vld [vmem:[%s5 + $0x50] sm:$0xff]
      %v1517 = vld [vmem:[%s5 + $0x58] sm:$0xff]
      %v1518 = vld [vmem:[%s5 + $0x60] sm:$0xff]
      %v1519 = vld [vmem:[%s5 + $0x68] sm:$0xff]
      %v1520 = vld [vmem:[%s5 + $0x70] sm:$0xff]
      %v1521 = vld [vmem:[%s5 + $0x78] sm:$0xff]
      %v1522 = vld [vmem:[%s5 + $0x80] sm:$0xff]
      %v1523 = vld [vmem:[%s5 + $0x88] sm:$0xff]
      %v1524 = vld [vmem:[%s5 + $0x90] sm:$0xff]
      %v1525 = vld [vmem:[%s5 + $0x98] sm:$0xff]
      %v1526 = vld [vmem:[%s5 + $0xa0] sm:$0xff]
      %v1527 = vld [vmem:[%s5 + $0xa8] sm:$0xff]
      %v1528 = vld [vmem:[%s5 + $0xb0] sm:$0xff]
      %v1529 = vld [vmem:[%s5 + $0xb8] sm:$0xff]
      %v1530 = vld [vmem:[%s5 + $0xc0] sm:$0xff]
      %v1531 = vld [vmem:[%s5 + $0xc8] sm:$0xff]
      %v1532 = vld [vmem:[%s5 + $0xd0] sm:$0xff]
      %v1533 = vld [vmem:[%s5 + $0xd8] sm:$0xff]
      %v1534 = vld [vmem:[%s5 + $0xe0] sm:$0xff]
      %v1535 = vld [vmem:[%s5 + $0xe8] sm:$0xff]
      %v1536 = vld [vmem:[%s5 + $0xf0] sm:$0xff]
      %v1537 = vld [vmem:[%s5 + $0xf8] sm:$0xff]
      %vm1538 = vcmask 523264
      %v1540 = vsel %vm1538, %v1474, 0
      %v1543 = vsel %vm1538, %v1475, 0
      %v1546 = vsel %vm1538, %v1476, 0
      %v1549 = vsel %vm1538, %v1477, 0
      %v1552 = vsel %vm1538, %v1478, 0
      %v1555 = vsel %vm1538, %v1479, 0
      %v1558 = vsel %vm1538, %v1480, 0
      %v1561 = vsel %vm1538, %v1481, 0
      %v1564 = vsel %vm1538, %v1482, 0
      %v1567 = vsel %vm1538, %v1483, 0
      %v1570 = vsel %vm1538, %v1484, 0
      %v1573 = vsel %vm1538, %v1485, 0
      %v1576 = vsel %vm1538, %v1486, 0
      %v1579 = vsel %vm1538, %v1487, 0
      %v1582 = vsel %vm1538, %v1488, 0
      %v1585 = vsel %vm1538, %v1489, 0
      %v1588 = vsel %vm1538, %v1490, 0
      %v1591 = vsel %vm1538, %v1491, 0
      %v1594 = vsel %vm1538, %v1492, 0
      %v1597 = vsel %vm1538, %v1493, 0
      %v1600 = vsel %vm1538, %v1494, 0
      %v1603 = vsel %vm1538, %v1495, 0
      %v1606 = vsel %vm1538, %v1496, 0
      %v1609 = vsel %vm1538, %v1497, 0
      %v1612 = vsel %vm1538, %v1498, 0
      %v1615 = vsel %vm1538, %v1499, 0
      %v1618 = vsel %vm1538, %v1500, 0
      %v1621 = vsel %vm1538, %v1501, 0
      %v1624 = vsel %vm1538, %v1502, 0
      %v1627 = vsel %vm1538, %v1503, 0
      %v1630 = vsel %vm1538, %v1504, 0
      %v1633 = vsel %vm1538, %v1505, 0
      %1635 = vmatprep.subr.mxu0 0.0
      %1636 = vmatpush1.msra.mxu0 0.0
      %1637 = vmatprep.subr.mxu0 0.0
      %1638 = vmatpush1.msra.mxu0 0.0
      %1639 = vmatprep.subr.mxu0 0.0
      %1640 = vmatpush1.msra.mxu0 0.0
      %1641 = vmatprep.subr.mxu0 0.0
      %1642 = vmatpush1.msra.mxu0 0.0
      %1643 = vmatprep.subr.mxu0 0.0
      %1644 = vmatpush1.msra.mxu0 0.0
      %1645 = vmatprep.subr.mxu0 0.0
      %1646 = vmatpush1.msra.mxu0 0.0
      %1647 = vmatprep.subr.mxu0 0.0
      %1648 = vmatpush1.msra.mxu0 0.0
      %1649 = vmatprep.subr.mxu0 0.0
      %1650 = vmatpush1.msra.mxu0 0.0
      %1651 = vmatprep.subr.mxu0 %v1535
      %1652 = vmatpush1.msra.mxu0 %v1534
      %1653 = vmatprep.subr.mxu0 %v1531
      %1654 = vmatpush1.msra.mxu0 %v1530
      %1655 = vmatprep.subr.mxu0 %v1527
      %1656 = vmatpush1.msra.mxu0 %v1526
      %1657 = vmatprep.subr.mxu0 %v1523
      %1658 = vmatpush1.msra.mxu0 %v1522
      %1659 = vmatprep.subr.mxu0 %v1519
      %1660 = vmatpush1.msra.mxu0 %v1518
      %1661 = vmatprep.subr.mxu0 %v1515
      %1662 = vmatpush1.msra.mxu0 %v1514
      %1663 = vmatprep.subr.mxu0 %v1511
      %1664 = vmatpush1.msra.mxu0 %v1510
      %1665 = vmatprep.subr.mxu0 %v1507
      %1666 = vmatpush1.msra.mxu0 %v1506
      %1667 = vmatprep.subr.mxu0 0.0
      %1668 = vmatpush2.msra.mxu0 0.0
      %1669 = vmatprep.subr.mxu0 0.0
      %1670 = vmatpush2.msra.mxu0 0.0
      %1671 = vmatprep.subr.mxu0 0.0
      %1672 = vmatpush2.msra.mxu0 0.0
      %1673 = vmatprep.subr.mxu0 0.0
      %1674 = vmatpush2.msra.mxu0 0.0
      %1675 = vmatprep.subr.mxu0 0.0
      %1676 = vmatpush2.msra.mxu0 0.0
      %1677 = vmatprep.subr.mxu0 0.0
      %1678 = vmatpush2.msra.mxu0 0.0
      %1679 = vmatprep.subr.mxu0 0.0
      %1680 = vmatpush2.msra.mxu0 0.0
      %1681 = vmatprep.subr.mxu0 0.0
      %1682 = vmatpush2.msra.mxu0 0.0
      %1683 = vmatprep.subr.mxu0 0.0
      %1684 = vmatpush2.msra.mxu0 0.0
      %1685 = vmatprep.subr.mxu0 0.0
      %1686 = vmatpush2.msra.mxu0 0.0
      %1687 = vmatprep.subr.mxu0 0.0
      %1688 = vmatpush2.msra.mxu0 0.0
      %1689 = vmatprep.subr.mxu0 0.0
      %1690 = vmatpush2.msra.mxu0 0.0
      %1691 = vmatprep.subr.mxu0 0.0
      %1692 = vmatpush2.msra.mxu0 0.0
      %1693 = vmatprep.subr.mxu0 0.0
      %1694 = vmatpush2.msra.mxu0 0.0
      %1695 = vmatprep.subr.mxu0 0.0
      %1696 = vmatpush2.msra.mxu0 0.0
      %1697 = vmatprep.subr.mxu0 0.0
      %1698 = vmatpush2.msra.mxu0 0.0
      %1699 = vmatprep.mubr.f32.mxu0 0.0
      %1700 = vmatmul.mubr.f32.gmra.mxu0 %v1540
      %v1701 = vpop.f32.mrf.mxu0
      %v1702 = vadd.f32 0.0, %v1701
      %v1703 = vpop.f32.mrf.mxu0
      %v1704 = vadd.f32 0.0, %v1703
      %1705 = vmatprep.mubr.f32.mxu0 0.0
      %1706 = vmatmul.mubr.f32.gmra.mxu0 %v1543
      %v1707 = vpop.f32.mrf.mxu0
      %v1708 = vadd.f32 0.0, %v1707
      %v1709 = vpop.f32.mrf.mxu0
      %v1710 = vadd.f32 0.0, %v1709
      %1711 = vmatprep.mubr.f32.mxu0 0.0
      %1712 = vmatmul.mubr.f32.gmra.mxu0 %v1546
      %v1713 = vpop.f32.mrf.mxu0
      %v1714 = vadd.f32 0.0, %v1713
      %v1715 = vpop.f32.mrf.mxu0
      %v1716 = vadd.f32 0.0, %v1715
      %1717 = vmatprep.mubr.f32.mxu0 0.0
      %1718 = vmatmul.mubr.f32.gmra.mxu0 %v1549
      %v1719 = vpop.f32.mrf.mxu0
      %v1720 = vadd.f32 0.0, %v1719
      %v1721 = vpop.f32.mrf.mxu0
      %v1722 = vadd.f32 0.0, %v1721
      %1723 = vmatprep.mubr.f32.mxu0 0.0
      %1724 = vmatmul.mubr.f32.gmra.mxu0 %v1552
      %v1725 = vpop.f32.mrf.mxu0
      %v1726 = vadd.f32 0.0, %v1725
      %v1727 = vpop.f32.mrf.mxu0
      %v1728 = vadd.f32 0.0, %v1727
      %1729 = vmatprep.mubr.f32.mxu0 0.0
      %1730 = vmatmul.mubr.f32.gmra.mxu0 %v1555
      %v1731 = vpop.f32.mrf.mxu0
      %v1732 = vadd.f32 0.0, %v1731
      %v1733 = vpop.f32.mrf.mxu0
      %v1734 = vadd.f32 0.0, %v1733
      %1735 = vmatprep.mubr.f32.mxu0 0.0
      %1736 = vmatmul.mubr.f32.gmra.mxu0 %v1558
      %v1737 = vpop.f32.mrf.mxu0
      %v1738 = vadd.f32 0.0, %v1737
      %v1739 = vpop.f32.mrf.mxu0
      %v1740 = vadd.f32 0.0, %v1739
      %1741 = vmatprep.mubr.f32.mxu0 0.0
      %1742 = vmatmul.mubr.f32.gmra.mxu0 %v1561
      %v1743 = vpop.f32.mrf.mxu0
      %v1744 = vadd.f32 0.0, %v1743
      %v1745 = vpop.f32.mrf.mxu0
      %v1746 = vadd.f32 0.0, %v1745
      %1747 = vmatprep.mubr.f32.mxu0 0.0
      %1748 = vmatmul.mubr.f32.gmra.mxu0 %v1564
      %v1749 = vpop.f32.mrf.mxu0
      %v1750 = vadd.f32 0.0, %v1749
      %v1751 = vpop.f32.mrf.mxu0
      %v1752 = vadd.f32 0.0, %v1751
      %1753 = vmatprep.mubr.f32.mxu0 0.0
      %1754 = vmatmul.mubr.f32.gmra.mxu0 %v1567
      %v1755 = vpop.f32.mrf.mxu0
      %v1756 = vadd.f32 0.0, %v1755
      %v1757 = vpop.f32.mrf.mxu0
      %v1758 = vadd.f32 0.0, %v1757
      %1759 = vmatprep.mubr.f32.mxu0 0.0
      %1760 = vmatmul.mubr.f32.gmra.mxu0 %v1570
      %v1761 = vpop.f32.mrf.mxu0
      %v1762 = vadd.f32 0.0, %v1761
      %v1763 = vpop.f32.mrf.mxu0
      %v1764 = vadd.f32 0.0, %v1763
      %1765 = vmatprep.mubr.f32.mxu0 0.0
      %1766 = vmatmul.mubr.f32.gmra.mxu0 %v1573
      %v1767 = vpop.f32.mrf.mxu0
      %v1768 = vadd.f32 0.0, %v1767
      %v1769 = vpop.f32.mrf.mxu0
      %v1770 = vadd.f32 0.0, %v1769
      %1771 = vmatprep.mubr.f32.mxu0 0.0
      %1772 = vmatmul.mubr.f32.gmra.mxu0 %v1576
      %v1773 = vpop.f32.mrf.mxu0
      %v1774 = vadd.f32 0.0, %v1773
      %v1775 = vpop.f32.mrf.mxu0
      %v1776 = vadd.f32 0.0, %v1775
      %1777 = vmatprep.mubr.f32.mxu0 0.0
      %1778 = vmatmul.mubr.f32.gmra.mxu0 %v1579
      %v1779 = vpop.f32.mrf.mxu0
      %v1780 = vadd.f32 0.0, %v1779
      %v1781 = vpop.f32.mrf.mxu0
      %v1782 = vadd.f32 0.0, %v1781
      %1783 = vmatprep.mubr.f32.mxu0 0.0
      %1784 = vmatmul.mubr.f32.gmra.mxu0 %v1582
      %v1785 = vpop.f32.mrf.mxu0
      %v1786 = vadd.f32 0.0, %v1785
      %v1787 = vpop.f32.mrf.mxu0
      %v1788 = vadd.f32 0.0, %v1787
      %1789 = vmatprep.mubr.f32.mxu0 0.0
      %1790 = vmatmul.mubr.f32.gmra.mxu0 %v1585
      %v1791 = vpop.f32.mrf.mxu0
      %v1792 = vadd.f32 0.0, %v1791
      %v1793 = vpop.f32.mrf.mxu0
      %v1794 = vadd.f32 0.0, %v1793
      %1795 = vmatprep.mubr.f32.mxu0 0.0
      %1796 = vmatmul.mubr.f32.gmra.mxu0 %v1588
      %v1797 = vpop.f32.mrf.mxu0
      %v1798 = vadd.f32 0.0, %v1797
      %v1799 = vpop.f32.mrf.mxu0
      %v1800 = vadd.f32 0.0, %v1799
      %1801 = vmatprep.mubr.f32.mxu0 0.0
      %1802 = vmatmul.mubr.f32.gmra.mxu0 %v1591
      %v1803 = vpop.f32.mrf.mxu0
      %v1804 = vadd.f32 0.0, %v1803
      %v1805 = vpop.f32.mrf.mxu0
      %v1806 = vadd.f32 0.0, %v1805
      %1807 = vmatprep.mubr.f32.mxu0 0.0
      %1808 = vmatmul.mubr.f32.gmra.mxu0 %v1594
      %v1809 = vpop.f32.mrf.mxu0
      %v1810 = vadd.f32 0.0, %v1809
      %v1811 = vpop.f32.mrf.mxu0
      %v1812 = vadd.f32 0.0, %v1811
      %1813 = vmatprep.mubr.f32.mxu0 0.0
      %1814 = vmatmul.mubr.f32.gmra.mxu0 %v1597
      %v1815 = vpop.f32.mrf.mxu0
      %v1816 = vadd.f32 0.0, %v1815
      %v1817 = vpop.f32.mrf.mxu0
      %v1818 = vadd.f32 0.0, %v1817
      %1819 = vmatprep.mubr.f32.mxu0 0.0
      %1820 = vmatmul.mubr.f32.gmra.mxu0 %v1600
      %v1821 = vpop.f32.mrf.mxu0
      %v1822 = vadd.f32 0.0, %v1821
      %v1823 = vpop.f32.mrf.mxu0
      %v1824 = vadd.f32 0.0, %v1823
      %1825 = vmatprep.mubr.f32.mxu0 0.0
      %1826 = vmatmul.mubr.f32.gmra.mxu0 %v1603
      %v1827 = vpop.f32.mrf.mxu0
      %v1828 = vadd.f32 0.0, %v1827
      %v1829 = vpop.f32.mrf.mxu0
      %v1830 = vadd.f32 0.0, %v1829
      %1831 = vmatprep.mubr.f32.mxu0 0.0
      %1832 = vmatmul.mubr.f32.gmra.mxu0 %v1606
      %v1833 = vpop.f32.mrf.mxu0
      %v1834 = vadd.f32 0.0, %v1833
      %v1835 = vpop.f32.mrf.mxu0
      %v1836 = vadd.f32 0.0, %v1835
      %1837 = vmatprep.mubr.f32.mxu0 0.0
      %1838 = vmatmul.mubr.f32.gmra.mxu0 %v1609
      %v1839 = vpop.f32.mrf.mxu0
      %v1840 = vadd.f32 0.0, %v1839
      %v1841 = vpop.f32.mrf.mxu0
      %v1842 = vadd.f32 0.0, %v1841
      %1843 = vmatprep.mubr.f32.mxu0 0.0
      %1844 = vmatmul.mubr.f32.gmra.mxu0 %v1612
      %v1845 = vpop.f32.mrf.mxu0
      %v1846 = vadd.f32 0.0, %v1845
      %v1847 = vpop.f32.mrf.mxu0
      %v1848 = vadd.f32 0.0, %v1847
      %1849 = vmatprep.mubr.f32.mxu0 0.0
      %1850 = vmatmul.mubr.f32.gmra.mxu0 %v1615
      %v1851 = vpop.f32.mrf.mxu0
      %v1852 = vadd.f32 0.0, %v1851
      %v1853 = vpop.f32.mrf.mxu0
      %v1854 = vadd.f32 0.0, %v1853
      %1855 = vmatprep.mubr.f32.mxu0 0.0
      %1856 = vmatmul.mubr.f32.gmra.mxu0 %v1618
      %v1857 = vpop.f32.mrf.mxu0
      %v1858 = vadd.f32 0.0, %v1857
      %v1859 = vpop.f32.mrf.mxu0
      %v1860 = vadd.f32 0.0, %v1859
      %1861 = vmatprep.mubr.f32.mxu0 0.0
      %1862 = vmatmul.mubr.f32.gmra.mxu0 %v1621
      %v1863 = vpop.f32.mrf.mxu0
      %v1864 = vadd.f32 0.0, %v1863
      %v1865 = vpop.f32.mrf.mxu0
      %v1866 = vadd.f32 0.0, %v1865
      %1867 = vmatprep.mubr.f32.mxu0 0.0
      %1868 = vmatmul.mubr.f32.gmra.mxu0 %v1624
      %v1869 = vpop.f32.mrf.mxu0
      %v1870 = vadd.f32 0.0, %v1869
      %v1871 = vpop.f32.mrf.mxu0
      %v1872 = vadd.f32 0.0, %v1871
      %1873 = vmatprep.mubr.f32.mxu0 0.0
      %1874 = vmatmul.mubr.f32.gmra.mxu0 %v1627
      %v1875 = vpop.f32.mrf.mxu0
      %v1876 = vadd.f32 0.0, %v1875
      %v1877 = vpop.f32.mrf.mxu0
      %v1878 = vadd.f32 0.0, %v1877
      %1879 = vmatprep.mubr.f32.mxu0 0.0
      %1880 = vmatmul.mubr.f32.gmra.mxu0 %v1630
      %v1881 = vpop.f32.mrf.mxu0
      %v1882 = vadd.f32 0.0, %v1881
      %v1883 = vpop.f32.mrf.mxu0
      %v1884 = vadd.f32 0.0, %v1883
      %1885 = vmatprep.mubr.f32.mxu0 0.0
      %1886 = vmatmul.mubr.f32.gmra.mxu0 %v1633
      %v1887 = vpop.f32.mrf.mxu0
      %v1888 = vadd.f32 0.0, %v1887
      %v1889 = vpop.f32.mrf.mxu0
      %v1890 = vadd.f32 0.0, %v1889
      %1891 = vdwg.mxu0
      %1892 = vmatprep.subr.mxu0 0.0
      %1893 = vmatpush1.msra.mxu0 0.0
      %1894 = vmatprep.subr.mxu0 0.0
      %1895 = vmatpush1.msra.mxu0 0.0
      %1896 = vmatprep.subr.mxu0 0.0
      %1897 = vmatpush1.msra.mxu0 0.0
      %1898 = vmatprep.subr.mxu0 0.0
      %1899 = vmatpush1.msra.mxu0 0.0
      %1900 = vmatprep.subr.mxu0 0.0
      %1901 = vmatpush1.msra.mxu0 0.0
      %1902 = vmatprep.subr.mxu0 0.0
      %1903 = vmatpush1.msra.mxu0 0.0
      %1904 = vmatprep.subr.mxu0 0.0
      %1905 = vmatpush1.msra.mxu0 0.0
      %1906 = vmatprep.subr.mxu0 0.0
      %1907 = vmatpush1.msra.mxu0 0.0
      %1908 = vmatprep.subr.mxu0 %v1537
      %1909 = vmatpush1.msra.mxu0 %v1536
      %1910 = vmatprep.subr.mxu0 %v1533
      %1911 = vmatpush1.msra.mxu0 %v1532
      %1912 = vmatprep.subr.mxu0 %v1529
      %1913 = vmatpush1.msra.mxu0 %v1528
      %1914 = vmatprep.subr.mxu0 %v1525
      %1915 = vmatpush1.msra.mxu0 %v1524
      %1916 = vmatprep.subr.mxu0 %v1521
      %1917 = vmatpush1.msra.mxu0 %v1520
      %1918 = vmatprep.subr.mxu0 %v1517
      %1919 = vmatpush1.msra.mxu0 %v1516
      %1920 = vmatprep.subr.mxu0 %v1513
      %1921 = vmatpush1.msra.mxu0 %v1512
      %1922 = vmatprep.subr.mxu0 %v1509
      %1923 = vmatpush1.msra.mxu0 %v1508
      %1924 = vmatprep.subr.mxu0 0.0
      %1925 = vmatpush2.msra.mxu0 0.0
      %1926 = vmatprep.subr.mxu0 0.0
      %1927 = vmatpush2.msra.mxu0 0.0
      %1928 = vmatprep.subr.mxu0 0.0
      %1929 = vmatpush2.msra.mxu0 0.0
      %1930 = vmatprep.subr.mxu0 0.0
      %1931 = vmatpush2.msra.mxu0 0.0
      %1932 = vmatprep.subr.mxu0 0.0
      %1933 = vmatpush2.msra.mxu0 0.0
      %1934 = vmatprep.subr.mxu0 0.0
      %1935 = vmatpush2.msra.mxu0 0.0
      %1936 = vmatprep.subr.mxu0 0.0
      %1937 = vmatpush2.msra.mxu0 0.0
      %1938 = vmatprep.subr.mxu0 0.0
      %1939 = vmatpush2.msra.mxu0 0.0
      %1940 = vmatprep.subr.mxu0 0.0
      %1941 = vmatpush2.msra.mxu0 0.0
      %1942 = vmatprep.subr.mxu0 0.0
      %1943 = vmatpush2.msra.mxu0 0.0
      %1944 = vmatprep.subr.mxu0 0.0
      %1945 = vmatpush2.msra.mxu0 0.0
      %1946 = vmatprep.subr.mxu0 0.0
      %1947 = vmatpush2.msra.mxu0 0.0
      %1948 = vmatprep.subr.mxu0 0.0
      %1949 = vmatpush2.msra.mxu0 0.0
      %1950 = vmatprep.subr.mxu0 0.0
      %1951 = vmatpush2.msra.mxu0 0.0
      %1952 = vmatprep.subr.mxu0 0.0
      %1953 = vmatpush2.msra.mxu0 0.0
      %1954 = vmatprep.subr.mxu0 0.0
      %1955 = vmatpush2.msra.mxu0 0.0
      %1956 = vmatprep.mubr.f32.mxu0 0.0
      %1957 = vmatmul.mubr.f32.gmra.mxu0 %v1540
      %v1958 = vpop.f32.mrf.mxu0
      %v1959 = vadd.f32 0.0, %v1958
      %v1960 = vpop.f32.mrf.mxu0
      %v1961 = vadd.f32 0.0, %v1960
      %1962 = vmatprep.mubr.f32.mxu0 0.0
      %1963 = vmatmul.mubr.f32.gmra.mxu0 %v1543
      %v1964 = vpop.f32.mrf.mxu0
      %v1965 = vadd.f32 0.0, %v1964
      %v1966 = vpop.f32.mrf.mxu0
      %v1967 = vadd.f32 0.0, %v1966
      %1968 = vmatprep.mubr.f32.mxu0 0.0
      %1969 = vmatmul.mubr.f32.gmra.mxu0 %v1546
      %v1970 = vpop.f32.mrf.mxu0
      %v1971 = vadd.f32 0.0, %v1970
      %v1972 = vpop.f32.mrf.mxu0
      %v1973 = vadd.f32 0.0, %v1972
      %1974 = vmatprep.mubr.f32.mxu0 0.0
      %1975 = vmatmul.mubr.f32.gmra.mxu0 %v1549
      %v1976 = vpop.f32.mrf.mxu0
      %v1977 = vadd.f32 0.0, %v1976
      %v1978 = vpop.f32.mrf.mxu0
      %v1979 = vadd.f32 0.0, %v1978
      %1980 = vmatprep.mubr.f32.mxu0 0.0
      %1981 = vmatmul.mubr.f32.gmra.mxu0 %v1552
      %v1982 = vpop.f32.mrf.mxu0
      %v1983 = vadd.f32 0.0, %v1982
      %v1984 = vpop.f32.mrf.mxu0
      %v1985 = vadd.f32 0.0, %v1984
      %1986 = vmatprep.mubr.f32.mxu0 0.0
      %1987 = vmatmul.mubr.f32.gmra.mxu0 %v1555
      %v1988 = vpop.f32.mrf.mxu0
      %v1989 = vadd.f32 0.0, %v1988
      %v1990 = vpop.f32.mrf.mxu0
      %v1991 = vadd.f32 0.0, %v1990
      %1992 = vmatprep.mubr.f32.mxu0 0.0
      %1993 = vmatmul.mubr.f32.gmra.mxu0 %v1558
      %v1994 = vpop.f32.mrf.mxu0
      %v1995 = vadd.f32 0.0, %v1994
      %v1996 = vpop.f32.mrf.mxu0
      %v1997 = vadd.f32 0.0, %v1996
      %1998 = vmatprep.mubr.f32.mxu0 0.0
      %1999 = vmatmul.mubr.f32.gmra.mxu0 %v1561
      %v2000 = vpop.f32.mrf.mxu0
      %v2001 = vadd.f32 0.0, %v2000
      %v2002 = vpop.f32.mrf.mxu0
      %v2003 = vadd.f32 0.0, %v2002
      %2004 = vmatprep.mubr.f32.mxu0 0.0
      %2005 = vmatmul.mubr.f32.gmra.mxu0 %v1564
      %v2006 = vpop.f32.mrf.mxu0
      %v2007 = vadd.f32 0.0, %v2006
      %v2008 = vpop.f32.mrf.mxu0
      %v2009 = vadd.f32 0.0, %v2008
      %2010 = vmatprep.mubr.f32.mxu0 0.0
      %2011 = vmatmul.mubr.f32.gmra.mxu0 %v1567
      %v2012 = vpop.f32.mrf.mxu0
      %v2013 = vadd.f32 0.0, %v2012
      %v2014 = vpop.f32.mrf.mxu0
      %v2015 = vadd.f32 0.0, %v2014
      %2016 = vmatprep.mubr.f32.mxu0 0.0
      %2017 = vmatmul.mubr.f32.gmra.mxu0 %v1570
      %v2018 = vpop.f32.mrf.mxu0
      %v2019 = vadd.f32 0.0, %v2018
      %v2020 = vpop.f32.mrf.mxu0
      %v2021 = vadd.f32 0.0, %v2020
      %2022 = vmatprep.mubr.f32.mxu0 0.0
      %2023 = vmatmul.mubr.f32.gmra.mxu0 %v1573
      %v2024 = vpop.f32.mrf.mxu0
      %v2025 = vadd.f32 0.0, %v2024
      %v2026 = vpop.f32.mrf.mxu0
      %v2027 = vadd.f32 0.0, %v2026
      %2028 = vmatprep.mubr.f32.mxu0 0.0
      %2029 = vmatmul.mubr.f32.gmra.mxu0 %v1576
      %v2030 = vpop.f32.mrf.mxu0
      %v2031 = vadd.f32 0.0, %v2030
      %v2032 = vpop.f32.mrf.mxu0
      %v2033 = vadd.f32 0.0, %v2032
      %2034 = vmatprep.mubr.f32.mxu0 0.0
      %2035 = vmatmul.mubr.f32.gmra.mxu0 %v1579
      %v2036 = vpop.f32.mrf.mxu0
      %v2037 = vadd.f32 0.0, %v2036
      %v2038 = vpop.f32.mrf.mxu0
      %v2039 = vadd.f32 0.0, %v2038
      %2040 = vmatprep.mubr.f32.mxu0 0.0
      %2041 = vmatmul.mubr.f32.gmra.mxu0 %v1582
      %v2042 = vpop.f32.mrf.mxu0
      %v2043 = vadd.f32 0.0, %v2042
      %v2044 = vpop.f32.mrf.mxu0
      %v2045 = vadd.f32 0.0, %v2044
      %2046 = vmatprep.mubr.f32.mxu0 0.0
      %2047 = vmatmul.mubr.f32.gmra.mxu0 %v1585
      %v2048 = vpop.f32.mrf.mxu0
      %v2049 = vadd.f32 0.0, %v2048
      %v2050 = vpop.f32.mrf.mxu0
      %v2051 = vadd.f32 0.0, %v2050
      %2052 = vmatprep.mubr.f32.mxu0 0.0
      %2053 = vmatmul.mubr.f32.gmra.mxu0 %v1588
      %v2054 = vpop.f32.mrf.mxu0
      %v2055 = vadd.f32 0.0, %v2054
      %v2056 = vpop.f32.mrf.mxu0
      %v2057 = vadd.f32 0.0, %v2056
      %2058 = vmatprep.mubr.f32.mxu0 0.0
      %2059 = vmatmul.mubr.f32.gmra.mxu0 %v1591
      %v2060 = vpop.f32.mrf.mxu0
      %v2061 = vadd.f32 0.0, %v2060
      %v2062 = vpop.f32.mrf.mxu0
      %v2063 = vadd.f32 0.0, %v2062
      %2064 = vmatprep.mubr.f32.mxu0 0.0
      %2065 = vmatmul.mubr.f32.gmra.mxu0 %v1594
      %v2066 = vpop.f32.mrf.mxu0
      %v2067 = vadd.f32 0.0, %v2066
      %v2068 = vpop.f32.mrf.mxu0
      %v2069 = vadd.f32 0.0, %v2068
      %2070 = vmatprep.mubr.f32.mxu0 0.0
      %2071 = vmatmul.mubr.f32.gmra.mxu0 %v1597
      %v2072 = vpop.f32.mrf.mxu0
      %v2073 = vadd.f32 0.0, %v2072
      %v2074 = vpop.f32.mrf.mxu0
      %v2075 = vadd.f32 0.0, %v2074
      %2076 = vmatprep.mubr.f32.mxu0 0.0
      %2077 = vmatmul.mubr.f32.gmra.mxu0 %v1600
      %v2078 = vpop.f32.mrf.mxu0
      %v2079 = vadd.f32 0.0, %v2078
      %v2080 = vpop.f32.mrf.mxu0
      %v2081 = vadd.f32 0.0, %v2080
      %2082 = vmatprep.mubr.f32.mxu0 0.0
      %2083 = vmatmul.mubr.f32.gmra.mxu0 %v1603
      %v2084 = vpop.f32.mrf.mxu0
      %v2085 = vadd.f32 0.0, %v2084
      %v2086 = vpop.f32.mrf.mxu0
      %v2087 = vadd.f32 0.0, %v2086
      %2088 = vmatprep.mubr.f32.mxu0 0.0
      %2089 = vmatmul.mubr.f32.gmra.mxu0 %v1606
      %v2090 = vpop.f32.mrf.mxu0
      %v2091 = vadd.f32 0.0, %v2090
      %v2092 = vpop.f32.mrf.mxu0
      %v2093 = vadd.f32 0.0, %v2092
      %2094 = vmatprep.mubr.f32.mxu0 0.0
      %2095 = vmatmul.mubr.f32.gmra.mxu0 %v1609
      %v2096 = vpop.f32.mrf.mxu0
      %v2097 = vadd.f32 0.0, %v2096
      %v2098 = vpop.f32.mrf.mxu0
      %v2099 = vadd.f32 0.0, %v2098
      %2100 = vmatprep.mubr.f32.mxu0 0.0
      %2101 = vmatmul.mubr.f32.gmra.mxu0 %v1612
      %v2102 = vpop.f32.mrf.mxu0
      %v2103 = vadd.f32 0.0, %v2102
      %v2104 = vpop.f32.mrf.mxu0
      %v2105 = vadd.f32 0.0, %v2104
      %2106 = vmatprep.mubr.f32.mxu0 0.0
      %2107 = vmatmul.mubr.f32.gmra.mxu0 %v1615
      %v2108 = vpop.f32.mrf.mxu0
      %v2109 = vadd.f32 0.0, %v2108
      %v2110 = vpop.f32.mrf.mxu0
      %v2111 = vadd.f32 0.0, %v2110
      %2112 = vmatprep.mubr.f32.mxu0 0.0
      %2113 = vmatmul.mubr.f32.gmra.mxu0 %v1618
      %v2114 = vpop.f32.mrf.mxu0
      %v2115 = vadd.f32 0.0, %v2114
      %v2116 = vpop.f32.mrf.mxu0
      %v2117 = vadd.f32 0.0, %v2116
      %2118 = vmatprep.mubr.f32.mxu0 0.0
      %2119 = vmatmul.mubr.f32.gmra.mxu0 %v1621
      %v2120 = vpop.f32.mrf.mxu0
      %v2121 = vadd.f32 0.0, %v2120
      %v2122 = vpop.f32.mrf.mxu0
      %v2123 = vadd.f32 0.0, %v2122
      %2124 = vmatprep.mubr.f32.mxu0 0.0
      %2125 = vmatmul.mubr.f32.gmra.mxu0 %v1624
      %v2126 = vpop.f32.mrf.mxu0
      %v2127 = vadd.f32 0.0, %v2126
      %v2128 = vpop.f32.mrf.mxu0
      %v2129 = vadd.f32 0.0, %v2128
      %2130 = vmatprep.mubr.f32.mxu0 0.0
      %2131 = vmatmul.mubr.f32.gmra.mxu0 %v1627
      %v2132 = vpop.f32.mrf.mxu0
      %v2133 = vadd.f32 0.0, %v2132
      %v2134 = vpop.f32.mrf.mxu0
      %v2135 = vadd.f32 0.0, %v2134
      %2136 = vmatprep.mubr.f32.mxu0 0.0
      %2137 = vmatmul.mubr.f32.gmra.mxu0 %v1630
      %v2138 = vpop.f32.mrf.mxu0
      %v2139 = vadd.f32 0.0, %v2138
      %v2140 = vpop.f32.mrf.mxu0
      %v2141 = vadd.f32 0.0, %v2140
      %2142 = vmatprep.mubr.f32.mxu0 0.0
      %2143 = vmatmul.mubr.f32.gmra.mxu0 %v1633
      %v2144 = vpop.f32.mrf.mxu0
      %v2145 = vadd.f32 0.0, %v2144
      %v2146 = vpop.f32.mrf.mxu0
      %v2147 = vadd.f32 0.0, %v2146
      %2148 = vdwg.mxu0
      %v2149 = vld [vmem:[%s6] sm:$0xff]
      %v2150 = vld [vmem:[%s6 + $0x8] sm:$0xff]
      %v2151 = vld [vmem:[%s6 + $0x10] sm:$0xff]
      %v2152 = vld [vmem:[%s6 + $0x18] sm:$0xff]
      %v2153 = vld [vmem:[%s6 + $0x20] sm:$0xff]
      %v2154 = vld [vmem:[%s6 + $0x28] sm:$0xff]
      %v2155 = vld [vmem:[%s6 + $0x30] sm:$0xff]
      %v2156 = vld [vmem:[%s6 + $0x38] sm:$0xff]
      %v2157 = vld [vmem:[%s6 + $0x40] sm:$0xff]
      %v2158 = vld [vmem:[%s6 + $0x48] sm:$0xff]
      %v2159 = vld [vmem:[%s6 + $0x50] sm:$0xff]
      %v2160 = vld [vmem:[%s6 + $0x58] sm:$0xff]
      %v2161 = vld [vmem:[%s6 + $0x60] sm:$0xff]
      %v2162 = vld [vmem:[%s6 + $0x68] sm:$0xff]
      %v2163 = vld [vmem:[%s6 + $0x70] sm:$0xff]
      %v2164 = vld [vmem:[%s6 + $0x78] sm:$0xff]
      %v2165 = vld [vmem:[%s6 + $0x80] sm:$0xff]
      %v2166 = vld [vmem:[%s6 + $0x88] sm:$0xff]
      %v2167 = vld [vmem:[%s6 + $0x90] sm:$0xff]
      %v2168 = vld [vmem:[%s6 + $0x98] sm:$0xff]
      %v2169 = vld [vmem:[%s6 + $0xa0] sm:$0xff]
      %v2170 = vld [vmem:[%s6 + $0xa8] sm:$0xff]
      %v2171 = vld [vmem:[%s6 + $0xb0] sm:$0xff]
      %v2172 = vld [vmem:[%s6 + $0xb8] sm:$0xff]
      %v2173 = vld [vmem:[%s6 + $0xc0] sm:$0xff]
      %v2174 = vld [vmem:[%s6 + $0xc8] sm:$0xff]
      %v2175 = vld [vmem:[%s6 + $0xd0] sm:$0xff]
      %v2176 = vld [vmem:[%s6 + $0xd8] sm:$0xff]
      %v2177 = vld [vmem:[%s6 + $0xe0] sm:$0xff]
      %v2178 = vld [vmem:[%s6 + $0xe8] sm:$0xff]
      %v2179 = vld [vmem:[%s6 + $0xf0] sm:$0xff]
      %v2180 = vld [vmem:[%s6 + $0xf8] sm:$0xff]
      %v2182 = vsel %vm1538, %v402, 0
      %v2185 = vsel %vm1538, %v403, 0
      %v2188 = vsel %vm1538, %v404, 0
      %v2191 = vsel %vm1538, %v405, 0
      %v2194 = vsel %vm1538, %v406, 0
      %v2197 = vsel %vm1538, %v407, 0
      %v2200 = vsel %vm1538, %v408, 0
      %v2203 = vsel %vm1538, %v409, 0
      %v2206 = vsel %vm1538, %v410, 0
      %v2209 = vsel %vm1538, %v411, 0
      %v2212 = vsel %vm1538, %v412, 0
      %v2215 = vsel %vm1538, %v413, 0
      %v2218 = vsel %vm1538, %v414, 0
      %v2221 = vsel %vm1538, %v415, 0
      %v2224 = vsel %vm1538, %v416, 0
      %v2227 = vsel %vm1538, %v417, 0
      %v2230 = vsel %vm1538, %v418, 0
      %v2233 = vsel %vm1538, %v419, 0
      %v2236 = vsel %vm1538, %v420, 0
      %v2239 = vsel %vm1538, %v421, 0
      %v2242 = vsel %vm1538, %v422, 0
      %v2245 = vsel %vm1538, %v423, 0
      %v2248 = vsel %vm1538, %v424, 0
      %v2251 = vsel %vm1538, %v425, 0
      %v2254 = vsel %vm1538, %v426, 0
      %v2257 = vsel %vm1538, %v427, 0
      %v2260 = vsel %vm1538, %v428, 0
      %v2263 = vsel %vm1538, %v429, 0
      %v2266 = vsel %vm1538, %v430, 0
      %v2269 = vsel %vm1538, %v431, 0
      %v2272 = vsel %vm1538, %v432, 0
      %v2275 = vsel %vm1538, %v433, 0
      %2277 = vmatprep.subr.mxu0 0.0
      %2278 = vmatpush1.msra.mxu0 0.0
      %2279 = vmatprep.subr.mxu0 0.0
      %2280 = vmatpush1.msra.mxu0 0.0
      %2281 = vmatprep.subr.mxu0 0.0
      %2282 = vmatpush1.msra.mxu0 0.0
      %2283 = vmatprep.subr.mxu0 0.0
      %2284 = vmatpush1.msra.mxu0 0.0
      %2285 = vmatprep.subr.mxu0 0.0
      %2286 = vmatpush1.msra.mxu0 0.0
      %2287 = vmatprep.subr.mxu0 0.0
      %2288 = vmatpush1.msra.mxu0 0.0
      %2289 = vmatprep.subr.mxu0 0.0
      %2290 = vmatpush1.msra.mxu0 0.0
      %2291 = vmatprep.subr.mxu0 0.0
      %2292 = vmatpush1.msra.mxu0 0.0
      %2293 = vmatprep.subr.mxu0 %v2178
      %2294 = vmatpush1.msra.mxu0 %v2177
      %2295 = vmatprep.subr.mxu0 %v2174
      %2296 = vmatpush1.msra.mxu0 %v2173
      %2297 = vmatprep.subr.mxu0 %v2170
      %2298 = vmatpush1.msra.mxu0 %v2169
      %2299 = vmatprep.subr.mxu0 %v2166
      %2300 = vmatpush1.msra.mxu0 %v2165
      %2301 = vmatprep.subr.mxu0 %v2162
      %2302 = vmatpush1.msra.mxu0 %v2161
      %2303 = vmatprep.subr.mxu0 %v2158
      %2304 = vmatpush1.msra.mxu0 %v2157
      %2305 = vmatprep.subr.mxu0 %v2154
      %2306 = vmatpush1.msra.mxu0 %v2153
      %2307 = vmatprep.subr.mxu0 %v2150
      %2308 = vmatpush1.msra.mxu0 %v2149
      %2309 = vmatprep.subr.mxu0 0.0
      %2310 = vmatpush2.msra.mxu0 0.0
      %2311 = vmatprep.subr.mxu0 0.0
      %2312 = vmatpush2.msra.mxu0 0.0
      %2313 = vmatprep.subr.mxu0 0.0
      %2314 = vmatpush2.msra.mxu0 0.0
      %2315 = vmatprep.subr.mxu0 0.0
      %2316 = vmatpush2.msra.mxu0 0.0
      %2317 = vmatprep.subr.mxu0 0.0
      %2318 = vmatpush2.msra.mxu0 0.0
      %2319 = vmatprep.subr.mxu0 0.0
      %2320 = vmatpush2.msra.mxu0 0.0
      %2321 = vmatprep.subr.mxu0 0.0
      %2322 = vmatpush2.msra.mxu0 0.0
      %2323 = vmatprep.subr.mxu0 0.0
      %2324 = vmatpush2.msra.mxu0 0.0
      %2325 = vmatprep.subr.mxu0 0.0
      %2326 = vmatpush2.msra.mxu0 0.0
      %2327 = vmatprep.subr.mxu0 0.0
      %2328 = vmatpush2.msra.mxu0 0.0
      %2329 = vmatprep.subr.mxu0 0.0
      %2330 = vmatpush2.msra.mxu0 0.0
      %2331 = vmatprep.subr.mxu0 0.0
      %2332 = vmatpush2.msra.mxu0 0.0
      %2333 = vmatprep.subr.mxu0 0.0
      %2334 = vmatpush2.msra.mxu0 0.0
      %2335 = vmatprep.subr.mxu0 0.0
      %2336 = vmatpush2.msra.mxu0 0.0
      %2337 = vmatprep.subr.mxu0 0.0
      %2338 = vmatpush2.msra.mxu0 0.0
      %2339 = vmatprep.subr.mxu0 0.0
      %2340 = vmatpush2.msra.mxu0 0.0
      %2341 = vmatprep.mubr.f32.mxu0 0.0
      %2342 = vmatmul.mubr.f32.gmra.mxu0 %v2182
      %v2343 = vpop.f32.mrf.mxu0
      %v2344 = vadd.f32 0.0, %v2343
      %v2345 = vpop.f32.mrf.mxu0
      %v2346 = vadd.f32 0.0, %v2345
      %2347 = vmatprep.mubr.f32.mxu0 0.0
      %2348 = vmatmul.mubr.f32.gmra.mxu0 %v2185
      %v2349 = vpop.f32.mrf.mxu0
      %v2350 = vadd.f32 0.0, %v2349
      %v2351 = vpop.f32.mrf.mxu0
      %v2352 = vadd.f32 0.0, %v2351
      %2353 = vmatprep.mubr.f32.mxu0 0.0
      %2354 = vmatmul.mubr.f32.gmra.mxu0 %v2188
      %v2355 = vpop.f32.mrf.mxu0
      %v2356 = vadd.f32 0.0, %v2355
      %v2357 = vpop.f32.mrf.mxu0
      %v2358 = vadd.f32 0.0, %v2357
      %2359 = vmatprep.mubr.f32.mxu0 0.0
      %2360 = vmatmul.mubr.f32.gmra.mxu0 %v2191
      %v2361 = vpop.f32.mrf.mxu0
      %v2362 = vadd.f32 0.0, %v2361
      %v2363 = vpop.f32.mrf.mxu0
      %v2364 = vadd.f32 0.0, %v2363
      %2365 = vmatprep.mubr.f32.mxu0 0.0
      %2366 = vmatmul.mubr.f32.gmra.mxu0 %v2194
      %v2367 = vpop.f32.mrf.mxu0
      %v2368 = vadd.f32 0.0, %v2367
      %v2369 = vpop.f32.mrf.mxu0
      %v2370 = vadd.f32 0.0, %v2369
      %2371 = vmatprep.mubr.f32.mxu0 0.0
      %2372 = vmatmul.mubr.f32.gmra.mxu0 %v2197
      %v2373 = vpop.f32.mrf.mxu0
      %v2374 = vadd.f32 0.0, %v2373
      %v2375 = vpop.f32.mrf.mxu0
      %v2376 = vadd.f32 0.0, %v2375
      %2377 = vmatprep.mubr.f32.mxu0 0.0
      %2378 = vmatmul.mubr.f32.gmra.mxu0 %v2200
      %v2379 = vpop.f32.mrf.mxu0
      %v2380 = vadd.f32 0.0, %v2379
      %v2381 = vpop.f32.mrf.mxu0
      %v2382 = vadd.f32 0.0, %v2381
      %2383 = vmatprep.mubr.f32.mxu0 0.0
      %2384 = vmatmul.mubr.f32.gmra.mxu0 %v2203
      %v2385 = vpop.f32.mrf.mxu0
      %v2386 = vadd.f32 0.0, %v2385
      %v2387 = vpop.f32.mrf.mxu0
      %v2388 = vadd.f32 0.0, %v2387
      %2389 = vmatprep.mubr.f32.mxu0 0.0
      %2390 = vmatmul.mubr.f32.gmra.mxu0 %v2206
      %v2391 = vpop.f32.mrf.mxu0
      %v2392 = vadd.f32 0.0, %v2391
      %v2393 = vpop.f32.mrf.mxu0
      %v2394 = vadd.f32 0.0, %v2393
      %2395 = vmatprep.mubr.f32.mxu0 0.0
      %2396 = vmatmul.mubr.f32.gmra.mxu0 %v2209
      %v2397 = vpop.f32.mrf.mxu0
      %v2398 = vadd.f32 0.0, %v2397
      %v2399 = vpop.f32.mrf.mxu0
      %v2400 = vadd.f32 0.0, %v2399
      %2401 = vmatprep.mubr.f32.mxu0 0.0
      %2402 = vmatmul.mubr.f32.gmra.mxu0 %v2212
      %v2403 = vpop.f32.mrf.mxu0
      %v2404 = vadd.f32 0.0, %v2403
      %v2405 = vpop.f32.mrf.mxu0
      %v2406 = vadd.f32 0.0, %v2405
      %2407 = vmatprep.mubr.f32.mxu0 0.0
      %2408 = vmatmul.mubr.f32.gmra.mxu0 %v2215
      %v2409 = vpop.f32.mrf.mxu0
      %v2410 = vadd.f32 0.0, %v2409
      %v2411 = vpop.f32.mrf.mxu0
      %v2412 = vadd.f32 0.0, %v2411
      %2413 = vmatprep.mubr.f32.mxu0 0.0
      %2414 = vmatmul.mubr.f32.gmra.mxu0 %v2218
      %v2415 = vpop.f32.mrf.mxu0
      %v2416 = vadd.f32 0.0, %v2415
      %v2417 = vpop.f32.mrf.mxu0
      %v2418 = vadd.f32 0.0, %v2417
      %2419 = vmatprep.mubr.f32.mxu0 0.0
      %2420 = vmatmul.mubr.f32.gmra.mxu0 %v2221
      %v2421 = vpop.f32.mrf.mxu0
      %v2422 = vadd.f32 0.0, %v2421
      %v2423 = vpop.f32.mrf.mxu0
      %v2424 = vadd.f32 0.0, %v2423
      %2425 = vmatprep.mubr.f32.mxu0 0.0
      %2426 = vmatmul.mubr.f32.gmra.mxu0 %v2224
      %v2427 = vpop.f32.mrf.mxu0
      %v2428 = vadd.f32 0.0, %v2427
      %v2429 = vpop.f32.mrf.mxu0
      %v2430 = vadd.f32 0.0, %v2429
      %2431 = vmatprep.mubr.f32.mxu0 0.0
      %2432 = vmatmul.mubr.f32.gmra.mxu0 %v2227
      %v2433 = vpop.f32.mrf.mxu0
      %v2434 = vadd.f32 0.0, %v2433
      %v2435 = vpop.f32.mrf.mxu0
      %v2436 = vadd.f32 0.0, %v2435
      %2437 = vmatprep.mubr.f32.mxu0 0.0
      %2438 = vmatmul.mubr.f32.gmra.mxu0 %v2230
      %v2439 = vpop.f32.mrf.mxu0
      %v2440 = vadd.f32 0.0, %v2439
      %v2441 = vpop.f32.mrf.mxu0
      %v2442 = vadd.f32 0.0, %v2441
      %2443 = vmatprep.mubr.f32.mxu0 0.0
      %2444 = vmatmul.mubr.f32.gmra.mxu0 %v2233
      %v2445 = vpop.f32.mrf.mxu0
      %v2446 = vadd.f32 0.0, %v2445
      %v2447 = vpop.f32.mrf.mxu0
      %v2448 = vadd.f32 0.0, %v2447
      %2449 = vmatprep.mubr.f32.mxu0 0.0
      %2450 = vmatmul.mubr.f32.gmra.mxu0 %v2236
      %v2451 = vpop.f32.mrf.mxu0
      %v2452 = vadd.f32 0.0, %v2451
      %v2453 = vpop.f32.mrf.mxu0
      %v2454 = vadd.f32 0.0, %v2453
      %2455 = vmatprep.mubr.f32.mxu0 0.0
      %2456 = vmatmul.mubr.f32.gmra.mxu0 %v2239
      %v2457 = vpop.f32.mrf.mxu0
      %v2458 = vadd.f32 0.0, %v2457
      %v2459 = vpop.f32.mrf.mxu0
      %v2460 = vadd.f32 0.0, %v2459
      %2461 = vmatprep.mubr.f32.mxu0 0.0
      %2462 = vmatmul.mubr.f32.gmra.mxu0 %v2242
      %v2463 = vpop.f32.mrf.mxu0
      %v2464 = vadd.f32 0.0, %v2463
      %v2465 = vpop.f32.mrf.mxu0
      %v2466 = vadd.f32 0.0, %v2465
      %2467 = vmatprep.mubr.f32.mxu0 0.0
      %2468 = vmatmul.mubr.f32.gmra.mxu0 %v2245
      %v2469 = vpop.f32.mrf.mxu0
      %v2470 = vadd.f32 0.0, %v2469
      %v2471 = vpop.f32.mrf.mxu0
      %v2472 = vadd.f32 0.0, %v2471
      %2473 = vmatprep.mubr.f32.mxu0 0.0
      %2474 = vmatmul.mubr.f32.gmra.mxu0 %v2248
      %v2475 = vpop.f32.mrf.mxu0
      %v2476 = vadd.f32 0.0, %v2475
      %v2477 = vpop.f32.mrf.mxu0
      %v2478 = vadd.f32 0.0, %v2477
      %2479 = vmatprep.mubr.f32.mxu0 0.0
      %2480 = vmatmul.mubr.f32.gmra.mxu0 %v2251
      %v2481 = vpop.f32.mrf.mxu0
      %v2482 = vadd.f32 0.0, %v2481
      %v2483 = vpop.f32.mrf.mxu0
      %v2484 = vadd.f32 0.0, %v2483
      %2485 = vmatprep.mubr.f32.mxu0 0.0
      %2486 = vmatmul.mubr.f32.gmra.mxu0 %v2254
      %v2487 = vpop.f32.mrf.mxu0
      %v2488 = vadd.f32 0.0, %v2487
      %v2489 = vpop.f32.mrf.mxu0
      %v2490 = vadd.f32 0.0, %v2489
      %2491 = vmatprep.mubr.f32.mxu0 0.0
      %2492 = vmatmul.mubr.f32.gmra.mxu0 %v2257
      %v2493 = vpop.f32.mrf.mxu0
      %v2494 = vadd.f32 0.0, %v2493
      %v2495 = vpop.f32.mrf.mxu0
      %v2496 = vadd.f32 0.0, %v2495
      %2497 = vmatprep.mubr.f32.mxu0 0.0
      %2498 = vmatmul.mubr.f32.gmra.mxu0 %v2260
      %v2499 = vpop.f32.mrf.mxu0
      %v2500 = vadd.f32 0.0, %v2499
      %v2501 = vpop.f32.mrf.mxu0
      %v2502 = vadd.f32 0.0, %v2501
      %2503 = vmatprep.mubr.f32.mxu0 0.0
      %2504 = vmatmul.mubr.f32.gmra.mxu0 %v2263
      %v2505 = vpop.f32.mrf.mxu0
      %v2506 = vadd.f32 0.0, %v2505
      %v2507 = vpop.f32.mrf.mxu0
      %v2508 = vadd.f32 0.0, %v2507
      %2509 = vmatprep.mubr.f32.mxu0 0.0
      %2510 = vmatmul.mubr.f32.gmra.mxu0 %v2266
      %v2511 = vpop.f32.mrf.mxu0
      %v2512 = vadd.f32 0.0, %v2511
      %v2513 = vpop.f32.mrf.mxu0
      %v2514 = vadd.f32 0.0, %v2513
      %2515 = vmatprep.mubr.f32.mxu0 0.0
      %2516 = vmatmul.mubr.f32.gmra.mxu0 %v2269
      %v2517 = vpop.f32.mrf.mxu0
      %v2518 = vadd.f32 0.0, %v2517
      %v2519 = vpop.f32.mrf.mxu0
      %v2520 = vadd.f32 0.0, %v2519
      %2521 = vmatprep.mubr.f32.mxu0 0.0
      %2522 = vmatmul.mubr.f32.gmra.mxu0 %v2272
      %v2523 = vpop.f32.mrf.mxu0
      %v2524 = vadd.f32 0.0, %v2523
      %v2525 = vpop.f32.mrf.mxu0
      %v2526 = vadd.f32 0.0, %v2525
      %2527 = vmatprep.mubr.f32.mxu0 0.0
      %2528 = vmatmul.mubr.f32.gmra.mxu0 %v2275
      %v2529 = vpop.f32.mrf.mxu0
      %v2530 = vadd.f32 0.0, %v2529
      %v2531 = vpop.f32.mrf.mxu0
      %v2532 = vadd.f32 0.0, %v2531
      %2533 = vdwg.mxu0
      %2534 = vmatprep.subr.mxu0 0.0
      %2535 = vmatpush1.msra.mxu0 0.0
      %2536 = vmatprep.subr.mxu0 0.0
      %2537 = vmatpush1.msra.mxu0 0.0
      %2538 = vmatprep.subr.mxu0 0.0
      %2539 = vmatpush1.msra.mxu0 0.0
      %2540 = vmatprep.subr.mxu0 0.0
      %2541 = vmatpush1.msra.mxu0 0.0
      %2542 = vmatprep.subr.mxu0 0.0
      %2543 = vmatpush1.msra.mxu0 0.0
      %2544 = vmatprep.subr.mxu0 0.0
      %2545 = vmatpush1.msra.mxu0 0.0
      %2546 = vmatprep.subr.mxu0 0.0
      %2547 = vmatpush1.msra.mxu0 0.0
      %2548 = vmatprep.subr.mxu0 0.0
      %2549 = vmatpush1.msra.mxu0 0.0
      %2550 = vmatprep.subr.mxu0 %v2180
      %2551 = vmatpush1.msra.mxu0 %v2179
      %2552 = vmatprep.subr.mxu0 %v2176
      %2553 = vmatpush1.msra.mxu0 %v2175
      %2554 = vmatprep.subr.mxu0 %v2172
      %2555 = vmatpush1.msra.mxu0 %v2171
      %2556 = vmatprep.subr.mxu0 %v2168
      %2557 = vmatpush1.msra.mxu0 %v2167
      %2558 = vmatprep.subr.mxu0 %v2164
      %2559 = vmatpush1.msra.mxu0 %v2163
      %2560 = vmatprep.subr.mxu0 %v2160
      %2561 = vmatpush1.msra.mxu0 %v2159
      %2562 = vmatprep.subr.mxu0 %v2156
      %2563 = vmatpush1.msra.mxu0 %v2155
      %2564 = vmatprep.subr.mxu0 %v2152
      %2565 = vmatpush1.msra.mxu0 %v2151
      %2566 = vmatprep.subr.mxu0 0.0
      %2567 = vmatpush2.msra.mxu0 0.0
      %2568 = vmatprep.subr.mxu0 0.0
      %2569 = vmatpush2.msra.mxu0 0.0
      %2570 = vmatprep.subr.mxu0 0.0
      %2571 = vmatpush2.msra.mxu0 0.0
      %2572 = vmatprep.subr.mxu0 0.0
      %2573 = vmatpush2.msra.mxu0 0.0
      %2574 = vmatprep.subr.mxu0 0.0
      %2575 = vmatpush2.msra.mxu0 0.0
      %2576 = vmatprep.subr.mxu0 0.0
      %2577 = vmatpush2.msra.mxu0 0.0
      %2578 = vmatprep.subr.mxu0 0.0
      %2579 = vmatpush2.msra.mxu0 0.0
      %2580 = vmatprep.subr.mxu0 0.0
      %2581 = vmatpush2.msra.mxu0 0.0
      %2582 = vmatprep.subr.mxu0 0.0
      %2583 = vmatpush2.msra.mxu0 0.0
      %2584 = vmatprep.subr.mxu0 0.0
      %2585 = vmatpush2.msra.mxu0 0.0
      %2586 = vmatprep.subr.mxu0 0.0
      %2587 = vmatpush2.msra.mxu0 0.0
      %2588 = vmatprep.subr.mxu0 0.0
      %2589 = vmatpush2.msra.mxu0 0.0
      %2590 = vmatprep.subr.mxu0 0.0
      %2591 = vmatpush2.msra.mxu0 0.0
      %2592 = vmatprep.subr.mxu0 0.0
      %2593 = vmatpush2.msra.mxu0 0.0
      %2594 = vmatprep.subr.mxu0 0.0
      %2595 = vmatpush2.msra.mxu0 0.0
      %2596 = vmatprep.subr.mxu0 0.0
      %2597 = vmatpush2.msra.mxu0 0.0
      %2598 = vmatprep.mubr.f32.mxu0 0.0
      %2599 = vmatmul.mubr.f32.gmra.mxu0 %v2182
      %v2600 = vpop.f32.mrf.mxu0
      %v2601 = vadd.f32 0.0, %v2600
      %v2602 = vpop.f32.mrf.mxu0
      %v2603 = vadd.f32 0.0, %v2602
      %2604 = vmatprep.mubr.f32.mxu0 0.0
      %2605 = vmatmul.mubr.f32.gmra.mxu0 %v2185
      %v2606 = vpop.f32.mrf.mxu0
      %v2607 = vadd.f32 0.0, %v2606
      %v2608 = vpop.f32.mrf.mxu0
      %v2609 = vadd.f32 0.0, %v2608
      %2610 = vmatprep.mubr.f32.mxu0 0.0
      %2611 = vmatmul.mubr.f32.gmra.mxu0 %v2188
      %v2612 = vpop.f32.mrf.mxu0
      %v2613 = vadd.f32 0.0, %v2612
      %v2614 = vpop.f32.mrf.mxu0
      %v2615 = vadd.f32 0.0, %v2614
      %2616 = vmatprep.mubr.f32.mxu0 0.0
      %2617 = vmatmul.mubr.f32.gmra.mxu0 %v2191
      %v2618 = vpop.f32.mrf.mxu0
      %v2619 = vadd.f32 0.0, %v2618
      %v2620 = vpop.f32.mrf.mxu0
      %v2621 = vadd.f32 0.0, %v2620
      %2622 = vmatprep.mubr.f32.mxu0 0.0
      %2623 = vmatmul.mubr.f32.gmra.mxu0 %v2194
      %v2624 = vpop.f32.mrf.mxu0
      %v2625 = vadd.f32 0.0, %v2624
      %v2626 = vpop.f32.mrf.mxu0
      %v2627 = vadd.f32 0.0, %v2626
      %2628 = vmatprep.mubr.f32.mxu0 0.0
      %2629 = vmatmul.mubr.f32.gmra.mxu0 %v2197
      %v2630 = vpop.f32.mrf.mxu0
      %v2631 = vadd.f32 0.0, %v2630
      %v2632 = vpop.f32.mrf.mxu0
      %v2633 = vadd.f32 0.0, %v2632
      %2634 = vmatprep.mubr.f32.mxu0 0.0
      %2635 = vmatmul.mubr.f32.gmra.mxu0 %v2200
      %v2636 = vpop.f32.mrf.mxu0
      %v2637 = vadd.f32 0.0, %v2636
      %v2638 = vpop.f32.mrf.mxu0
      %v2639 = vadd.f32 0.0, %v2638
      %2640 = vmatprep.mubr.f32.mxu0 0.0
      %2641 = vmatmul.mubr.f32.gmra.mxu0 %v2203
      %v2642 = vpop.f32.mrf.mxu0
      %v2643 = vadd.f32 0.0, %v2642
      %v2644 = vpop.f32.mrf.mxu0
      %v2645 = vadd.f32 0.0, %v2644
      %2646 = vmatprep.mubr.f32.mxu0 0.0
      %2647 = vmatmul.mubr.f32.gmra.mxu0 %v2206
      %v2648 = vpop.f32.mrf.mxu0
      %v2649 = vadd.f32 0.0, %v2648
      %v2650 = vpop.f32.mrf.mxu0
      %v2651 = vadd.f32 0.0, %v2650
      %2652 = vmatprep.mubr.f32.mxu0 0.0
      %2653 = vmatmul.mubr.f32.gmra.mxu0 %v2209
      %v2654 = vpop.f32.mrf.mxu0
      %v2655 = vadd.f32 0.0, %v2654
      %v2656 = vpop.f32.mrf.mxu0
      %v2657 = vadd.f32 0.0, %v2656
      %2658 = vmatprep.mubr.f32.mxu0 0.0
      %2659 = vmatmul.mubr.f32.gmra.mxu0 %v2212
      %v2660 = vpop.f32.mrf.mxu0
      %v2661 = vadd.f32 0.0, %v2660
      %v2662 = vpop.f32.mrf.mxu0
      %v2663 = vadd.f32 0.0, %v2662
      %2664 = vmatprep.mubr.f32.mxu0 0.0
      %2665 = vmatmul.mubr.f32.gmra.mxu0 %v2215
      %v2666 = vpop.f32.mrf.mxu0
      %v2667 = vadd.f32 0.0, %v2666
      %v2668 = vpop.f32.mrf.mxu0
      %v2669 = vadd.f32 0.0, %v2668
      %2670 = vmatprep.mubr.f32.mxu0 0.0
      %2671 = vmatmul.mubr.f32.gmra.mxu0 %v2218
      %v2672 = vpop.f32.mrf.mxu0
      %v2673 = vadd.f32 0.0, %v2672
      %v2674 = vpop.f32.mrf.mxu0
      %v2675 = vadd.f32 0.0, %v2674
      %2676 = vmatprep.mubr.f32.mxu0 0.0
      %2677 = vmatmul.mubr.f32.gmra.mxu0 %v2221
      %v2678 = vpop.f32.mrf.mxu0
      %v2679 = vadd.f32 0.0, %v2678
      %v2680 = vpop.f32.mrf.mxu0
      %v2681 = vadd.f32 0.0, %v2680
      %2682 = vmatprep.mubr.f32.mxu0 0.0
      %2683 = vmatmul.mubr.f32.gmra.mxu0 %v2224
      %v2684 = vpop.f32.mrf.mxu0
      %v2685 = vadd.f32 0.0, %v2684
      %v2686 = vpop.f32.mrf.mxu0
      %v2687 = vadd.f32 0.0, %v2686
      %2688 = vmatprep.mubr.f32.mxu0 0.0
      %2689 = vmatmul.mubr.f32.gmra.mxu0 %v2227
      %v2690 = vpop.f32.mrf.mxu0
      %v2691 = vadd.f32 0.0, %v2690
      %v2692 = vpop.f32.mrf.mxu0
      %v2693 = vadd.f32 0.0, %v2692
      %2694 = vmatprep.mubr.f32.mxu0 0.0
      %2695 = vmatmul.mubr.f32.gmra.mxu0 %v2230
      %v2696 = vpop.f32.mrf.mxu0
      %v2697 = vadd.f32 0.0, %v2696
      %v2698 = vpop.f32.mrf.mxu0
      %v2699 = vadd.f32 0.0, %v2698
      %2700 = vmatprep.mubr.f32.mxu0 0.0
      %2701 = vmatmul.mubr.f32.gmra.mxu0 %v2233
      %v2702 = vpop.f32.mrf.mxu0
      %v2703 = vadd.f32 0.0, %v2702
      %v2704 = vpop.f32.mrf.mxu0
      %v2705 = vadd.f32 0.0, %v2704
      %2706 = vmatprep.mubr.f32.mxu0 0.0
      %2707 = vmatmul.mubr.f32.gmra.mxu0 %v2236
      %v2708 = vpop.f32.mrf.mxu0
      %v2709 = vadd.f32 0.0, %v2708
      %v2710 = vpop.f32.mrf.mxu0
      %v2711 = vadd.f32 0.0, %v2710
      %2712 = vmatprep.mubr.f32.mxu0 0.0
      %2713 = vmatmul.mubr.f32.gmra.mxu0 %v2239
      %v2714 = vpop.f32.mrf.mxu0
      %v2715 = vadd.f32 0.0, %v2714
      %v2716 = vpop.f32.mrf.mxu0
      %v2717 = vadd.f32 0.0, %v2716
      %2718 = vmatprep.mubr.f32.mxu0 0.0
      %2719 = vmatmul.mubr.f32.gmra.mxu0 %v2242
      %v2720 = vpop.f32.mrf.mxu0
      %v2721 = vadd.f32 0.0, %v2720
      %v2722 = vpop.f32.mrf.mxu0
      %v2723 = vadd.f32 0.0, %v2722
      %2724 = vmatprep.mubr.f32.mxu0 0.0
      %2725 = vmatmul.mubr.f32.gmra.mxu0 %v2245
      %v2726 = vpop.f32.mrf.mxu0
      %v2727 = vadd.f32 0.0, %v2726
      %v2728 = vpop.f32.mrf.mxu0
      %v2729 = vadd.f32 0.0, %v2728
      %2730 = vmatprep.mubr.f32.mxu0 0.0
      %2731 = vmatmul.mubr.f32.gmra.mxu0 %v2248
      %v2732 = vpop.f32.mrf.mxu0
      %v2733 = vadd.f32 0.0, %v2732
      %v2734 = vpop.f32.mrf.mxu0
      %v2735 = vadd.f32 0.0, %v2734
      %2736 = vmatprep.mubr.f32.mxu0 0.0
      %2737 = vmatmul.mubr.f32.gmra.mxu0 %v2251
      %v2738 = vpop.f32.mrf.mxu0
      %v2739 = vadd.f32 0.0, %v2738
      %v2740 = vpop.f32.mrf.mxu0
      %v2741 = vadd.f32 0.0, %v2740
      %2742 = vmatprep.mubr.f32.mxu0 0.0
      %2743 = vmatmul.mubr.f32.gmra.mxu0 %v2254
      %v2744 = vpop.f32.mrf.mxu0
      %v2745 = vadd.f32 0.0, %v2744
      %v2746 = vpop.f32.mrf.mxu0
      %v2747 = vadd.f32 0.0, %v2746
      %2748 = vmatprep.mubr.f32.mxu0 0.0
      %2749 = vmatmul.mubr.f32.gmra.mxu0 %v2257
      %v2750 = vpop.f32.mrf.mxu0
      %v2751 = vadd.f32 0.0, %v2750
      %v2752 = vpop.f32.mrf.mxu0
      %v2753 = vadd.f32 0.0, %v2752
      %2754 = vmatprep.mubr.f32.mxu0 0.0
      %2755 = vmatmul.mubr.f32.gmra.mxu0 %v2260
      %v2756 = vpop.f32.mrf.mxu0
      %v2757 = vadd.f32 0.0, %v2756
      %v2758 = vpop.f32.mrf.mxu0
      %v2759 = vadd.f32 0.0, %v2758
      %2760 = vmatprep.mubr.f32.mxu0 0.0
      %2761 = vmatmul.mubr.f32.gmra.mxu0 %v2263
      %v2762 = vpop.f32.mrf.mxu0
      %v2763 = vadd.f32 0.0, %v2762
      %v2764 = vpop.f32.mrf.mxu0
      %v2765 = vadd.f32 0.0, %v2764
      %2766 = vmatprep.mubr.f32.mxu0 0.0
      %2767 = vmatmul.mubr.f32.gmra.mxu0 %v2266
      %v2768 = vpop.f32.mrf.mxu0
      %v2769 = vadd.f32 0.0, %v2768
      %v2770 = vpop.f32.mrf.mxu0
      %v2771 = vadd.f32 0.0, %v2770
      %2772 = vmatprep.mubr.f32.mxu0 0.0
      %2773 = vmatmul.mubr.f32.gmra.mxu0 %v2269
      %v2774 = vpop.f32.mrf.mxu0
      %v2775 = vadd.f32 0.0, %v2774
      %v2776 = vpop.f32.mrf.mxu0
      %v2777 = vadd.f32 0.0, %v2776
      %2778 = vmatprep.mubr.f32.mxu0 0.0
      %2779 = vmatmul.mubr.f32.gmra.mxu0 %v2272
      %v2780 = vpop.f32.mrf.mxu0
      %v2781 = vadd.f32 0.0, %v2780
      %v2782 = vpop.f32.mrf.mxu0
      %v2783 = vadd.f32 0.0, %v2782
      %2784 = vmatprep.mubr.f32.mxu0 0.0
      %2785 = vmatmul.mubr.f32.gmra.mxu0 %v2275
      %v2786 = vpop.f32.mrf.mxu0
      %v2787 = vadd.f32 0.0, %v2786
      %v2788 = vpop.f32.mrf.mxu0
      %v2789 = vadd.f32 0.0, %v2788
      %2790 = vdwg.mxu0
      %v2791 = vmul.f32 %v1702, %v2344
      %v2792 = vmul.f32 %v1704, %v2346
      %v2793 = vmul.f32 %v1959, %v2601
      %v2794 = vmul.f32 %v1961, %v2603
      %v2795 = vmul.f32 %v1708, %v2350
      %v2796 = vmul.f32 %v1710, %v2352
      %v2797 = vmul.f32 %v1965, %v2607
      %v2798 = vmul.f32 %v1967, %v2609
      %v2799 = vmul.f32 %v1714, %v2356
      %v2800 = vmul.f32 %v1716, %v2358
      %v2801 = vmul.f32 %v1971, %v2613
      %v2802 = vmul.f32 %v1973, %v2615
      %v2803 = vmul.f32 %v1720, %v2362
      %v2804 = vmul.f32 %v1722, %v2364
      %v2805 = vmul.f32 %v1977, %v2619
      %v2806 = vmul.f32 %v1979, %v2621
      %v2807 = vmul.f32 %v1726, %v2368
      %v2808 = vmul.f32 %v1728, %v2370
      %v2809 = vmul.f32 %v1983, %v2625
      %v2810 = vmul.f32 %v1985, %v2627
      %v2811 = vmul.f32 %v1732, %v2374
      %v2812 = vmul.f32 %v1734, %v2376
      %v2813 = vmul.f32 %v1989, %v2631
      %v2814 = vmul.f32 %v1991, %v2633
      %v2815 = vmul.f32 %v1738, %v2380
      %v2816 = vmul.f32 %v1740, %v2382
      %v2817 = vmul.f32 %v1995, %v2637
      %v2818 = vmul.f32 %v1997, %v2639
      %v2819 = vmul.f32 %v1744, %v2386
      %v2820 = vmul.f32 %v1746, %v2388
      %v2821 = vmul.f32 %v2001, %v2643
      %v2822 = vmul.f32 %v2003, %v2645
      %v2823 = vmul.f32 %v1750, %v2392
      %v2824 = vmul.f32 %v1752, %v2394
      %v2825 = vmul.f32 %v2007, %v2649
      %v2826 = vmul.f32 %v2009, %v2651
      %v2827 = vmul.f32 %v1756, %v2398
      %v2828 = vmul.f32 %v1758, %v2400
      %v2829 = vmul.f32 %v2013, %v2655
      %v2830 = vmul.f32 %v2015, %v2657
      %v2831 = vmul.f32 %v1762, %v2404
      %v2832 = vmul.f32 %v1764, %v2406
      %v2833 = vmul.f32 %v2019, %v2661
      %v2834 = vmul.f32 %v2021, %v2663
      %v2835 = vmul.f32 %v1768, %v2410
      %v2836 = vmul.f32 %v1770, %v2412
      %v2837 = vmul.f32 %v2025, %v2667
      %v2838 = vmul.f32 %v2027, %v2669
      %v2839 = vmul.f32 %v1774, %v2416
      %v2840 = vmul.f32 %v1776, %v2418
      %v2841 = vmul.f32 %v2031, %v2673
      %v2842 = vmul.f32 %v2033, %v2675
      %v2843 = vmul.f32 %v1780, %v2422
      %v2844 = vmul.f32 %v1782, %v2424
      %v2845 = vmul.f32 %v2037, %v2679
      %v2846 = vmul.f32 %v2039, %v2681
      %v2847 = vmul.f32 %v1786, %v2428
      %v2848 = vmul.f32 %v1788, %v2430
      %v2849 = vmul.f32 %v2043, %v2685
      %v2850 = vmul.f32 %v2045, %v2687
      %v2851 = vmul.f32 %v1792, %v2434
      %v2852 = vmul.f32 %v1794, %v2436
      %v2853 = vmul.f32 %v2049, %v2691
      %v2854 = vmul.f32 %v2051, %v2693
      %v2855 = vmul.f32 %v1798, %v2440
      %v2856 = vmul.f32 %v1800, %v2442
      %v2857 = vmul.f32 %v2055, %v2697
      %v2858 = vmul.f32 %v2057, %v2699
      %v2859 = vmul.f32 %v1804, %v2446
      %v2860 = vmul.f32 %v1806, %v2448
      %v2861 = vmul.f32 %v2061, %v2703
      %v2862 = vmul.f32 %v2063, %v2705
      %v2863 = vmul.f32 %v1810, %v2452
      %v2864 = vmul.f32 %v1812, %v2454
      %v2865 = vmul.f32 %v2067, %v2709
      %v2866 = vmul.f32 %v2069, %v2711
      %v2867 = vmul.f32 %v1816, %v2458
      %v2868 = vmul.f32 %v1818, %v2460
      %v2869 = vmul.f32 %v2073, %v2715
      %v2870 = vmul.f32 %v2075, %v2717
      %v2871 = vmul.f32 %v1822, %v2464
      %v2872 = vmul.f32 %v1824, %v2466
      %v2873 = vmul.f32 %v2079, %v2721
      %v2874 = vmul.f32 %v2081, %v2723
      %v2875 = vmul.f32 %v1828, %v2470
      %v2876 = vmul.f32 %v1830, %v2472
      %v2877 = vmul.f32 %v2085, %v2727
      %v2878 = vmul.f32 %v2087, %v2729
      %v2879 = vmul.f32 %v1834, %v2476
      %v2880 = vmul.f32 %v1836, %v2478
      %v2881 = vmul.f32 %v2091, %v2733
      %v2882 = vmul.f32 %v2093, %v2735
      %v2883 = vmul.f32 %v1840, %v2482
      %v2884 = vmul.f32 %v1842, %v2484
      %v2885 = vmul.f32 %v2097, %v2739
      %v2886 = vmul.f32 %v2099, %v2741
      %v2887 = vmul.f32 %v1846, %v2488
      %v2888 = vmul.f32 %v1848, %v2490
      %v2889 = vmul.f32 %v2103, %v2745
      %v2890 = vmul.f32 %v2105, %v2747
      %v2891 = vmul.f32 %v1852, %v2494
      %v2892 = vmul.f32 %v1854, %v2496
      %v2893 = vmul.f32 %v2109, %v2751
      %v2894 = vmul.f32 %v2111, %v2753
      %v2895 = vmul.f32 %v1858, %v2500
      %v2896 = vmul.f32 %v1860, %v2502
      %v2897 = vmul.f32 %v2115, %v2757
      %v2898 = vmul.f32 %v2117, %v2759
      %v2899 = vmul.f32 %v1864, %v2506
      %v2900 = vmul.f32 %v1866, %v2508
      %v2901 = vmul.f32 %v2121, %v2763
      %v2902 = vmul.f32 %v2123, %v2765
      %v2903 = vmul.f32 %v1870, %v2512
      %v2904 = vmul.f32 %v1872, %v2514
      %v2905 = vmul.f32 %v2127, %v2769
      %v2906 = vmul.f32 %v2129, %v2771
      %v2907 = vmul.f32 %v1876, %v2518
      %v2908 = vmul.f32 %v1878, %v2520
      %v2909 = vmul.f32 %v2133, %v2775
      %v2910 = vmul.f32 %v2135, %v2777
      %v2911 = vmul.f32 %v1882, %v2524
      %v2912 = vmul.f32 %v1884, %v2526
      %v2913 = vmul.f32 %v2139, %v2781
      %v2914 = vmul.f32 %v2141, %v2783
      %v2915 = vmul.f32 %v1888, %v2530
      %v2916 = vmul.f32 %v1890, %v2532
      %v2917 = vmul.f32 %v2145, %v2787
      %v2918 = vmul.f32 %v2147, %v2789
      %v2919 = vpack.c.bf16 %v2795, %v2791
      %v2920 = vpack.c.bf16 %v2796, %v2792
      %v2921 = vpack.c.bf16 %v2797, %v2793
      %v2922 = vpack.c.bf16 %v2798, %v2794
      %v2923 = vpack.c.bf16 %v2803, %v2799
      %v2924 = vpack.c.bf16 %v2804, %v2800
      %v2925 = vpack.c.bf16 %v2805, %v2801
      %v2926 = vpack.c.bf16 %v2806, %v2802
      %v2927 = vpack.c.bf16 %v2811, %v2807
      %v2928 = vpack.c.bf16 %v2812, %v2808
      %v2929 = vpack.c.bf16 %v2813, %v2809
      %v2930 = vpack.c.bf16 %v2814, %v2810
      %v2931 = vpack.c.bf16 %v2819, %v2815
      %v2932 = vpack.c.bf16 %v2820, %v2816
      %v2933 = vpack.c.bf16 %v2821, %v2817
      %v2934 = vpack.c.bf16 %v2822, %v2818
      %v2935 = vpack.c.bf16 %v2827, %v2823
      %v2936 = vpack.c.bf16 %v2828, %v2824
      %v2937 = vpack.c.bf16 %v2829, %v2825
      %v2938 = vpack.c.bf16 %v2830, %v2826
      %v2939 = vpack.c.bf16 %v2835, %v2831
      %v2940 = vpack.c.bf16 %v2836, %v2832
      %v2941 = vpack.c.bf16 %v2837, %v2833
      %v2942 = vpack.c.bf16 %v2838, %v2834
      %v2943 = vpack.c.bf16 %v2843, %v2839
      %v2944 = vpack.c.bf16 %v2844, %v2840
      %v2945 = vpack.c.bf16 %v2845, %v2841
      %v2946 = vpack.c.bf16 %v2846, %v2842
      %v2947 = vpack.c.bf16 %v2851, %v2847
      %v2948 = vpack.c.bf16 %v2852, %v2848
      %v2949 = vpack.c.bf16 %v2853, %v2849
      %v2950 = vpack.c.bf16 %v2854, %v2850
      %v2951 = vpack.c.bf16 %v2859, %v2855
      %v2952 = vpack.c.bf16 %v2860, %v2856
      %v2953 = vpack.c.bf16 %v2861, %v2857
      %v2954 = vpack.c.bf16 %v2862, %v2858
      %v2955 = vpack.c.bf16 %v2867, %v2863
      %v2956 = vpack.c.bf16 %v2868, %v2864
      %v2957 = vpack.c.bf16 %v2869, %v2865
      %v2958 = vpack.c.bf16 %v2870, %v2866
      %v2959 = vpack.c.bf16 %v2875, %v2871
      %v2960 = vpack.c.bf16 %v2876, %v2872
      %v2961 = vpack.c.bf16 %v2877, %v2873
      %v2962 = vpack.c.bf16 %v2878, %v2874
      %v2963 = vpack.c.bf16 %v2883, %v2879
      %v2964 = vpack.c.bf16 %v2884, %v2880
      %v2965 = vpack.c.bf16 %v2885, %v2881
      %v2966 = vpack.c.bf16 %v2886, %v2882
      %v2967 = vpack.c.bf16 %v2891, %v2887
      %v2968 = vpack.c.bf16 %v2892, %v2888
      %v2969 = vpack.c.bf16 %v2893, %v2889
      %v2970 = vpack.c.bf16 %v2894, %v2890
      %v2971 = vpack.c.bf16 %v2899, %v2895
      %v2972 = vpack.c.bf16 %v2900, %v2896
      %v2973 = vpack.c.bf16 %v2901, %v2897
      %v2974 = vpack.c.bf16 %v2902, %v2898
      %v2975 = vpack.c.bf16 %v2907, %v2903
      %v2976 = vpack.c.bf16 %v2908, %v2904
      %v2977 = vpack.c.bf16 %v2909, %v2905
      %v2978 = vpack.c.bf16 %v2910, %v2906
      %v2979 = vpack.c.bf16 %v2915, %v2911
      %v2980 = vpack.c.bf16 %v2916, %v2912
      %v2981 = vpack.c.bf16 %v2917, %v2913
      %v2982 = vpack.c.bf16 %v2918, %v2914
      %v2983 = vld [vmem:[%s7] sm:$0xf]
      %v2984 = vld [vmem:[%s7 + $0x4] sm:$0xf]
      %v2985 = vld [vmem:[%s7 + $0x8] sm:$0xf]
      %v2986 = vld [vmem:[%s7 + $0xc] sm:$0xf]
      %v2987 = vld [vmem:[%s7 + $0x10] sm:$0xf]
      %v2988 = vld [vmem:[%s7 + $0x14] sm:$0xf]
      %v2989 = vld [vmem:[%s7 + $0x18] sm:$0xf]
      %v2990 = vld [vmem:[%s7 + $0x1c] sm:$0xf]
      %v2991 = vld [vmem:[%s7 + $0x20] sm:$0xf]
      %v2992 = vld [vmem:[%s7 + $0x24] sm:$0xf]
      %v2993 = vld [vmem:[%s7 + $0x28] sm:$0xf]
      %v2994 = vld [vmem:[%s7 + $0x2c] sm:$0xf]
      %v2995 = vld [vmem:[%s7 + $0x30] sm:$0xf]
      %v2996 = vld [vmem:[%s7 + $0x34] sm:$0xf]
      %v2997 = vld [vmem:[%s7 + $0x38] sm:$0xf]
      %v2998 = vld [vmem:[%s7 + $0x3c] sm:$0xf]
      %v2999 = vld [vmem:[%s7 + $0x40] sm:$0xf]
      %v3000 = vld [vmem:[%s7 + $0x44] sm:$0xf]
      %v3001 = vld [vmem:[%s7 + $0x48] sm:$0xf]
      %v3002 = vld [vmem:[%s7 + $0x4c] sm:$0xf]
      %v3003 = vld [vmem:[%s7 + $0x50] sm:$0xf]
      %v3004 = vld [vmem:[%s7 + $0x54] sm:$0xf]
      %v3005 = vld [vmem:[%s7 + $0x58] sm:$0xf]
      %v3006 = vld [vmem:[%s7 + $0x5c] sm:$0xf]
      %v3007 = vld [vmem:[%s7 + $0x60] sm:$0xf]
      %v3008 = vld [vmem:[%s7 + $0x64] sm:$0xf]
      %v3009 = vld [vmem:[%s7 + $0x68] sm:$0xf]
      %v3010 = vld [vmem:[%s7 + $0x6c] sm:$0xf]
      %v3011 = vld [vmem:[%s7 + $0x70] sm:$0xf]
      %v3012 = vld [vmem:[%s7 + $0x74] sm:$0xf]
      %v3013 = vld [vmem:[%s7 + $0x78] sm:$0xf]
      %v3014 = vld [vmem:[%s7 + $0x7c] sm:$0xf]
      %v3015 = vld [vmem:[%s7 + $0x80] sm:$0xf]
      %v3016 = vld [vmem:[%s7 + $0x84] sm:$0xf]
      %v3017 = vld [vmem:[%s7 + $0x88] sm:$0xf]
      %v3018 = vld [vmem:[%s7 + $0x8c] sm:$0xf]
      %v3019 = vld [vmem:[%s7 + $0x90] sm:$0xf]
      %v3020 = vld [vmem:[%s7 + $0x94] sm:$0xf]
      %v3021 = vld [vmem:[%s7 + $0x98] sm:$0xf]
      %v3022 = vld [vmem:[%s7 + $0x9c] sm:$0xf]
      %v3023 = vld [vmem:[%s7 + $0xa0] sm:$0xf]
      %v3024 = vld [vmem:[%s7 + $0xa4] sm:$0xf]
      %v3025 = vld [vmem:[%s7 + $0xa8] sm:$0xf]
      %v3026 = vld [vmem:[%s7 + $0xac] sm:$0xf]
      %v3027 = vld [vmem:[%s7 + $0xb0] sm:$0xf]
      %v3028 = vld [vmem:[%s7 + $0xb4] sm:$0xf]
      %v3029 = vld [vmem:[%s7 + $0xb8] sm:$0xf]
      %v3030 = vld [vmem:[%s7 + $0xbc] sm:$0xf]
      %v3031 = vld [vmem:[%s7 + $0xc0] sm:$0xf]
      %v3032 = vld [vmem:[%s7 + $0xc4] sm:$0xf]
      %v3033 = vld [vmem:[%s7 + $0xc8] sm:$0xf]
      %v3034 = vld [vmem:[%s7 + $0xcc] sm:$0xf]
      %v3035 = vld [vmem:[%s7 + $0xd0] sm:$0xf]
      %v3036 = vld [vmem:[%s7 + $0xd4] sm:$0xf]
      %v3037 = vld [vmem:[%s7 + $0xd8] sm:$0xf]
      %v3038 = vld [vmem:[%s7 + $0xdc] sm:$0xf]
      %v3039 = vld [vmem:[%s7 + $0xe0] sm:$0xf]
      %v3040 = vld [vmem:[%s7 + $0xe4] sm:$0xf]
      %v3041 = vld [vmem:[%s7 + $0xe8] sm:$0xf]
      %v3042 = vld [vmem:[%s7 + $0xec] sm:$0xf]
      %v3043 = vld [vmem:[%s7 + $0xf0] sm:$0xf]
      %v3044 = vld [vmem:[%s7 + $0xf4] sm:$0xf]
      %v3045 = vld [vmem:[%s7 + $0xf8] sm:$0xf]
      %v3046 = vld [vmem:[%s7 + $0xfc] sm:$0xf]
      %v3111 = vunpack.c.l.b16 %v2983
      %v3112 = vunpack.c.l.b16 %v2984
      %v3113 = vunpack.c.l.b16 %v2985
      %v3114 = vunpack.c.l.b16 %v2986
      %v3115 = vunpack.c.l.b16 %v2987
      %v3116 = vunpack.c.l.b16 %v2988
      %v3117 = vunpack.c.l.b16 %v2989
      %v3118 = vunpack.c.l.b16 %v2990
      %v3119 = vunpack.c.l.b16 %v2991
      %v3120 = vunpack.c.l.b16 %v2992
      %v3121 = vunpack.c.l.b16 %v2993
      %v3122 = vunpack.c.l.b16 %v2994
      %v3123 = vunpack.c.l.b16 %v2995
      %v3124 = vunpack.c.l.b16 %v2996
      %v3125 = vunpack.c.l.b16 %v2997
      %v3126 = vunpack.c.l.b16 %v2998
      %v3127 = vunpack.c.l.b16 %v2999
      %v3128 = vunpack.c.l.b16 %v3000
      %v3129 = vunpack.c.l.b16 %v3001
      %v3130 = vunpack.c.l.b16 %v3002
      %v3131 = vunpack.c.l.b16 %v3003
      %v3132 = vunpack.c.l.b16 %v3004
      %v3133 = vunpack.c.l.b16 %v3005
      %v3134 = vunpack.c.l.b16 %v3006
      %v3135 = vunpack.c.l.b16 %v3007
      %v3136 = vunpack.c.l.b16 %v3008
      %v3137 = vunpack.c.l.b16 %v3009
      %v3138 = vunpack.c.l.b16 %v3010
      %v3139 = vunpack.c.l.b16 %v3011
      %v3140 = vunpack.c.l.b16 %v3012
      %v3141 = vunpack.c.l.b16 %v3013
      %v3142 = vunpack.c.l.b16 %v3014
      %v3143 = vunpack.c.l.b16 %v3015
      %v3144 = vunpack.c.l.b16 %v3016
      %v3145 = vunpack.c.l.b16 %v3017
      %v3146 = vunpack.c.l.b16 %v3018
      %v3147 = vunpack.c.l.b16 %v3019
      %v3148 = vunpack.c.l.b16 %v3020
      %v3149 = vunpack.c.l.b16 %v3021
      %v3150 = vunpack.c.l.b16 %v3022
      %v3151 = vunpack.c.l.b16 %v3023
      %v3152 = vunpack.c.l.b16 %v3024
      %v3153 = vunpack.c.l.b16 %v3025
      %v3154 = vunpack.c.l.b16 %v3026
      %v3155 = vunpack.c.l.b16 %v3027
      %v3156 = vunpack.c.l.b16 %v3028
      %v3157 = vunpack.c.l.b16 %v3029
      %v3158 = vunpack.c.l.b16 %v3030
      %v3159 = vunpack.c.l.b16 %v3031
      %v3160 = vunpack.c.l.b16 %v3032
      %v3161 = vunpack.c.l.b16 %v3033
      %v3162 = vunpack.c.l.b16 %v3034
      %v3163 = vunpack.c.l.b16 %v3035
      %v3164 = vunpack.c.l.b16 %v3036
      %v3165 = vunpack.c.l.b16 %v3037
      %v3166 = vunpack.c.l.b16 %v3038
      %v3167 = vunpack.c.l.b16 %v3039
      %v3168 = vunpack.c.l.b16 %v3040
      %v3169 = vunpack.c.l.b16 %v3041
      %v3170 = vunpack.c.l.b16 %v3042
      %v3171 = vunpack.c.l.b16 %v3043
      %v3172 = vunpack.c.l.b16 %v3044
      %v3173 = vunpack.c.l.b16 %v3045
      %v3174 = vunpack.c.l.b16 %v3046
      %v3175 = vpack.c.b16 %v3112, %v3111
      %v3176 = vpack.c.b16 %v3114, %v3113
      %v3177 = vpack.c.b16 %v3116, %v3115
      %v3178 = vpack.c.b16 %v3118, %v3117
      %v3179 = vpack.c.b16 %v3120, %v3119
      %v3180 = vpack.c.b16 %v3122, %v3121
      %v3181 = vpack.c.b16 %v3124, %v3123
      %v3182 = vpack.c.b16 %v3126, %v3125
      %v3183 = vpack.c.b16 %v3128, %v3127
      %v3184 = vpack.c.b16 %v3130, %v3129
      %v3185 = vpack.c.b16 %v3132, %v3131
      %v3186 = vpack.c.b16 %v3134, %v3133
      %v3187 = vpack.c.b16 %v3136, %v3135
      %v3188 = vpack.c.b16 %v3138, %v3137
      %v3189 = vpack.c.b16 %v3140, %v3139
      %v3190 = vpack.c.b16 %v3142, %v3141
      %v3191 = vpack.c.b16 %v3144, %v3143
      %v3192 = vpack.c.b16 %v3146, %v3145
      %v3193 = vpack.c.b16 %v3148, %v3147
      %v3194 = vpack.c.b16 %v3150, %v3149
      %v3195 = vpack.c.b16 %v3152, %v3151
      %v3196 = vpack.c.b16 %v3154, %v3153
      %v3197 = vpack.c.b16 %v3156, %v3155
      %v3198 = vpack.c.b16 %v3158, %v3157
      %v3199 = vpack.c.b16 %v3160, %v3159
      %v3200 = vpack.c.b16 %v3162, %v3161
      %v3201 = vpack.c.b16 %v3164, %v3163
      %v3202 = vpack.c.b16 %v3166, %v3165
      %v3203 = vpack.c.b16 %v3168, %v3167
      %v3204 = vpack.c.b16 %v3170, %v3169
      %v3205 = vpack.c.b16 %v3172, %v3171
      %v3206 = vpack.c.b16 %v3174, %v3173
      %3239 = vmatprep.subr.bf16.mxu0 0
      %3240 = vmatpush1.bf16.msra.mxu0 %v3182
      %3241 = vmatprep.subr.bf16.mxu0 0
      %3242 = vmatpush1.bf16.msra.mxu0 %v3181
      %3243 = vmatprep.subr.bf16.mxu0 0
      %3244 = vmatpush1.bf16.msra.mxu0 %v3180
      %3245 = vmatprep.subr.bf16.mxu0 0
      %3246 = vmatpush1.bf16.msra.mxu0 %v3179
      %3247 = vmatprep.subr.bf16.mxu0 0
      %3248 = vmatpush1.bf16.msra.mxu0 %v3178
      %3249 = vmatprep.subr.bf16.mxu0 0
      %3250 = vmatpush1.bf16.msra.mxu0 %v3177
      %3251 = vmatprep.subr.bf16.mxu0 0
      %3252 = vmatpush1.bf16.msra.mxu0 %v3176
      %3253 = vmatprep.subr.bf16.mxu0 0
      %3254 = vmatpush1.bf16.msra.mxu0 %v3175
      %3255 = vmatprep.subr.bf16.mxu0 0
      %3256 = vmatpush2.bf16.msra.mxu0 %v3190
      %3257 = vmatprep.subr.bf16.mxu0 0
      %3258 = vmatpush2.bf16.msra.mxu0 %v3189
      %3259 = vmatprep.subr.bf16.mxu0 0
      %3260 = vmatpush2.bf16.msra.mxu0 %v3188
      %3261 = vmatprep.subr.bf16.mxu0 0
      %3262 = vmatpush2.bf16.msra.mxu0 %v3187
      %3263 = vmatprep.subr.bf16.mxu0 0
      %3264 = vmatpush2.bf16.msra.mxu0 %v3186
      %3265 = vmatprep.subr.bf16.mxu0 0
      %3266 = vmatpush2.bf16.msra.mxu0 %v3185
      %3267 = vmatprep.subr.bf16.mxu0 0
      %3268 = vmatpush2.bf16.msra.mxu0 %v3184
      %3269 = vmatprep.subr.bf16.mxu0 0
      %3270 = vmatpush2.bf16.msra.mxu0 %v3183
      %3271 = vmatprep.mubr.bf16.mxu0 %v2920
      %3272 = vmatmul.mubr.bf16.gmra.mxu0 %v2919
      %v3273 = vpop.f32.mrf.mxu0
      %v3274 = vadd.f32 0.0, %v3273
      %v3275 = vpop.f32.mrf.mxu0
      %v3276 = vpop.f32.mrf.mxu0
      %v3277 = vadd.f32 0.0, %v3276
      %v3278 = vpop.f32.mrf.mxu0
      %3279 = vmatprep.mubr.bf16.mxu0 %v2924
      %3280 = vmatmul.mubr.bf16.gmra.mxu0 %v2923
      %v3281 = vpop.f32.mrf.mxu0
      %v3282 = vadd.f32 0.0, %v3281
      %v3283 = vpop.f32.mrf.mxu0
      %v3284 = vpop.f32.mrf.mxu0
      %v3285 = vadd.f32 0.0, %v3284
      %v3286 = vpop.f32.mrf.mxu0
      %3287 = vmatprep.mubr.bf16.mxu0 %v2928
      %3288 = vmatmul.mubr.bf16.gmra.mxu0 %v2927
      %v3289 = vpop.f32.mrf.mxu0
      %v3290 = vadd.f32 0.0, %v3289
      %v3291 = vpop.f32.mrf.mxu0
      %v3292 = vpop.f32.mrf.mxu0
      %v3293 = vadd.f32 0.0, %v3292
      %v3294 = vpop.f32.mrf.mxu0
      %3295 = vmatprep.mubr.bf16.mxu0 %v2932
      %3296 = vmatmul.mubr.bf16.gmra.mxu0 %v2931
      %v3297 = vpop.f32.mrf.mxu0
      %v3298 = vadd.f32 0.0, %v3297
      %v3299 = vpop.f32.mrf.mxu0
      %v3300 = vpop.f32.mrf.mxu0
      %v3301 = vadd.f32 0.0, %v3300
      %v3302 = vpop.f32.mrf.mxu0
      %3303 = vmatprep.mubr.bf16.mxu0 %v2936
      %3304 = vmatmul.mubr.bf16.gmra.mxu0 %v2935
      %v3305 = vpop.f32.mrf.mxu0
      %v3306 = vadd.f32 0.0, %v3305
      %v3307 = vpop.f32.mrf.mxu0
      %v3308 = vpop.f32.mrf.mxu0
      %v3309 = vadd.f32 0.0, %v3308
      %v3310 = vpop.f32.mrf.mxu0
      %3311 = vmatprep.mubr.bf16.mxu0 %v2940
      %3312 = vmatmul.mubr.bf16.gmra.mxu0 %v2939
      %v3313 = vpop.f32.mrf.mxu0
      %v3314 = vadd.f32 0.0, %v3313
      %v3315 = vpop.f32.mrf.mxu0
      %v3316 = vpop.f32.mrf.mxu0
      %v3317 = vadd.f32 0.0, %v3316
      %v3318 = vpop.f32.mrf.mxu0
      %3319 = vmatprep.mubr.bf16.mxu0 %v2944
      %3320 = vmatmul.mubr.bf16.gmra.mxu0 %v2943
      %v3321 = vpop.f32.mrf.mxu0
      %v3322 = vadd.f32 0.0, %v3321
      %v3323 = vpop.f32.mrf.mxu0
      %v3324 = vpop.f32.mrf.mxu0
      %v3325 = vadd.f32 0.0, %v3324
      %v3326 = vpop.f32.mrf.mxu0
      %3327 = vmatprep.mubr.bf16.mxu0 %v2948
      %3328 = vmatmul.mubr.bf16.gmra.mxu0 %v2947
      %v3329 = vpop.f32.mrf.mxu0
      %v3330 = vadd.f32 0.0, %v3329
      %v3331 = vpop.f32.mrf.mxu0
      %v3332 = vpop.f32.mrf.mxu0
      %v3333 = vadd.f32 0.0, %v3332
      %v3334 = vpop.f32.mrf.mxu0
      %3335 = vmatprep.mubr.bf16.mxu0 %v2952
      %3336 = vmatmul.mubr.bf16.gmra.mxu0 %v2951
      %v3337 = vpop.f32.mrf.mxu0
      %v3338 = vadd.f32 0.0, %v3337
      %v3339 = vpop.f32.mrf.mxu0
      %v3340 = vpop.f32.mrf.mxu0
      %v3341 = vadd.f32 0.0, %v3340
      %v3342 = vpop.f32.mrf.mxu0
      %3343 = vmatprep.mubr.bf16.mxu0 %v2956
      %3344 = vmatmul.mubr.bf16.gmra.mxu0 %v2955
      %v3345 = vpop.f32.mrf.mxu0
      %v3346 = vadd.f32 0.0, %v3345
      %v3347 = vpop.f32.mrf.mxu0
      %v3348 = vpop.f32.mrf.mxu0
      %v3349 = vadd.f32 0.0, %v3348
      %v3350 = vpop.f32.mrf.mxu0
      %3351 = vmatprep.mubr.bf16.mxu0 %v2960
      %3352 = vmatmul.mubr.bf16.gmra.mxu0 %v2959
      %v3353 = vpop.f32.mrf.mxu0
      %v3354 = vadd.f32 0.0, %v3353
      %v3355 = vpop.f32.mrf.mxu0
      %v3356 = vpop.f32.mrf.mxu0
      %v3357 = vadd.f32 0.0, %v3356
      %v3358 = vpop.f32.mrf.mxu0
      %3359 = vmatprep.mubr.bf16.mxu0 %v2964
      %3360 = vmatmul.mubr.bf16.gmra.mxu0 %v2963
      %v3361 = vpop.f32.mrf.mxu0
      %v3362 = vadd.f32 0.0, %v3361
      %v3363 = vpop.f32.mrf.mxu0
      %v3364 = vpop.f32.mrf.mxu0
      %v3365 = vadd.f32 0.0, %v3364
      %v3366 = vpop.f32.mrf.mxu0
      %3367 = vmatprep.mubr.bf16.mxu0 %v2968
      %3368 = vmatmul.mubr.bf16.gmra.mxu0 %v2967
      %v3369 = vpop.f32.mrf.mxu0
      %v3370 = vadd.f32 0.0, %v3369
      %v3371 = vpop.f32.mrf.mxu0
      %v3372 = vpop.f32.mrf.mxu0
      %v3373 = vadd.f32 0.0, %v3372
      %v3374 = vpop.f32.mrf.mxu0
      %3375 = vmatprep.mubr.bf16.mxu0 %v2972
      %3376 = vmatmul.mubr.bf16.gmra.mxu0 %v2971
      %v3377 = vpop.f32.mrf.mxu0
      %v3378 = vadd.f32 0.0, %v3377
      %v3379 = vpop.f32.mrf.mxu0
      %v3380 = vpop.f32.mrf.mxu0
      %v3381 = vadd.f32 0.0, %v3380
      %v3382 = vpop.f32.mrf.mxu0
      %3383 = vmatprep.mubr.bf16.mxu0 %v2976
      %3384 = vmatmul.mubr.bf16.gmra.mxu0 %v2975
      %v3385 = vpop.f32.mrf.mxu0
      %v3386 = vadd.f32 0.0, %v3385
      %v3387 = vpop.f32.mrf.mxu0
      %v3388 = vpop.f32.mrf.mxu0
      %v3389 = vadd.f32 0.0, %v3388
      %v3390 = vpop.f32.mrf.mxu0
      %3391 = vmatprep.mubr.bf16.mxu0 %v2980
      %3392 = vmatmul.mubr.bf16.gmra.mxu0 %v2979
      %v3393 = vpop.f32.mrf.mxu0
      %v3394 = vadd.f32 0.0, %v3393
      %v3395 = vpop.f32.mrf.mxu0
      %v3396 = vpop.f32.mrf.mxu0
      %v3397 = vadd.f32 0.0, %v3396
      %v3398 = vpop.f32.mrf.mxu0
      %3399 = vdwg.mxu0
      %3400 = vmatprep.subr.bf16.mxu0 0
      %3401 = vmatpush1.bf16.msra.mxu0 %v3198
      %3402 = vmatprep.subr.bf16.mxu0 0
      %3403 = vmatpush1.bf16.msra.mxu0 %v3197
      %3404 = vmatprep.subr.bf16.mxu0 0
      %3405 = vmatpush1.bf16.msra.mxu0 %v3196
      %3406 = vmatprep.subr.bf16.mxu0 0
      %3407 = vmatpush1.bf16.msra.mxu0 %v3195
      %3408 = vmatprep.subr.bf16.mxu0 0
      %3409 = vmatpush1.bf16.msra.mxu0 %v3194
      %3410 = vmatprep.subr.bf16.mxu0 0
      %3411 = vmatpush1.bf16.msra.mxu0 %v3193
      %3412 = vmatprep.subr.bf16.mxu0 0
      %3413 = vmatpush1.bf16.msra.mxu0 %v3192
      %3414 = vmatprep.subr.bf16.mxu0 0
      %3415 = vmatpush1.bf16.msra.mxu0 %v3191
      %3416 = vmatprep.subr.bf16.mxu0 0
      %3417 = vmatpush2.bf16.msra.mxu0 %v3206
      %3418 = vmatprep.subr.bf16.mxu0 0
      %3419 = vmatpush2.bf16.msra.mxu0 %v3205
      %3420 = vmatprep.subr.bf16.mxu0 0
      %3421 = vmatpush2.bf16.msra.mxu0 %v3204
      %3422 = vmatprep.subr.bf16.mxu0 0
      %3423 = vmatpush2.bf16.msra.mxu0 %v3203
      %3424 = vmatprep.subr.bf16.mxu0 0
      %3425 = vmatpush2.bf16.msra.mxu0 %v3202
      %3426 = vmatprep.subr.bf16.mxu0 0
      %3427 = vmatpush2.bf16.msra.mxu0 %v3201
      %3428 = vmatprep.subr.bf16.mxu0 0
      %3429 = vmatpush2.bf16.msra.mxu0 %v3200
      %3430 = vmatprep.subr.bf16.mxu0 0
      %3431 = vmatpush2.bf16.msra.mxu0 %v3199
      %3432 = vmatprep.mubr.bf16.mxu0 %v2922
      %3433 = vmatmul.mubr.bf16.gmra.mxu0 %v2921
      %v3434 = vpop.f32.mrf.mxu0
      %v3435 = vadd.f32 %v3274, %v3434
      %v3436 = vpop.f32.mrf.mxu0
      %v3437 = vpop.f32.mrf.mxu0
      %v3438 = vadd.f32 %v3277, %v3437
      %v3439 = vpop.f32.mrf.mxu0
      %3440 = vmatprep.mubr.bf16.mxu0 %v2926
      %3441 = vmatmul.mubr.bf16.gmra.mxu0 %v2925
      %v3442 = vpop.f32.mrf.mxu0
      %v3443 = vadd.f32 %v3282, %v3442
      %v3444 = vpop.f32.mrf.mxu0
      %v3445 = vpop.f32.mrf.mxu0
      %v3446 = vadd.f32 %v3285, %v3445
      %v3447 = vpop.f32.mrf.mxu0
      %3448 = vmatprep.mubr.bf16.mxu0 %v2930
      %3449 = vmatmul.mubr.bf16.gmra.mxu0 %v2929
      %v3450 = vpop.f32.mrf.mxu0
      %v3451 = vadd.f32 %v3290, %v3450
      %v3452 = vpop.f32.mrf.mxu0
      %v3453 = vpop.f32.mrf.mxu0
      %v3454 = vadd.f32 %v3293, %v3453
      %v3455 = vpop.f32.mrf.mxu0
      %3456 = vmatprep.mubr.bf16.mxu0 %v2934
      %3457 = vmatmul.mubr.bf16.gmra.mxu0 %v2933
      %v3458 = vpop.f32.mrf.mxu0
      %v3459 = vadd.f32 %v3298, %v3458
      %v3460 = vpop.f32.mrf.mxu0
      %v3461 = vpop.f32.mrf.mxu0
      %v3462 = vadd.f32 %v3301, %v3461
      %v3463 = vpop.f32.mrf.mxu0
      %3464 = vmatprep.mubr.bf16.mxu0 %v2938
      %3465 = vmatmul.mubr.bf16.gmra.mxu0 %v2937
      %v3466 = vpop.f32.mrf.mxu0
      %v3467 = vadd.f32 %v3306, %v3466
      %v3468 = vpop.f32.mrf.mxu0
      %v3469 = vpop.f32.mrf.mxu0
      %v3470 = vadd.f32 %v3309, %v3469
      %v3471 = vpop.f32.mrf.mxu0
      %3472 = vmatprep.mubr.bf16.mxu0 %v2942
      %3473 = vmatmul.mubr.bf16.gmra.mxu0 %v2941
      %v3474 = vpop.f32.mrf.mxu0
      %v3475 = vadd.f32 %v3314, %v3474
      %v3476 = vpop.f32.mrf.mxu0
      %v3477 = vpop.f32.mrf.mxu0
      %v3478 = vadd.f32 %v3317, %v3477
      %v3479 = vpop.f32.mrf.mxu0
      %3480 = vmatprep.mubr.bf16.mxu0 %v2946
      %3481 = vmatmul.mubr.bf16.gmra.mxu0 %v2945
      %v3482 = vpop.f32.mrf.mxu0
      %v3483 = vadd.f32 %v3322, %v3482
      %v3484 = vpop.f32.mrf.mxu0
      %v3485 = vpop.f32.mrf.mxu0
      %v3486 = vadd.f32 %v3325, %v3485
      %v3487 = vpop.f32.mrf.mxu0
      %3488 = vmatprep.mubr.bf16.mxu0 %v2950
      %3489 = vmatmul.mubr.bf16.gmra.mxu0 %v2949
      %v3490 = vpop.f32.mrf.mxu0
      %v3491 = vadd.f32 %v3330, %v3490
      %v3492 = vpop.f32.mrf.mxu0
      %v3493 = vpop.f32.mrf.mxu0
      %v3494 = vadd.f32 %v3333, %v3493
      %v3495 = vpop.f32.mrf.mxu0
      %3496 = vmatprep.mubr.bf16.mxu0 %v2954
      %3497 = vmatmul.mubr.bf16.gmra.mxu0 %v2953
      %v3498 = vpop.f32.mrf.mxu0
      %v3499 = vadd.f32 %v3338, %v3498
      %v3500 = vpop.f32.mrf.mxu0
      %v3501 = vpop.f32.mrf.mxu0
      %v3502 = vadd.f32 %v3341, %v3501
      %v3503 = vpop.f32.mrf.mxu0
      %3504 = vmatprep.mubr.bf16.mxu0 %v2958
      %3505 = vmatmul.mubr.bf16.gmra.mxu0 %v2957
      %v3506 = vpop.f32.mrf.mxu0
      %v3507 = vadd.f32 %v3346, %v3506
      %v3508 = vpop.f32.mrf.mxu0
      %v3509 = vpop.f32.mrf.mxu0
      %v3510 = vadd.f32 %v3349, %v3509
      %v3511 = vpop.f32.mrf.mxu0
      %3512 = vmatprep.mubr.bf16.mxu0 %v2962
      %3513 = vmatmul.mubr.bf16.gmra.mxu0 %v2961
      %v3514 = vpop.f32.mrf.mxu0
      %v3515 = vadd.f32 %v3354, %v3514
      %v3516 = vpop.f32.mrf.mxu0
      %v3517 = vpop.f32.mrf.mxu0
      %v3518 = vadd.f32 %v3357, %v3517
      %v3519 = vpop.f32.mrf.mxu0
      %3520 = vmatprep.mubr.bf16.mxu0 %v2966
      %3521 = vmatmul.mubr.bf16.gmra.mxu0 %v2965
      %v3522 = vpop.f32.mrf.mxu0
      %v3523 = vadd.f32 %v3362, %v3522
      %v3524 = vpop.f32.mrf.mxu0
      %v3525 = vpop.f32.mrf.mxu0
      %v3526 = vadd.f32 %v3365, %v3525
      %v3527 = vpop.f32.mrf.mxu0
      %3528 = vmatprep.mubr.bf16.mxu0 %v2970
      %3529 = vmatmul.mubr.bf16.gmra.mxu0 %v2969
      %v3530 = vpop.f32.mrf.mxu0
      %v3531 = vadd.f32 %v3370, %v3530
      %v3532 = vpop.f32.mrf.mxu0
      %v3533 = vpop.f32.mrf.mxu0
      %v3534 = vadd.f32 %v3373, %v3533
      %v3535 = vpop.f32.mrf.mxu0
      %3536 = vmatprep.mubr.bf16.mxu0 %v2974
      %3537 = vmatmul.mubr.bf16.gmra.mxu0 %v2973
      %v3538 = vpop.f32.mrf.mxu0
      %v3539 = vadd.f32 %v3378, %v3538
      %v3540 = vpop.f32.mrf.mxu0
      %v3541 = vpop.f32.mrf.mxu0
      %v3542 = vadd.f32 %v3381, %v3541
      %v3543 = vpop.f32.mrf.mxu0
      %3544 = vmatprep.mubr.bf16.mxu0 %v2978
      %3545 = vmatmul.mubr.bf16.gmra.mxu0 %v2977
      %v3546 = vpop.f32.mrf.mxu0
      %v3547 = vadd.f32 %v3386, %v3546
      %v3548 = vpop.f32.mrf.mxu0
      %v3549 = vpop.f32.mrf.mxu0
      %v3550 = vadd.f32 %v3389, %v3549
      %v3551 = vpop.f32.mrf.mxu0
      %3552 = vmatprep.mubr.bf16.mxu0 %v2982
      %3553 = vmatmul.mubr.bf16.gmra.mxu0 %v2981
      %v3554 = vpop.f32.mrf.mxu0
      %v3555 = vadd.f32 %v3394, %v3554
      %v3556 = vpop.f32.mrf.mxu0
      %v3557 = vpop.f32.mrf.mxu0
      %v3558 = vadd.f32 %v3397, %v3557
      %v3559 = vpop.f32.mrf.mxu0
      %3560 = vdwg.mxu0
      %3561 = vst [vmem:[%s363] sm:$0xff] %v3435
      %3562 = vst [vmem:[%s363 + $0x8] sm:$0xff] %v3438
      %3563 = vst [vmem:[%s363 + $0x10] sm:$0xff] %v3443
      %3564 = vst [vmem:[%s363 + $0x18] sm:$0xff] %v3446
      %3565 = vst [vmem:[%s363 + $0x20] sm:$0xff] %v3451
      %3566 = vst [vmem:[%s363 + $0x28] sm:$0xff] %v3454
      %3567 = vst [vmem:[%s363 + $0x30] sm:$0xff] %v3459
      %3568 = vst [vmem:[%s363 + $0x38] sm:$0xff] %v3462
      %3569 = vst [vmem:[%s363 + $0x40] sm:$0xff] %v3467
      %3570 = vst [vmem:[%s363 + $0x48] sm:$0xff] %v3470
      %3571 = vst [vmem:[%s363 + $0x50] sm:$0xff] %v3475
      %3572 = vst [vmem:[%s363 + $0x58] sm:$0xff] %v3478
      %3573 = vst [vmem:[%s363 + $0x60] sm:$0xff] %v3483
      %3574 = vst [vmem:[%s363 + $0x68] sm:$0xff] %v3486
      %3575 = vst [vmem:[%s363 + $0x70] sm:$0xff] %v3491
      %3576 = vst [vmem:[%s363 + $0x78] sm:$0xff] %v3494
      %3577 = vst [vmem:[%s363 + $0x80] sm:$0xff] %v3499
      %3578 = vst [vmem:[%s363 + $0x88] sm:$0xff] %v3502
      %3579 = vst [vmem:[%s363 + $0x90] sm:$0xff] %v3507
      %3580 = vst [vmem:[%s363 + $0x98] sm:$0xff] %v3510
      %3581 = vst [vmem:[%s363 + $0xa0] sm:$0xff] %v3515
      %3582 = vst [vmem:[%s363 + $0xa8] sm:$0xff] %v3518
      %3583 = vst [vmem:[%s363 + $0xb0] sm:$0xff] %v3523
      %3584 = vst [vmem:[%s363 + $0xb8] sm:$0xff] %v3526
      %3585 = vst [vmem:[%s363 + $0xc0] sm:$0xff] %v3531
      %3586 = vst [vmem:[%s363 + $0xc8] sm:$0xff] %v3534
      %3587 = vst [vmem:[%s363 + $0xd0] sm:$0xff] %v3539
      %3588 = vst [vmem:[%s363 + $0xd8] sm:$0xff] %v3542
      %3589 = vst [vmem:[%s363 + $0xe0] sm:$0xff] %v3547
      %3590 = vst [vmem:[%s363 + $0xe8] sm:$0xff] %v3550
      %3591 = vst [vmem:[%s363 + $0xf0] sm:$0xff] %v3555
      %3592 = vst [vmem:[%s363 + $0xf8] sm:$0xff] %v3558
      %v3593 = vadd.f32 %v3435, %v3438
      %v3594 = vadd.f32 %v3593, %v3443
      %v3595 = vadd.f32 %v3594, %v3446
      %v3596 = vadd.f32 %v3595, %v3451
      %v3597 = vadd.f32 %v3596, %v3454
      %v3598 = vadd.f32 %v3597, %v3459
      %v3599 = vadd.f32 %v3598, %v3462
      %v3600 = vadd.f32 %v3599, %v3467
      %v3601 = vadd.f32 %v3600, %v3470
      %v3602 = vadd.f32 %v3601, %v3475
      %v3603 = vadd.f32 %v3602, %v3478
      %v3604 = vadd.f32 %v3603, %v3483
      %v3605 = vadd.f32 %v3604, %v3486
      %v3606 = vadd.f32 %v3605, %v3491
      %v3607 = vadd.f32 %v3606, %v3494
      %v3608 = vadd.f32 %v3607, %v3499
      %v3609 = vadd.f32 %v3608, %v3502
      %v3610 = vadd.f32 %v3609, %v3507
      %v3611 = vadd.f32 %v3610, %v3510
      %v3612 = vadd.f32 %v3611, %v3515
      %v3613 = vadd.f32 %v3612, %v3518
      %v3614 = vadd.f32 %v3613, %v3523
      %v3615 = vadd.f32 %v3614, %v3526
      %v3616 = vadd.f32 %v3615, %v3531
      %v3617 = vadd.f32 %v3616, %v3534
      %v3618 = vadd.f32 %v3617, %v3539
      %v3619 = vadd.f32 %v3618, %v3542
      %v3620 = vadd.f32 %v3619, %v3547
      %v3621 = vadd.f32 %v3620, %v3550
      %v3622 = vadd.f32 %v3621, %v3555
      %v3623 = vadd.f32 %v3622, %v3558
      %v3624 = vrot.slane %v3623, 4
      %v3625 = vadd.f32 %v3623, %v3624
      %v3626 = vrot.slane %v3625, 2
      %v3627 = vadd.f32 %v3625, %v3626
      %v3628 = vrot.slane %v3627, 1
      %v3629 = vadd.f32 %v3627, %v3628
      %v3630 = vmul.f32 %v3435, %v3435
      %v3631 = vmul.f32 %v3438, %v3438
      %v3632 = vmul.f32 %v3443, %v3443
      %v3633 = vmul.f32 %v3446, %v3446
      %v3634 = vmul.f32 %v3451, %v3451
      %v3635 = vmul.f32 %v3454, %v3454
      %v3636 = vmul.f32 %v3459, %v3459
      %v3637 = vmul.f32 %v3462, %v3462
      %v3638 = vmul.f32 %v3467, %v3467
      %v3639 = vmul.f32 %v3470, %v3470
      %v3640 = vmul.f32 %v3475, %v3475
      %v3641 = vmul.f32 %v3478, %v3478
      %v3642 = vmul.f32 %v3483, %v3483
      %v3643 = vmul.f32 %v3486, %v3486
      %v3644 = vmul.f32 %v3491, %v3491
      %v3645 = vmul.f32 %v3494, %v3494
      %v3646 = vmul.f32 %v3499, %v3499
      %v3647 = vmul.f32 %v3502, %v3502
      %v3648 = vmul.f32 %v3507, %v3507
      %v3649 = vmul.f32 %v3510, %v3510
      %v3650 = vmul.f32 %v3515, %v3515
      %v3651 = vmul.f32 %v3518, %v3518
      %v3652 = vmul.f32 %v3523, %v3523
      %v3653 = vmul.f32 %v3526, %v3526
      %v3654 = vmul.f32 %v3531, %v3531
      %v3655 = vmul.f32 %v3534, %v3534
      %v3656 = vmul.f32 %v3539, %v3539
      %v3657 = vmul.f32 %v3542, %v3542
      %v3658 = vmul.f32 %v3547, %v3547
      %v3659 = vmul.f32 %v3550, %v3550
      %v3660 = vmul.f32 %v3555, %v3555
      %v3661 = vmul.f32 %v3558, %v3558
      %v3662 = vadd.f32 %v3630, %v3631
      %v3663 = vadd.f32 %v3662, %v3632
      %v3664 = vadd.f32 %v3663, %v3633
      %v3665 = vadd.f32 %v3664, %v3634
      %v3666 = vadd.f32 %v3665, %v3635
      %v3667 = vadd.f32 %v3666, %v3636
      %v3668 = vadd.f32 %v3667, %v3637
      %v3669 = vadd.f32 %v3668, %v3638
      %v3670 = vadd.f32 %v3669, %v3639
      %v3671 = vadd.f32 %v3670, %v3640
      %v3672 = vadd.f32 %v3671, %v3641
      %v3673 = vadd.f32 %v3672, %v3642
      %v3674 = vadd.f32 %v3673, %v3643
      %v3675 = vadd.f32 %v3674, %v3644
      %v3676 = vadd.f32 %v3675, %v3645
      %v3677 = vadd.f32 %v3676, %v3646
      %v3678 = vadd.f32 %v3677, %v3647
      %v3679 = vadd.f32 %v3678, %v3648
      %v3680 = vadd.f32 %v3679, %v3649
      %v3681 = vadd.f32 %v3680, %v3650
      %v3682 = vadd.f32 %v3681, %v3651
      %v3683 = vadd.f32 %v3682, %v3652
      %v3684 = vadd.f32 %v3683, %v3653
      %v3685 = vadd.f32 %v3684, %v3654
      %v3686 = vadd.f32 %v3685, %v3655
      %v3687 = vadd.f32 %v3686, %v3656
      %v3688 = vadd.f32 %v3687, %v3657
      %v3689 = vadd.f32 %v3688, %v3658
      %v3690 = vadd.f32 %v3689, %v3659
      %v3691 = vadd.f32 %v3690, %v3660
      %v3692 = vadd.f32 %v3691, %v3661
      %v3693 = vrot.slane %v3692, 4
      %v3694 = vadd.f32 %v3692, %v3693
      %v3695 = vrot.slane %v3694, 2
      %v3696 = vadd.f32 %v3694, %v3695
      %v3697 = vrot.slane %v3696, 1
      %v3698 = vadd.f32 %v3696, %v3697
      %vm3699 = vcmask 1040384
      %v3700 = vsel %vm3699, %v3629, %v3698
      %vm3701 = vcmask 1041408
      %v3702 = vsel %vm3701, %v3700, 0.0
      %3703 = vst [vmem:[%s368] sm:$0xff] %v3702
      %s3704 = smul.u32 32, %s21
      %p3705 = scmp.lt.s32.totalorder %s3704, 63
      %s3706 = scalar_select %p3705, %s3704, 63
      %s3707 = smul.addr %s3706, 8
      %s3708 = scalar_lea.vmem %s8, %s3707
      %p3709 = scmp.lt.s32.totalorder %s21, 1
      %s3710 = scalar_select %p3709, %s21, 1
      %s3711 = smul.addr %s3710, 8
      %s3712 = scalar_lea.vmem %s9, %s3711
      // Predicated region
      $region53: #{simple_block_forward.2} parent=51 // pred_check
        %p3713 = pneg %p217
      $region54: #{simple_block_forward.2} parent=51 // pred_check_branch
        %3715 = sbr.rel (%p3713) target = $region56
      $region55: #{simple_block_forward.2} parent=51 // pred_region
        %s3716 = smul.u32 32, %s21
      $region56: #{simple_block_forward.2} parent=51 // pred_fallthru
        _
      // Predicated region
      $region57: #{simple_block_forward.2} parent=51 // pred_check
        %p3717 = pneg %p243
      $region58: #{simple_block_forward.2} parent=51 // pred_check_branch
        %3719 = sbr.rel (%p3717) target = $region60
      $region59: #{simple_block_forward.2} parent=51 // pred_region
        _
      $region60: #{simple_block_forward.2} parent=51 // pred_fallthru
        _
    $region52: #{simple_block_forward.2} parent=5 // pred_fallthru
      _
    %p3720 = scmp.le.s32.totalorder 2, %s16
    // Predicated region
    $region61: #{simple_block_forward.2} parent=5 // pred_check
      %p3721 = pneg %p3720
    $region62: #{simple_block_forward.2} parent=5 // pred_check_branch
      %3723 = sbr.rel (%p3721) target = $region64
    $region63: #{simple_block_forward.2} parent=5 // pred_region
      %s3724 = ssub.s32 %s16, 2
      // Predicated region
      $region65: #{simple_block_forward.2} parent=63 // pred_check
        %p3725 = pneg %p223
      $region66: #{simple_block_forward.2} parent=63 // pred_check_branch
        %3727 = sbr.rel (%p3725) target = $region68
      $region67: #{simple_block_forward.2} parent=63 // pred_region
        %s3728 = smul.u32 32, %s22
        %p3729 = scmp.lt.s32.totalorder %s3728, 63
        %s3730 = scalar_select %p3729, %s3728, 63
        %s3731 = smul.addr %s3730, 8
        %s3732 = scalar_lea.vmem %s8, %s3731
      $region68: #{simple_block_forward.2} parent=63 // pred_fallthru
        _
      // Predicated region
      $region69: #{simple_block_forward.2} parent=63 // pred_check
        %p3733 = pneg %p249
      $region70: #{simple_block_forward.2} parent=63 // pred_check_branch
        %3735 = sbr.rel (%p3733) target = $region72
      $region71: #{simple_block_forward.2} parent=63 // pred_region
        %p3736 = scmp.lt.s32.totalorder %s22, 1
        %s3737 = scalar_select %p3736, %s22, 1
        %s3738 = smul.addr %s3737, 8
        %s3739 = scalar_lea.vmem %s9, %s3738
      $region72: #{simple_block_forward.2} parent=63 // pred_fallthru
        _
    $region64: #{simple_block_forward.2} parent=5 // pred_fallthru
      _
  $region6: #{simple_block_forward.2} parent=0 // loop_footer
    %s20 = sadd.s32 1, %s16
  $region7: #{simple_block_forward.2} parent=0 // loop_footer_branch
    %15 = sbr.rel target = $region3
  $region8: #{simple_block_forward.2} parent=0 // loop_exit
    _

</llo_original>
